<compile_context>
chip_gen: v7x
topology: tpu7x:2x2x1
jax: 0.10.0
libtpu: 0.0.40
codegen_flags: <defaults>
</compile_context>

<pallas_src>
import functools

import jax
import jax.numpy as jnp
from jax.experimental import pallas as pl
from jax.experimental.pallas import tpu as pltpu


_RESIDENT_H_MAX_ROWS = 16 * 1024          # ~4 MiB bf16 features; v7x-safe
_VMEM_LIMIT_BYTES = 32 * 1024 * 1024      # plenty for the caps above


def _round_up(x, m):
    return ((x + m - 1) // m) * m


def _select_tiling(n):
    """Largest MXU/DMA-friendly row/k tile (<=512); n rounded UP to the tile."""
    n128 = _round_up(max(n, 1), 128)
    tile = min(512, n128)
    n_pad = _round_up(n, tile)
    return n_pad, tile


# ---------------------------------------------------------------------------
# Tiled aggregation kernel.
#   acc(i) += A[i, k] @ H[k]                 (bf16 MXU, f32 accumulate)
#   finalize (last k): apply `plan` — a static sequence of "W" (fused f32
#   projection) and "relu" ops — to the f32 accumulator, then store.
#   grid = (row_blocks, k_blocks); reduction axis k is LAST.
# ---------------------------------------------------------------------------
def _agg_kernel(*refs, plan, resident_h, tile):
    n_w = sum(1 for op in plan if op == "W")
    a_ref, h_ref = refs[0], refs[1]
    w_refs = refs[2:2 + n_w]
    o_ref = refs[2 + n_w]
    acc_ref = refs[3 + n_w]

    k = pl.program_id(1)

    @pl.when(k == 0)
    def _init():
        acc_ref[...] = jnp.zeros_like(acc_ref)

    if resident_h:
        # Whole feature matrix is VMEM-resident; slice the k-th row block.
        row0 = pl.multiple_of(k * tile, tile)
        h_blk = h_ref[pl.ds(row0, tile), :]
    else:
        h_blk = h_ref[...]

    acc_ref[...] += jnp.dot(a_ref[...], h_blk,
                            preferred_element_type=jnp.float32)

    @pl.when(k == pl.num_programs(1) - 1)
    def _finalize():
        out = acc_ref[...]
        wi = 0
        for op in plan:                       # static tuple -> unrolled at trace
            if op == "relu":
                out = jnp.maximum(out, 0.0)   # f32 VPU (v5e-safe)
            else:                             # "W": fused projection, f32 MXU
                out = jnp.dot(out, w_refs[wi][...],
                              preferred_element_type=jnp.float32)
                wi += 1
        o_ref[...] = out.astype(o_ref.dtype)


def _aggregate(a, h, weights, plan, *, out_dtype, tile, resident_h):
    n = a.shape[0]
    f_in = h.shape[1]
    f_out = weights[-1].shape[1] if weights else f_in
    assert n % tile == 0 and a.shape[1] == n and h.shape[0] == n

    in_specs = [pl.BlockSpec((tile, tile), lambda i, k: (i, k))]        # A tile
    if resident_h:
        in_specs.append(pl.BlockSpec((n, f_in), lambda i, k: (0, 0)))   # whole H
    else:
        in_specs.append(pl.BlockSpec((tile, f_in), lambda i, k: (k, 0)))
    for w in weights:                                                   # resident W
        in_specs.append(pl.BlockSpec(w.shape, lambda i, k: (0, 0)))

    kernel = functools.partial(_agg_kernel, plan=plan,
                               resident_h=resident_h, tile=tile)

    return pl.pallas_call(
        kernel,
        out_shape=jax.ShapeDtypeStruct((n, f_out), out_dtype),
        grid_spec=pltpu.PrefetchScalarGridSpec(
            num_scalar_prefetch=0,
            grid=(n // tile, n // tile),
            in_specs=in_specs,
            out_specs=pl.BlockSpec((tile, f_out), lambda i, k: (i, 0)),
            scratch_shapes=[pltpu.VMEM((tile, f_in), jnp.float32)],
        ),
        compiler_params=pltpu.CompilerParams(
            dimension_semantics=("parallel", "arbitrary"),
            vmem_limit_bytes=_VMEM_LIMIT_BYTES,
        ),
    )(a, h, *weights)


# ---------------------------------------------------------------------------
# Graph/weight preparation (hoisted; cacheable per graph by the caller).
# ---------------------------------------------------------------------------
def prepare_gcn(A, W1, W2, W3):
    n = A.shape[0]
    n_pad, tile = _select_tiling(n)
    p = lambda d: _round_up(d, 128)

    def pad2(m, rows, cols, dtype):
        return jnp.pad(
            m, ((0, rows - m.shape[0]), (0, cols - m.shape[1]))
        ).astype(dtype)

    return dict(
        n=n, n_pad=n_pad, tile=tile, dim_out=W3.shape[1],
        A=pad2(A, n_pad, n_pad, jnp.bfloat16),
        W1=pad2(W1, p(W1.shape[0]), p(W1.shape[1]), jnp.float32),
        W2=pad2(W2, p(W2.shape[0]), p(W2.shape[1]), jnp.float32),
        W3=pad2(W3, p(W3.shape[0]), p(W3.shape[1]), jnp.float32),
    )


def gcn_forward_prepared(X, prep, *, resident_h=None):
    n, n_pad, tile = prep["n"], prep["n_pad"], prep["tile"]
    if resident_h is None:
        resident_h = n_pad <= _RESIDENT_H_MAX_ROWS

    X_p = jnp.pad(
        X, ((0, n_pad - X.shape[0]),
            (0, _round_up(X.shape[1], 128) - X.shape[1]))
    ).astype(jnp.bfloat16)

    agg = functools.partial(_aggregate, tile=tile, resident_h=resident_h)

    # Layer 1 (+ fused W1, W2):  g2 = relu((A @ X) @ W1) @ W2
    g2 = agg(prep["A"], X_p, (prep["W1"], prep["W2"]), ("W", "relu", "W"),
             out_dtype=jnp.bfloat16)
    # Layer 2 (+ fused W3):      g3 = relu(A @ g2) @ W3
    g3 = agg(prep["A"], g2, (prep["W3"],), ("relu", "W"),
             out_dtype=jnp.bfloat16)
    # Layer 3:                   out = A @ g3
    out = agg(prep["A"], g3, (), (), out_dtype=jnp.bfloat16)

    return out[:n, :prep["dim_out"]].astype(jnp.float32)


def gcn_reference(X, A, W1, W2, W3):
    h = jax.nn.relu((A @ X) @ W1)
    h = jax.nn.relu((A @ h) @ W2)
    return (A @ h) @ W3


def gcn_forward(X, A, W1, W2, W3, *, min_pallas_rows=512, resident_h=None):
    """Matches the PyTorch module: fc3(A @ relu(fc2(A @ relu(fc1(A @ X))))).

    Weights are passed already transposed to [in, out] so `h @ W` == F.linear.
    """
    if _round_up(X.shape[0], 128) < min_pallas_rows:
        # Small-N fallback: kernel launches + MXU-tile padding would dominate.
        return gcn_reference(X, A, W1, W2, W3)
    prep = prepare_gcn(A, W1, W2, W3)      # cacheable per graph by the caller
    return gcn_forward_prepared(X, prep, resident_h=resident_h)


if __name__ == "__main__":
    def make_inputs(key, n, dim_in, dim_out):
        k_x, k_a, k_w1, k_w2, k_w3 = jax.random.split(key, 5)
        X = jax.random.normal(k_x, (n, dim_in), dtype=jnp.float32)
        # Symmetric row-normalized adjacency with self loops (deterministic).
        A_raw = (jax.random.uniform(k_a, (n, n)) > 0.5).astype(jnp.float32)
        A = A_raw + A_raw.T + jnp.eye(n, dtype=jnp.float32)
        A = A / jnp.sum(A, axis=1, keepdims=True)
        # nn.Linear(in, out, bias=False) stores weight [out, in]; we pass the
        # transpose so h @ W == F.linear(h, weight).  Scales chosen so outputs
        # stay O(1) and the tolerance check is meaningful.
        W1 = jax.random.normal(k_w1, (dim_in, 64), jnp.float32) * 2.0
        W2 = jax.random.normal(k_w2, (64, 32), jnp.float32) * 0.5
        W3 = jax.random.normal(k_w3, (32, dim_out), jnp.float32) * 0.5
        return X, A, W1, W2, W3

    key = jax.random.PRNGKey(0)

    # 1) Small graph (N=8): exercises the small-N XLA fallback path.
    X, A, W1, W2, W3 = make_inputs(key, 8, 16, 8)
    out_small = gcn_forward(X, A, W1, W2, W3)
    jax.block_until_ready(out_small)
    ref_small = gcn_reference(X, A, W1, W2, W3)
    assert out_small.shape == (8, 8)
    assert jnp.allclose(out_small, ref_small, atol=1e-5, rtol=1e-5)

    # 2) Medium graph (N=640 -> n_pad=1024, tile=512, 2x2 grid): exercises the
    #    Pallas path with both the resident-h and the streaming-h kernels.
    Xm, Am, W1m, W2m, W3m = make_inputs(jax.random.PRNGKey(0), 640, 16, 8)
    refm = gcn_reference(Xm, Am, W1m, W2m, W3m)
    prep = prepare_gcn(Am, W1m, W2m, W3m)     # pad/cast hoisted & reusable
    for res in (True, False):
        outm = gcn_forward_prepared(Xm, prep, resident_h=res)
        jax.block_until_ready(outm)
        assert outm.shape == (640, 8)
        err = float(jnp.max(jnp.abs(outm - refm)))
        assert jnp.allclose(outm, refm, atol=2.5e-2, rtol=2.5e-2), \
            f"max abs err {err} (resident_h={res})"

    print("KERNEL_OK")
</pallas_src>

<mosaic_0001>
module attributes {stable_mosaic.version = 11 : i64} {
  func.func @_agg_kernel(%arg0: i32, %arg1: i32, %arg2: memref<512x512xbf16, #tpu.memory_space<vmem>>, %arg3: memref<1024x128xbf16, #tpu.memory_space<vmem>>, %arg4: memref<128x128xf32, #tpu.memory_space<vmem>>, %arg5: memref<128x128xf32, #tpu.memory_space<vmem>>, %arg6: memref<512x128xbf16, #tpu.memory_space<vmem>>, %arg7: memref<512x128xf32, #tpu.memory_space<vmem>>) attributes {dimension_semantics = [#tpu.dimension_semantics<parallel>, #tpu.dimension_semantics<arbitrary>], iteration_bounds = array<i64: 2, 2>, scalar_prefetch = 0 : i64, scratch_operands = 1 : i64, tpu.core_type = #tpu.core_type<tc>, window_params = [{transform_indices = @transform_0, window_bounds = array<i64: 512, 512>}, {pipeline_mode = #tpu.pipeline_mode<synchronous>, transform_indices = @transform_1, window_bounds = array<i64: 1024, 128>}, {pipeline_mode = #tpu.pipeline_mode<synchronous>, transform_indices = @transform_2, window_bounds = array<i64: 128, 128>}, {pipeline_mode = #tpu.pipeline_mode<synchronous>, transform_indices = @transform_3, window_bounds = array<i64: 128, 128>}, {transform_indices = @transform_4, window_bounds = array<i64: 512, 128>}]} {
    %c0_i32 = arith.constant 0 : i32
    %0 = arith.cmpi eq, %arg1, %c0_i32 : i32
    %1 = arith.extui %0 : i1 to i32
    %c0_i32_0 = arith.constant 0 : i32
    %2 = arith.cmpi ne, %1, %c0_i32_0 : i32
    scf.if %2 {
      %cst_8 = arith.constant 0.000000e+00 : f32
      %15 = vector.broadcast %cst_8 : f32 to vector<512x128xf32>
      %c0_9 = arith.constant 0 : index
      %c0_10 = arith.constant 0 : index
      %16 = vector.load %arg7[%c0_9, %c0_10] : memref<512x128xf32, #tpu.memory_space<vmem>>, vector<512x128xf32>
      tpu.vector_store %arg7[%c0_9, %c0_10], %15 {strides = array<i32>} : memref<512x128xf32, #tpu.memory_space<vmem>>, vector<512x128xf32>,
    } else {
    }
    %c512_i32 = arith.constant 512 : i32
    %3 = arith.muli %arg1, %c512_i32 : i32
    %4 = tpu.assume_multiple %3, 512 : i32
    %5 = arith.index_cast %4 : i32 to index
    %c0 = arith.constant 0 : index
    %6 = vector.load %arg3[%5, %c0] : memref<1024x128xbf16, #tpu.memory_space<vmem>>, vector<512x128xbf16>
    %c0_1 = arith.constant 0 : index
    %c0_2 = arith.constant 0 : index
    %7 = vector.load %arg7[%c0_1, %c0_2] : memref<512x128xf32, #tpu.memory_space<vmem>>, vector<512x128xf32>
    %c0_3 = arith.constant 0 : index
    %c0_4 = arith.constant 0 : index
    %8 = vector.load %arg2[%c0_3, %c0_4] : memref<512x512xbf16, #tpu.memory_space<vmem>>, vector<512x512xbf16>
    %cst = arith.constant dense<0.000000e+00> : vector<512x128xf32>
    %9 = tpu.matmul %8, %6, %cst {dimension_numbers = #tpu.dot_dimension_numbers<[1], [0], [0], [1], [0, 0, 1, 1], [], []>} : vector<512x512xbf16>, vector<512x128xbf16>, vector<512x128xf32> -> vector<512x128xf32>
    %10 = arith.addf %7, %9 : vector<512x128xf32>
    %c0_5 = arith.constant 0 : index
    %c0_6 = arith.constant 0 : index
    %11 = vector.load %arg7[%c0_5, %c0_6] : memref<512x128xf32, #tpu.memory_space<vmem>>, vector<512x128xf32>
    tpu.vector_store %arg7[%c0_5, %c0_6], %10 {strides = array<i32>} : memref<512x128xf32, #tpu.memory_space<vmem>>, vector<512x128xf32>,
    %c1_i32 = arith.constant 1 : i32
    %12 = arith.cmpi eq, %arg1, %c1_i32 : i32
    %13 = arith.extui %12 : i1 to i32
    %c0_i32_7 = arith.constant 0 : i32
    %14 = arith.cmpi ne, %13, %c0_i32_7 : i32
    scf.if %14 {
      %c0_8 = arith.constant 0 : index
      %c0_9 = arith.constant 0 : index
      %15 = vector.load %arg7[%c0_8, %c0_9] : memref<512x128xf32, #tpu.memory_space<vmem>>, vector<512x128xf32>
      %c0_10 = arith.constant 0 : index
      %c0_11 = arith.constant 0 : index
      %16 = vector.load %arg4[%c0_10, %c0_11] : memref<128x128xf32, #tpu.memory_space<vmem>>, vector<128x128xf32>
      %cst_12 = arith.constant dense<0.000000e+00> : vector<512x128xf32>
      %17 = tpu.matmul %15, %16, %cst_12 {dimension_numbers = #tpu.dot_dimension_numbers<[1], [0], [0], [1], [0, 0, 1, 1], [], []>} : vector<512x128xf32>, vector<128x128xf32>, vector<512x128xf32> -> vector<512x128xf32>
      %cst_13 = arith.constant 0.000000e+00 : f32
      %18 = vector.broadcast %cst_13 : f32 to vector<512x128xf32>
      %19 = arith.maximumf %17, %18 : vector<512x128xf32>
      %c0_14 = arith.constant 0 : index
      %c0_15 = arith.constant 0 : index
      %20 = vector.load %arg5[%c0_14, %c0_15] : memref<128x128xf32, #tpu.memory_space<vmem>>, vector<128x128xf32>
      %cst_16 = arith.constant dense<0.000000e+00> : vector<512x128xf32>
      %21 = tpu.matmul %19, %20, %cst_16 {dimension_numbers = #tpu.dot_dimension_numbers<[1], [0], [0], [1], [0, 0, 1, 1], [], []>} : vector<512x128xf32>, vector<128x128xf32>, vector<512x128xf32> -> vector<512x128xf32>
      %22 = arith.truncf %21 : vector<512x128xf32> to vector<512x128xbf16>
      %c0_17 = arith.constant 0 : index
      %c0_18 = arith.constant 0 : index
      %23 = vector.load %arg6[%c0_17, %c0_18] : memref<512x128xbf16, #tpu.memory_space<vmem>>, vector<512x128xbf16>
      tpu.vector_store %arg6[%c0_17, %c0_18], %22 {strides = array<i32>} : memref<512x128xbf16, #tpu.memory_space<vmem>>, vector<512x128xbf16>,
    } else {
    }
    return
  }
  func.func @transform_0(%arg0: i32, %arg1: i32) -> (i32, i32) {
    %c0_i32 = arith.constant 0 : i32
    return %arg0, %arg1 : i32, i32
  }
  func.func @transform_1(%arg0: i32, %arg1: i32) -> (i32, i32) {
    %c0_i32 = arith.constant 0 : i32
    %c0_i32_0 = arith.constant 0 : i32
    %c0_i32_1 = arith.constant 0 : i32
    return %c0_i32, %c0_i32_0 : i32, i32
  }
  func.func @transform_2(%arg0: i32, %arg1: i32) -> (i32, i32) {
    %c0_i32 = arith.constant 0 : i32
    %c0_i32_0 = arith.constant 0 : i32
    %c0_i32_1 = arith.constant 0 : i32
    return %c0_i32, %c0_i32_0 : i32, i32
  }
  func.func @transform_3(%arg0: i32, %arg1: i32) -> (i32, i32) {
    %c0_i32 = arith.constant 0 : i32
    %c0_i32_0 = arith.constant 0 : i32
    %c0_i32_1 = arith.constant 0 : i32
    return %c0_i32, %c0_i32_0 : i32, i32
  }
  func.func @transform_4(%arg0: i32, %arg1: i32) -> (i32, i32) {
    %c0_i32 = arith.constant 0 : i32
    %c0_i32_0 = arith.constant 0 : i32
    return %arg0, %c0_i32 : i32, i32
  }
}

</mosaic_0001>

<llo_original>
// kernel: tpu_custom_call.1
$region0: #{tpu_custom_call.1}
  #allocation0 [shape = 'u32[]', space=smem, size = 0x4, offset = 0x4, fixed_abs, tag = 'smem constant byte address 0x4 - core index']
  #allocation1 [shape = 'u32[144,128]{1,0:T(1,128)}', space=vmem, size = 0x12000, scoped, tag = 'internal scratch']
  #allocation2 [shape = 'f32[512,128]{1,0:T(8,128)}', space=vmem, size = 0x40000, scoped, tag = 'scratch operand']
  %s0 = inlined_call_operand.hbm [shape: bf16[1024,1024], index: 0, kind: input, shape index: {}]
  %s1 = inlined_call_operand.hbm [shape: bf16[1024,128], index: 1, kind: input, shape index: {}]
  %s2 = inlined_call_operand.hbm [shape: f32[128,128], index: 2, kind: input, shape index: {}]
  %s3 = inlined_call_operand.hbm [shape: f32[128,128], index: 3, kind: input, shape index: {}]
  %s4 = inlined_call_operand.hbm [shape: bf16[1024,128], index: 4, kind: output, shape index: {}]
  %s5 = sld [smem:[#allocation0]]
  $region73: #{tpu_custom_call.1} parent=0
    _
  %s7 = ssub.s32 1, %s5
  %s8 = scalar_select 0, %s7, %s5
  $region1: #{tpu_custom_call.1} parent=0
    #allocation3 [shape = 'u8[1048576]{0}', space=vmem, size = 0x100000, scoped, tag = 'input window, operand 0']
    #allocation4 [shape = 's32[2]{0}', space=sflag, size = 0x8, scoped, tag = 'scoped memory for tpu_custom_call.1']
    #allocation5 [shape = 's32[2]{0}', space=sflag, size = 0x8, scoped, tag = 'scoped memory for tpu_custom_call.1']
    #allocation6 [shape = 'u8[262144]{0}', space=vmem, size = 0x40000, scoped, tag = 'input window, operand 1, single buffered']
    #allocation7 [shape = 's32[1]{0}', space=sflag, size = 0x4, scoped, tag = 'scoped memory for tpu_custom_call.1']
    #allocation8 [shape = 'u8[65536]{0}', space=vmem, size = 0x10000, scoped, tag = 'input window, operand 2, single buffered']
    #allocation9 [shape = 'u8[65536]{0}', space=vmem, size = 0x10000, scoped, tag = 'input window, operand 3, single buffered']
    #allocation10 [shape = 's32[1]{0}', space=sflag, size = 0x4, scoped, tag = 'scoped memory for tpu_custom_call.1']
    #allocation11 [shape = 'u8[262144]{0}', space=vmem, size = 0x40000, scoped, tag = 'output window, operand 0']
    %9 = vsyncpa [#allocation4], 0
    %s10 = scalar_lea.sflag [#allocation4], 1
    %11 = vsyncpa %s10, 0
    %12 = vsyncpa [#allocation7], 0
    %13 = vsyncpa [#allocation10], 0
    %14 = vsyncpa [#allocation5], 0
    %s15 = scalar_lea.sflag [#allocation5], 1
    %16 = vsyncpa %s15, 0
    loop: start=0, step=1, limit=6
    $region2: #{tpu_custom_call.1} parent=1 // loop_pre_header
      _
    $region3: #{tpu_custom_call.1} parent=1 // loop_header
      %s18 = sphi 0, %s22
      %p19 = scmp.ge.s32.totalorder %s18, 6
      %s25 = sphi 0, %s37
      %s26 = sphi 0, %s33
      %s27 = sphi 0, %s25
      %s28 = sphi 0, %s26
      %s29 = sphi 0, %s27
      %s30 = sphi 0, %s28
      %s42 = sphi 0, %s44
      %s45 = sphi 0, %s42
      %s46 = sphi 0, %s45
      %s62 = sphi 0, %s46
      %s66 = sphi 0, %s66
      %s68 = sphi 0, %s66
      %s69 = sphi 0, %s68
      %s83 = sphi 0, %s69
      %s87 = sphi 0, %s87
      %s89 = sphi 0, %s87
      %s90 = sphi 0, %s89
      %s104 = sphi 0, %s90
      %s108 = sphi 0, %s108
      %s110 = sphi 0, %s108
      %s111 = sphi 0, %s110
      %s125 = sphi 0, %s111
      %s131 = sphi 0, %s133
      %s134 = sphi 0, %s131
      %s135 = sphi 0, %s134
      %s151 = sphi 0, %s135
    $region4: #{tpu_custom_call.1} parent=1 // loop_header_branch
      %21 = sbr.rel (%p19) target = $region8
    $region5: #{tpu_custom_call.1} parent=1 // loop_body
      %s23 = ssub.s32 %s18, 1
      %s24 = ssub.s32 %s18, 2
      %s31 = sadd.s32 1, %s26
      %p32 = scmp.ge.s32.totalorder %s31, 2
      %s33 = scalar_select %p32, 0, %s31
      %s34 = sadd.s32 1, %s25
      %s35 = scalar_select %p32, %s34, %s25
      %p36 = scmp.ge.s32.totalorder %s35, 2
      %s37 = scalar_select %p36, 0, %s35
      %s38 = ssub.s32 %s25, %s37
      %s39 = ssub.s32 %s26, %s33
      %s40 = sor.u32 %s38, %s39
      %p41 = scmp.eq.s32.totalorder %s40, 0
      %s43 = sadd.s32 %s42, 1
      %s44 = scalar_select %p41, %s42, %s43
      %p47 = pneg %p41
      %p48 = scmp.eq.s32.totalorder %s18, 3
      %p49 = por %p47, %p48
      %p50 = scmp.ne.s32.totalorder %s42, %s45
      %p51 = scmp.eq.s32.totalorder %s18, 0
      %p52 = por %p50, %p51
      %p53 = scmp.ne.s32.totalorder %s42, %s45
      %p54 = scmp.eq.s32.totalorder %s23, 3
      %p55 = por %p53, %p54
      %p56 = scmp.ne.s32.totalorder %s45, %s46
      %p57 = scmp.eq.s32.totalorder %s23, 0
      %p58 = por %p56, %p57
      %p59 = scmp.ne.s32.totalorder %s45, %s46
      %p60 = scmp.eq.s32.totalorder %s24, 3
      %p61 = por %p59, %p60
      %p63 = scmp.ne.s32.totalorder %s46, %s62
      %p64 = scmp.eq.s32.totalorder %s24, 0
      %p65 = por %p63, %p64
      %s67 = sadd.s32 %s66, 1
      %p70 = scmp.eq.s32.totalorder %s18, 3
      %p71 = scmp.ne.s32.totalorder %s66, %s68
      %p72 = scmp.eq.s32.totalorder %s18, 0
      %p73 = por %p71, %p72
      %p74 = scmp.ne.s32.totalorder %s66, %s68
      %p75 = scmp.eq.s32.totalorder %s23, 3
      %p76 = por %p74, %p75
      %p77 = scmp.ne.s32.totalorder %s68, %s69
      %p78 = scmp.eq.s32.totalorder %s23, 0
      %p79 = por %p77, %p78
      %p80 = scmp.ne.s32.totalorder %s68, %s69
      %p81 = scmp.eq.s32.totalorder %s24, 3
      %p82 = por %p80, %p81
      %p84 = scmp.ne.s32.totalorder %s69, %s83
      %p85 = scmp.eq.s32.totalorder %s24, 0
      %p86 = por %p84, %p85
      %s88 = sadd.s32 %s87, 1
      %p91 = scmp.eq.s32.totalorder %s18, 3
      %p92 = scmp.ne.s32.totalorder %s87, %s89
      %p93 = scmp.eq.s32.totalorder %s18, 0
      %p94 = por %p92, %p93
      %p95 = scmp.ne.s32.totalorder %s87, %s89
      %p96 = scmp.eq.s32.totalorder %s23, 3
      %p97 = por %p95, %p96
      %p98 = scmp.ne.s32.totalorder %s89, %s90
      %p99 = scmp.eq.s32.totalorder %s23, 0
      %p100 = por %p98, %p99
      %p101 = scmp.ne.s32.totalorder %s89, %s90
      %p102 = scmp.eq.s32.totalorder %s24, 3
      %p103 = por %p101, %p102
      %p105 = scmp.ne.s32.totalorder %s90, %s104
      %p106 = scmp.eq.s32.totalorder %s24, 0
      %p107 = por %p105, %p106
      %s109 = sadd.s32 %s108, 1
      %p112 = scmp.eq.s32.totalorder %s18, 3
      %p113 = scmp.ne.s32.totalorder %s108, %s110
      %p114 = scmp.eq.s32.totalorder %s18, 0
      %p115 = por %p113, %p114
      %p116 = scmp.ne.s32.totalorder %s108, %s110
      %p117 = scmp.eq.s32.totalorder %s23, 3
      %p118 = por %p116, %p117
      %p119 = scmp.ne.s32.totalorder %s110, %s111
      %p120 = scmp.eq.s32.totalorder %s23, 0
      %p121 = por %p119, %p120
      %p122 = scmp.ne.s32.totalorder %s110, %s111
      %p123 = scmp.eq.s32.totalorder %s24, 3
      %p124 = por %p122, %p123
      %p126 = scmp.ne.s32.totalorder %s111, %s125
      %p127 = scmp.eq.s32.totalorder %s24, 0
      %p128 = por %p126, %p127
      %s129 = ssub.s32 %s25, %s37
      %p130 = scmp.eq.s32.totalorder %s129, 0
      %s132 = sadd.s32 %s131, 1
      %s133 = scalar_select %p130, %s131, %s132
      %p136 = pneg %p130
      %p137 = scmp.eq.s32.totalorder %s18, 3
      %p138 = por %p136, %p137
      %p139 = scmp.ne.s32.totalorder %s131, %s134
      %p140 = scmp.eq.s32.totalorder %s18, 0
      %p141 = por %p139, %p140
      %p142 = scmp.ne.s32.totalorder %s131, %s134
      %p143 = scmp.eq.s32.totalorder %s23, 3
      %p144 = por %p142, %p143
      %p145 = scmp.ne.s32.totalorder %s134, %s135
      %p146 = scmp.eq.s32.totalorder %s23, 0
      %p147 = por %p145, %p146
      %p148 = scmp.ne.s32.totalorder %s134, %s135
      %p149 = scmp.eq.s32.totalorder %s24, 3
      %p150 = por %p148, %p149
      %p152 = scmp.ne.s32.totalorder %s135, %s151
      %p153 = scmp.eq.s32.totalorder %s24, 0
      %p154 = por %p152, %p153
      %p155 = scmp.le.s32.totalorder 1, %s18
      %p156 = scmp.lt.s32.totalorder %s18, 5
      %p157 = pnand %p155, %p156
      %p158 = pneg %p157
      // Predicated region
      $region9: #{tpu_custom_call.1} parent=5 // pred_check
        _
      $region10: #{tpu_custom_call.1} parent=5 // pred_check_branch
        %160 = sbr.rel (%p157) target = $region12
      $region11: #{tpu_custom_call.1} parent=5 // pred_region
        %s161 = ssub.s32 %s18, 1
        // Predicated region
        $region13: #{tpu_custom_call.1} parent=11 // pred_check
          %p162 = pneg %p79
        $region14: #{tpu_custom_call.1} parent=11 // pred_check_branch
          %164 = sbr.rel (%p162) target = $region16
        $region15: #{tpu_custom_call.1} parent=11 // pred_region
          %s166 = ssub.s32 8192, 8192
          %167 = vsyncadd [#allocation7], %s166
          %s168 = sshll.u32 [#allocation6], 4
          %s169 = int_to_ptr.vmem [resolvable:$true] %s168
          %174 = dma.hbm_to_vmem [thread:$0]  %s1, 8192, %s169, [#allocation7], 64, 64, 4
        $region16: #{tpu_custom_call.1} parent=11 // pred_fallthru
          _
        // Predicated region
        $region17: #{tpu_custom_call.1} parent=11 // pred_check
          %p175 = pneg %p100
        $region18: #{tpu_custom_call.1} parent=11 // pred_check_branch
          %177 = sbr.rel (%p175) target = $region20
        $region19: #{tpu_custom_call.1} parent=11 // pred_region
          %s179 = ssub.s32 2048, 2048
          %180 = vsyncadd [#allocation7], %s179
          %s181 = sshll.u32 [#allocation8], 4
          %s182 = int_to_ptr.vmem [resolvable:$true] %s181
          %187 = dma.hbm_to_vmem [thread:$0]  %s2, 2048, %s182, [#allocation7], 128, 128, 8
        $region20: #{tpu_custom_call.1} parent=11 // pred_fallthru
          _
        // Predicated region
        $region21: #{tpu_custom_call.1} parent=11 // pred_check
          %p188 = pneg %p121
        $region22: #{tpu_custom_call.1} parent=11 // pred_check_branch
          %190 = sbr.rel (%p188) target = $region24
        $region23: #{tpu_custom_call.1} parent=11 // pred_region
          %s192 = ssub.s32 2048, 2048
          %193 = vsyncadd [#allocation10], %s192
          %s194 = sshll.u32 [#allocation9], 4
          %s195 = int_to_ptr.vmem [resolvable:$true] %s194
          %200 = dma.hbm_to_vmem [thread:$0]  %s3, 2048, %s195, [#allocation10], 128, 128, 8
        $region24: #{tpu_custom_call.1} parent=11 // pred_fallthru
          _
      $region12: #{tpu_custom_call.1} parent=5 // pred_fallthru
        _
      %p201 = scmp.lt.s32.totalorder %s18, 4
      // Predicated region
      $region25: #{tpu_custom_call.1} parent=5 // pred_check
        %p202 = pneg %p201
      $region26: #{tpu_custom_call.1} parent=5 // pred_check_branch
        %204 = sbr.rel (%p202) target = $region28
      $region27: #{tpu_custom_call.1} parent=5 // pred_region
        // Predicated region
        $region29: #{tpu_custom_call.1} parent=27 // pred_check
          %p205 = pneg %p52
        $region30: #{tpu_custom_call.1} parent=27 // pred_check_branch
          %207 = sbr.rel (%p205) target = $region32
        $region31: #{tpu_custom_call.1} parent=27 // pred_region
          %s208 = sand.u32 %s42, 1
          %s209 = scalar_lea.sflag [#allocation4], %s208
          %s210 = sand.u32 %s42, 1
          %s211 = smul.addr %s210, 1024
          %s212 = scalar_lea.vmem [#allocation3], %s211
          %s213 = smul.u32 64, %s25
          %s214 = smul.u32 4, %s26
          %s216 = ssub.s32 16384, 16384
          %217 = vsyncadd %s209, %s216
          %s218 = smul.addr %s213, 8
          %s219 = sadd.s32 %s214, %s218
          %s220 = smul.addr %s219, 64
          %s221 = scalar_lea.hbm %s0, %s220
          %s222 = sshll.u32 %s212, 4
          %s223 = int_to_ptr.vmem [resolvable:$true] %s222
          %228 = dma.hbm_to_vmem [thread:$0]  %s221, 16384, %s223, %s209, 512, 256, 16
        $region32: #{tpu_custom_call.1} parent=27 // pred_fallthru
          _
      $region28: #{tpu_custom_call.1} parent=5 // pred_fallthru
        _
      %p229 = scmp.le.s32.totalorder 1, %s18
      %p230 = scmp.lt.s32.totalorder %s18, 5
      %p231 = pnand %p229, %p230
      %p232 = pneg %p231
      // Predicated region
      $region33: #{tpu_custom_call.1} parent=5 // pred_check
        _
      $region34: #{tpu_custom_call.1} parent=5 // pred_check_branch
        %234 = sbr.rel (%p231) target = $region36
      $region35: #{tpu_custom_call.1} parent=5 // pred_region
        %s235 = ssub.s32 %s18, 1
        %s236 = sand.u32 %s45, 1
        %s237 = scalar_lea.sflag [#allocation4], %s236
        %s238 = sand.u32 %s45, 1
        %s239 = smul.addr %s238, 1024
        %s240 = scalar_lea.vmem [#allocation3], %s239
        // Predicated region
        $region37: #{tpu_custom_call.1} parent=35 // pred_check
          %p241 = pneg %p58
        $region38: #{tpu_custom_call.1} parent=35 // pred_check_branch
          %243 = sbr.rel (%p241) target = $region40
        $region39: #{tpu_custom_call.1} parent=35 // pred_region
          %244 = dma.done %s237, 16384
        $region40: #{tpu_custom_call.1} parent=35 // pred_fallthru
          _
        // Predicated region
        $region41: #{tpu_custom_call.1} parent=35 // pred_check
          %p245 = pneg %p79
        $region42: #{tpu_custom_call.1} parent=35 // pred_check_branch
          %247 = sbr.rel (%p245) target = $region44
        $region43: #{tpu_custom_call.1} parent=35 // pred_region
          %248 = dma.done [#allocation7], 8192
        $region44: #{tpu_custom_call.1} parent=35 // pred_fallthru
          _
        // Predicated region
        $region45: #{tpu_custom_call.1} parent=35 // pred_check
          %p249 = pneg %p100
        $region46: #{tpu_custom_call.1} parent=35 // pred_check_branch
          %251 = sbr.rel (%p249) target = $region48
        $region47: #{tpu_custom_call.1} parent=35 // pred_region
          %252 = dma.done [#allocation7], 2048
        $region48: #{tpu_custom_call.1} parent=35 // pred_fallthru
          _
        // Predicated region
        $region49: #{tpu_custom_call.1} parent=35 // pred_check
          %p253 = pneg %p121
        $region50: #{tpu_custom_call.1} parent=35 // pred_check_branch
          %255 = sbr.rel (%p253) target = $region52
        $region51: #{tpu_custom_call.1} parent=35 // pred_region
          %256 = dma.done [#allocation10], 2048
        $region52: #{tpu_custom_call.1} parent=35 // pred_fallthru
          _
        %s257 = sand.u32 %s45, 1
        %s258 = scalar_lea.sflag [#allocation4], %s257
        %s259 = sand.u32 %s45, 1
        %s260 = smul.addr %s259, 1024
        %s261 = scalar_lea.vmem [#allocation3], %s260
        %p262 = pneg %p58
        %p263 = pneg %p55
        %p264 = pneg %p79
        %p265 = pneg %p76
        %p266 = pneg %p100
        %p267 = pneg %p97
        %p268 = pneg %p121
        %p269 = pneg %p118
        %p270 = pneg %p147
        %p271 = pneg %p144
        %s272 = sand.u32 %s134, 1
        %s273 = scalar_lea.sflag [#allocation5], %s272
        %s274 = sand.u32 %s134, 1
        %s275 = smul.addr %s274, 256
        %s276 = scalar_lea.vmem [#allocation11], %s275
        %s277 = smul.u32 64, %s27
        %s278 = smul.u32 4, %s28
        %s279 = smul.u32 64, %s27
        %p281 = scmp.eq.s32.totalorder %s28, 0
        // Predicated region
        $region53: #{tpu_custom_call.1} parent=35 // pred_check
          %p282 = pneg %p281
        $region54: #{tpu_custom_call.1} parent=35 // pred_check_branch
          %284 = sbr.rel (%p282) target = $region56
        $region55: #{tpu_custom_call.1} parent=35 // pred_region
          %285 = vst [vmem:[#allocation2] sm:$0xff] 0.0
          %286 = vst [vmem:[#allocation2 + $0x8] sm:$0xff] 0.0
          %287 = vst [vmem:[#allocation2 + $0x10] sm:$0xff] 0.0
          %288 = vst [vmem:[#allocation2 + $0x18] sm:$0xff] 0.0
          %289 = vst [vmem:[#allocation2 + $0x20] sm:$0xff] 0.0
          %290 = vst [vmem:[#allocation2 + $0x28] sm:$0xff] 0.0
          %291 = vst [vmem:[#allocation2 + $0x30] sm:$0xff] 0.0
          %292 = vst [vmem:[#allocation2 + $0x38] sm:$0xff] 0.0
          %293 = vst [vmem:[#allocation2 + $0x40] sm:$0xff] 0.0
          %294 = vst [vmem:[#allocation2 + $0x48] sm:$0xff] 0.0
          %295 = vst [vmem:[#allocation2 + $0x50] sm:$0xff] 0.0
          %296 = vst [vmem:[#allocation2 + $0x58] sm:$0xff] 0.0
          %297 = vst [vmem:[#allocation2 + $0x60] sm:$0xff] 0.0
          %298 = vst [vmem:[#allocation2 + $0x68] sm:$0xff] 0.0
          %299 = vst [vmem:[#allocation2 + $0x70] sm:$0xff] 0.0
          %300 = vst [vmem:[#allocation2 + $0x78] sm:$0xff] 0.0
          %301 = vst [vmem:[#allocation2 + $0x80] sm:$0xff] 0.0
          %302 = vst [vmem:[#allocation2 + $0x88] sm:$0xff] 0.0
          %303 = vst [vmem:[#allocation2 + $0x90] sm:$0xff] 0.0
          %304 = vst [vmem:[#allocation2 + $0x98] sm:$0xff] 0.0
          %305 = vst [vmem:[#allocation2 + $0xa0] sm:$0xff] 0.0
          %306 = vst [vmem:[#allocation2 + $0xa8] sm:$0xff] 0.0
          %307 = vst [vmem:[#allocation2 + $0xb0] sm:$0xff] 0.0
          %308 = vst [vmem:[#allocation2 + $0xb8] sm:$0xff] 0.0
          %309 = vst [vmem:[#allocation2 + $0xc0] sm:$0xff] 0.0
          %310 = vst [vmem:[#allocation2 + $0xc8] sm:$0xff] 0.0
          %311 = vst [vmem:[#allocation2 + $0xd0] sm:$0xff] 0.0
          %312 = vst [vmem:[#allocation2 + $0xd8] sm:$0xff] 0.0
          %313 = vst [vmem:[#allocation2 + $0xe0] sm:$0xff] 0.0
          %314 = vst [vmem:[#allocation2 + $0xe8] sm:$0xff] 0.0
          %315 = vst [vmem:[#allocation2 + $0xf0] sm:$0xff] 0.0
          %316 = vst [vmem:[#allocation2 + $0xf8] sm:$0xff] 0.0
          %317 = vst [vmem:[#allocation2 + $0x100] sm:$0xff] 0.0
          %318 = vst [vmem:[#allocation2 + $0x108] sm:$0xff] 0.0
          %319 = vst [vmem:[#allocation2 + $0x110] sm:$0xff] 0.0
          %320 = vst [vmem:[#allocation2 + $0x118] sm:$0xff] 0.0
          %321 = vst [vmem:[#allocation2 + $0x120] sm:$0xff] 0.0
          %322 = vst [vmem:[#allocation2 + $0x128] sm:$0xff] 0.0
          %323 = vst [vmem:[#allocation2 + $0x130] sm:$0xff] 0.0
          %324 = vst [vmem:[#allocation2 + $0x138] sm:$0xff] 0.0
          %325 = vst [vmem:[#allocation2 + $0x140] sm:$0xff] 0.0
          %326 = vst [vmem:[#allocation2 + $0x148] sm:$0xff] 0.0
          %327 = vst [vmem:[#allocation2 + $0x150] sm:$0xff] 0.0
          %328 = vst [vmem:[#allocation2 + $0x158] sm:$0xff] 0.0
          %329 = vst [vmem:[#allocation2 + $0x160] sm:$0xff] 0.0
          %330 = vst [vmem:[#allocation2 + $0x168] sm:$0xff] 0.0
          %331 = vst [vmem:[#allocation2 + $0x170] sm:$0xff] 0.0
          %332 = vst [vmem:[#allocation2 + $0x178] sm:$0xff] 0.0
          %333 = vst [vmem:[#allocation2 + $0x180] sm:$0xff] 0.0
          %334 = vst [vmem:[#allocation2 + $0x188] sm:$0xff] 0.0
          %335 = vst [vmem:[#allocation2 + $0x190] sm:$0xff] 0.0
          %336 = vst [vmem:[#allocation2 + $0x198] sm:$0xff] 0.0
          %337 = vst [vmem:[#allocation2 + $0x1a0] sm:$0xff] 0.0
          %338 = vst [vmem:[#allocation2 + $0x1a8] sm:$0xff] 0.0
          %339 = vst [vmem:[#allocation2 + $0x1b0] sm:$0xff] 0.0
          %340 = vst [vmem:[#allocation2 + $0x1b8] sm:$0xff] 0.0
          %341 = vst [vmem:[#allocation2 + $0x1c0] sm:$0xff] 0.0
          %342 = vst [vmem:[#allocation2 + $0x1c8] sm:$0xff] 0.0
          %343 = vst [vmem:[#allocation2 + $0x1d0] sm:$0xff] 0.0
          %344 = vst [vmem:[#allocation2 + $0x1d8] sm:$0xff] 0.0
          %345 = vst [vmem:[#allocation2 + $0x1e0] sm:$0xff] 0.0
          %346 = vst [vmem:[#allocation2 + $0x1e8] sm:$0xff] 0.0
          %347 = vst [vmem:[#allocation2 + $0x1f0] sm:$0xff] 0.0
          %348 = vst [vmem:[#allocation2 + $0x1f8] sm:$0xff] 0.0
        $region56: #{tpu_custom_call.1} parent=35 // pred_fallthru
          _
        %s349 = smul.u32 %s28, 512
        %s350 = sshra.s32 %s349, 3
        %s351 = sand.u32 %s349, 7
        %s352 = smul.addr %s350, 4
        %s353 = scalar_lea.vmem [#allocation6], %s352
        %v354 = vld [vmem:[%s353] sm:$0xf]
        %v355 = vld [vmem:[%s353 + $0x4] sm:$0xf]
        %v356 = vld [vmem:[%s353 + $0x8] sm:$0xf]
        %v357 = vld [vmem:[%s353 + $0xc] sm:$0xf]
        %v358 = vld [vmem:[%s353 + $0x10] sm:$0xf]
        %v359 = vld [vmem:[%s353 + $0x14] sm:$0xf]
        %v360 = vld [vmem:[%s353 + $0x18] sm:$0xf]
        %v361 = vld [vmem:[%s353 + $0x1c] sm:$0xf]
        %v362 = vld [vmem:[%s353 + $0x20] sm:$0xf]
        %v363 = vld [vmem:[%s353 + $0x24] sm:$0xf]
        %v364 = vld [vmem:[%s353 + $0x28] sm:$0xf]
        %v365 = vld [vmem:[%s353 + $0x2c] sm:$0xf]
        %v366 = vld [vmem:[%s353 + $0x30] sm:$0xf]
        %v367 = vld [vmem:[%s353 + $0x34] sm:$0xf]
        %v368 = vld [vmem:[%s353 + $0x38] sm:$0xf]
        %v369 = vld [vmem:[%s353 + $0x3c] sm:$0xf]
        %v370 = vld [vmem:[%s353 + $0x40] sm:$0xf]
        %v371 = vld [vmem:[%s353 + $0x44] sm:$0xf]
        %v372 = vld [vmem:[%s353 + $0x48] sm:$0xf]
        %v373 = vld [vmem:[%s353 + $0x4c] sm:$0xf]
        %v374 = vld [vmem:[%s353 + $0x50] sm:$0xf]
        %v375 = vld [vmem:[%s353 + $0x54] sm:$0xf]
        %v376 = vld [vmem:[%s353 + $0x58] sm:$0xf]
        %v377 = vld [vmem:[%s353 + $0x5c] sm:$0xf]
        %v378 = vld [vmem:[%s353 + $0x60] sm:$0xf]
        %v379 = vld [vmem:[%s353 + $0x64] sm:$0xf]
        %v380 = vld [vmem:[%s353 + $0x68] sm:$0xf]
        %v381 = vld [vmem:[%s353 + $0x6c] sm:$0xf]
        %v382 = vld [vmem:[%s353 + $0x70] sm:$0xf]
        %v383 = vld [vmem:[%s353 + $0x74] sm:$0xf]
        %v384 = vld [vmem:[%s353 + $0x78] sm:$0xf]
        %v385 = vld [vmem:[%s353 + $0x7c] sm:$0xf]
        %v386 = vld [vmem:[%s353 + $0x80] sm:$0xf]
        %v387 = vld [vmem:[%s353 + $0x84] sm:$0xf]
        %v388 = vld [vmem:[%s353 + $0x88] sm:$0xf]
        %v389 = vld [vmem:[%s353 + $0x8c] sm:$0xf]
        %v390 = vld [vmem:[%s353 + $0x90] sm:$0xf]
        %v391 = vld [vmem:[%s353 + $0x94] sm:$0xf]
        %v392 = vld [vmem:[%s353 + $0x98] sm:$0xf]
        %v393 = vld [vmem:[%s353 + $0x9c] sm:$0xf]
        %v394 = vld [vmem:[%s353 + $0xa0] sm:$0xf]
        %v395 = vld [vmem:[%s353 + $0xa4] sm:$0xf]
        %v396 = vld [vmem:[%s353 + $0xa8] sm:$0xf]
        %v397 = vld [vmem:[%s353 + $0xac] sm:$0xf]
        %v398 = vld [vmem:[%s353 + $0xb0] sm:$0xf]
        %v399 = vld [vmem:[%s353 + $0xb4] sm:$0xf]
        %v400 = vld [vmem:[%s353 + $0xb8] sm:$0xf]
        %v401 = vld [vmem:[%s353 + $0xbc] sm:$0xf]
        %v402 = vld [vmem:[%s353 + $0xc0] sm:$0xf]
        %v403 = vld [vmem:[%s353 + $0xc4] sm:$0xf]
        %v404 = vld [vmem:[%s353 + $0xc8] sm:$0xf]
        %v405 = vld [vmem:[%s353 + $0xcc] sm:$0xf]
        %v406 = vld [vmem:[%s353 + $0xd0] sm:$0xf]
        %v407 = vld [vmem:[%s353 + $0xd4] sm:$0xf]
        %v408 = vld [vmem:[%s353 + $0xd8] sm:$0xf]
        %v409 = vld [vmem:[%s353 + $0xdc] sm:$0xf]
        %v410 = vld [vmem:[%s353 + $0xe0] sm:$0xf]
        %v411 = vld [vmem:[%s353 + $0xe4] sm:$0xf]
        %v412 = vld [vmem:[%s353 + $0xe8] sm:$0xf]
        %v413 = vld [vmem:[%s353 + $0xec] sm:$0xf]
        %v414 = vld [vmem:[%s353 + $0xf0] sm:$0xf]
        %v415 = vld [vmem:[%s353 + $0xf4] sm:$0xf]
        %v416 = vld [vmem:[%s353 + $0xf8] sm:$0xf]
        %v417 = vld [vmem:[%s353 + $0xfc] sm:$0xf]
        %v418 = vld [vmem:[#allocation2] sm:$0xff]
        %v419 = vld [vmem:[#allocation2 + $0x8] sm:$0xff]
        %v420 = vld [vmem:[#allocation2 + $0x10] sm:$0xff]
        %v421 = vld [vmem:[#allocation2 + $0x18] sm:$0xff]
        %v422 = vld [vmem:[#allocation2 + $0x20] sm:$0xff]
        %v423 = vld [vmem:[#allocation2 + $0x28] sm:$0xff]
        %v424 = vld [vmem:[#allocation2 + $0x30] sm:$0xff]
        %v425 = vld [vmem:[#allocation2 + $0x38] sm:$0xff]
        %v426 = vld [vmem:[#allocation2 + $0x40] sm:$0xff]
        %v427 = vld [vmem:[#allocation2 + $0x48] sm:$0xff]
        %v428 = vld [vmem:[#allocation2 + $0x50] sm:$0xff]
        %v429 = vld [vmem:[#allocation2 + $0x58] sm:$0xff]
        %v430 = vld [vmem:[#allocation2 + $0x60] sm:$0xff]
        %v431 = vld [vmem:[#allocation2 + $0x68] sm:$0xff]
        %v432 = vld [vmem:[#allocation2 + $0x70] sm:$0xff]
        %v433 = vld [vmem:[#allocation2 + $0x78] sm:$0xff]
        %v434 = vld [vmem:[#allocation2 + $0x80] sm:$0xff]
        %v435 = vld [vmem:[#allocation2 + $0x88] sm:$0xff]
        %v436 = vld [vmem:[#allocation2 + $0x90] sm:$0xff]
        %v437 = vld [vmem:[#allocation2 + $0x98] sm:$0xff]
        %v438 = vld [vmem:[#allocation2 + $0xa0] sm:$0xff]
        %v439 = vld [vmem:[#allocation2 + $0xa8] sm:$0xff]
        %v440 = vld [vmem:[#allocation2 + $0xb0] sm:$0xff]
        %v441 = vld [vmem:[#allocation2 + $0xb8] sm:$0xff]
        %v442 = vld [vmem:[#allocation2 + $0xc0] sm:$0xff]
        %v443 = vld [vmem:[#allocation2 + $0xc8] sm:$0xff]
        %v444 = vld [vmem:[#allocation2 + $0xd0] sm:$0xff]
        %v445 = vld [vmem:[#allocation2 + $0xd8] sm:$0xff]
        %v446 = vld [vmem:[#allocation2 + $0xe0] sm:$0xff]
        %v447 = vld [vmem:[#allocation2 + $0xe8] sm:$0xff]
        %v448 = vld [vmem:[#allocation2 + $0xf0] sm:$0xff]
        %v449 = vld [vmem:[#allocation2 + $0xf8] sm:$0xff]
        %v450 = vld [vmem:[#allocation2 + $0x100] sm:$0xff]
        %v451 = vld [vmem:[#allocation2 + $0x108] sm:$0xff]
        %v452 = vld [vmem:[#allocation2 + $0x110] sm:$0xff]
        %v453 = vld [vmem:[#allocation2 + $0x118] sm:$0xff]
        %v454 = vld [vmem:[#allocation2 + $0x120] sm:$0xff]
        %v455 = vld [vmem:[#allocation2 + $0x128] sm:$0xff]
        %v456 = vld [vmem:[#allocation2 + $0x130] sm:$0xff]
        %v457 = vld [vmem:[#allocation2 + $0x138] sm:$0xff]
        %v458 = vld [vmem:[#allocation2 + $0x140] sm:$0xff]
        %v459 = vld [vmem:[#allocation2 + $0x148] sm:$0xff]
        %v460 = vld [vmem:[#allocation2 + $0x150] sm:$0xff]
        %v461 = vld [vmem:[#allocation2 + $0x158] sm:$0xff]
        %v462 = vld [vmem:[#allocation2 + $0x160] sm:$0xff]
        %v463 = vld [vmem:[#allocation2 + $0x168] sm:$0xff]
        %v464 = vld [vmem:[#allocation2 + $0x170] sm:$0xff]
        %v465 = vld [vmem:[#allocation2 + $0x178] sm:$0xff]
        %v466 = vld [vmem:[#allocation2 + $0x180] sm:$0xff]
        %v467 = vld [vmem:[#allocation2 + $0x188] sm:$0xff]
        %v468 = vld [vmem:[#allocation2 + $0x190] sm:$0xff]
        %v469 = vld [vmem:[#allocation2 + $0x198] sm:$0xff]
        %v470 = vld [vmem:[#allocation2 + $0x1a0] sm:$0xff]
        %v471 = vld [vmem:[#allocation2 + $0x1a8] sm:$0xff]
        %v472 = vld [vmem:[#allocation2 + $0x1b0] sm:$0xff]
        %v473 = vld [vmem:[#allocation2 + $0x1b8] sm:$0xff]
        %v474 = vld [vmem:[#allocation2 + $0x1c0] sm:$0xff]
        %v475 = vld [vmem:[#allocation2 + $0x1c8] sm:$0xff]
        %v476 = vld [vmem:[#allocation2 + $0x1d0] sm:$0xff]
        %v477 = vld [vmem:[#allocation2 + $0x1d8] sm:$0xff]
        %v478 = vld [vmem:[#allocation2 + $0x1e0] sm:$0xff]
        %v479 = vld [vmem:[#allocation2 + $0x1e8] sm:$0xff]
        %v480 = vld [vmem:[#allocation2 + $0x1f0] sm:$0xff]
        %v481 = vld [vmem:[#allocation2 + $0x1f8] sm:$0xff]
        %v482 = vld [vmem:[%s240] sm:$0xff]
        %v483 = vld [vmem:[%s240 + $0x8] sm:$0xff]
        %v484 = vld [vmem:[%s240 + $0x10] sm:$0xff]
        %v485 = vld [vmem:[%s240 + $0x18] sm:$0xff]
        %v486 = vld [vmem:[%s240 + $0x20] sm:$0xff]
        %v487 = vld [vmem:[%s240 + $0x28] sm:$0xff]
        %v488 = vld [vmem:[%s240 + $0x30] sm:$0xff]
        %v489 = vld [vmem:[%s240 + $0x38] sm:$0xff]
        %v490 = vld [vmem:[%s240 + $0x40] sm:$0xff]
        %v491 = vld [vmem:[%s240 + $0x48] sm:$0xff]
        %v492 = vld [vmem:[%s240 + $0x50] sm:$0xff]
        %v493 = vld [vmem:[%s240 + $0x58] sm:$0xff]
        %v494 = vld [vmem:[%s240 + $0x60] sm:$0xff]
        %v495 = vld [vmem:[%s240 + $0x68] sm:$0xff]
        %v496 = vld [vmem:[%s240 + $0x70] sm:$0xff]
        %v497 = vld [vmem:[%s240 + $0x78] sm:$0xff]
        %v498 = vld [vmem:[%s240 + $0x80] sm:$0xff]
        %v499 = vld [vmem:[%s240 + $0x88] sm:$0xff]
        %v500 = vld [vmem:[%s240 + $0x90] sm:$0xff]
        %v501 = vld [vmem:[%s240 + $0x98] sm:$0xff]
        %v502 = vld [vmem:[%s240 + $0xa0] sm:$0xff]
        %v503 = vld [vmem:[%s240 + $0xa8] sm:$0xff]
        %v504 = vld [vmem:[%s240 + $0xb0] sm:$0xff]
        %v505 = vld [vmem:[%s240 + $0xb8] sm:$0xff]
        %v506 = vld [vmem:[%s240 + $0xc0] sm:$0xff]
        %v507 = vld [vmem:[%s240 + $0xc8] sm:$0xff]
        %v508 = vld [vmem:[%s240 + $0xd0] sm:$0xff]
        %v509 = vld [vmem:[%s240 + $0xd8] sm:$0xff]
        %v510 = vld [vmem:[%s240 + $0xe0] sm:$0xff]
        %v511 = vld [vmem:[%s240 + $0xe8] sm:$0xff]
        %v512 = vld [vmem:[%s240 + $0xf0] sm:$0xff]
        %v513 = vld [vmem:[%s240 + $0xf8] sm:$0xff]
        %v514 = vld [vmem:[%s240 + $0x100] sm:$0xff]
        %v515 = vld [vmem:[%s240 + $0x108] sm:$0xff]
        %v516 = vld [vmem:[%s240 + $0x110] sm:$0xff]
        %v517 = vld [vmem:[%s240 + $0x118] sm:$0xff]
        %v518 = vld [vmem:[%s240 + $0x120] sm:$0xff]
        %v519 = vld [vmem:[%s240 + $0x128] sm:$0xff]
        %v520 = vld [vmem:[%s240 + $0x130] sm:$0xff]
        %v521 = vld [vmem:[%s240 + $0x138] sm:$0xff]
        %v522 = vld [vmem:[%s240 + $0x140] sm:$0xff]
        %v523 = vld [vmem:[%s240 + $0x148] sm:$0xff]
        %v524 = vld [vmem:[%s240 + $0x150] sm:$0xff]
        %v525 = vld [vmem:[%s240 + $0x158] sm:$0xff]
        %v526 = vld [vmem:[%s240 + $0x160] sm:$0xff]
        %v527 = vld [vmem:[%s240 + $0x168] sm:$0xff]
        %v528 = vld [vmem:[%s240 + $0x170] sm:$0xff]
        %v529 = vld [vmem:[%s240 + $0x178] sm:$0xff]
        %v530 = vld [vmem:[%s240 + $0x180] sm:$0xff]
        %v531 = vld [vmem:[%s240 + $0x188] sm:$0xff]
        %v532 = vld [vmem:[%s240 + $0x190] sm:$0xff]
        %v533 = vld [vmem:[%s240 + $0x198] sm:$0xff]
        %v534 = vld [vmem:[%s240 + $0x1a0] sm:$0xff]
        %v535 = vld [vmem:[%s240 + $0x1a8] sm:$0xff]
        %v536 = vld [vmem:[%s240 + $0x1b0] sm:$0xff]
        %v537 = vld [vmem:[%s240 + $0x1b8] sm:$0xff]
        %v538 = vld [vmem:[%s240 + $0x1c0] sm:$0xff]
        %v539 = vld [vmem:[%s240 + $0x1c8] sm:$0xff]
        %v540 = vld [vmem:[%s240 + $0x1d0] sm:$0xff]
        %v541 = vld [vmem:[%s240 + $0x1d8] sm:$0xff]
        %v542 = vld [vmem:[%s240 + $0x1e0] sm:$0xff]
        %v543 = vld [vmem:[%s240 + $0x1e8] sm:$0xff]
        %v544 = vld [vmem:[%s240 + $0x1f0] sm:$0xff]
        %v545 = vld [vmem:[%s240 + $0x1f8] sm:$0xff]
        %v546 = vld [vmem:[%s240 + $0x200] sm:$0xff]
        %v547 = vld [vmem:[%s240 + $0x208] sm:$0xff]
        %v548 = vld [vmem:[%s240 + $0x210] sm:$0xff]
        %v549 = vld [vmem:[%s240 + $0x218] sm:$0xff]
        %v550 = vld [vmem:[%s240 + $0x220] sm:$0xff]
        %v551 = vld [vmem:[%s240 + $0x228] sm:$0xff]
        %v552 = vld [vmem:[%s240 + $0x230] sm:$0xff]
        %v553 = vld [vmem:[%s240 + $0x238] sm:$0xff]
        %v554 = vld [vmem:[%s240 + $0x240] sm:$0xff]
        %v555 = vld [vmem:[%s240 + $0x248] sm:$0xff]
        %v556 = vld [vmem:[%s240 + $0x250] sm:$0xff]
        %v557 = vld [vmem:[%s240 + $0x258] sm:$0xff]
        %v558 = vld [vmem:[%s240 + $0x260] sm:$0xff]
        %v559 = vld [vmem:[%s240 + $0x268] sm:$0xff]
        %v560 = vld [vmem:[%s240 + $0x270] sm:$0xff]
        %v561 = vld [vmem:[%s240 + $0x278] sm:$0xff]
        %v562 = vld [vmem:[%s240 + $0x280] sm:$0xff]
        %v563 = vld [vmem:[%s240 + $0x288] sm:$0xff]
        %v564 = vld [vmem:[%s240 + $0x290] sm:$0xff]
        %v565 = vld [vmem:[%s240 + $0x298] sm:$0xff]
        %v566 = vld [vmem:[%s240 + $0x2a0] sm:$0xff]
        %v567 = vld [vmem:[%s240 + $0x2a8] sm:$0xff]
        %v568 = vld [vmem:[%s240 + $0x2b0] sm:$0xff]
        %v569 = vld [vmem:[%s240 + $0x2b8] sm:$0xff]
        %v570 = vld [vmem:[%s240 + $0x2c0] sm:$0xff]
        %v571 = vld [vmem:[%s240 + $0x2c8] sm:$0xff]
        %v572 = vld [vmem:[%s240 + $0x2d0] sm:$0xff]
        %v573 = vld [vmem:[%s240 + $0x2d8] sm:$0xff]
        %v574 = vld [vmem:[%s240 + $0x2e0] sm:$0xff]
        %v575 = vld [vmem:[%s240 + $0x2e8] sm:$0xff]
        %v576 = vld [vmem:[%s240 + $0x2f0] sm:$0xff]
        %v577 = vld [vmem:[%s240 + $0x2f8] sm:$0xff]
        %v578 = vld [vmem:[%s240 + $0x300] sm:$0xff]
        %v579 = vld [vmem:[%s240 + $0x308] sm:$0xff]
        %v580 = vld [vmem:[%s240 + $0x310] sm:$0xff]
        %v581 = vld [vmem:[%s240 + $0x318] sm:$0xff]
        %v582 = vld [vmem:[%s240 + $0x320] sm:$0xff]
        %v583 = vld [vmem:[%s240 + $0x328] sm:$0xff]
        %v584 = vld [vmem:[%s240 + $0x330] sm:$0xff]
        %v585 = vld [vmem:[%s240 + $0x338] sm:$0xff]
        %v586 = vld [vmem:[%s240 + $0x340] sm:$0xff]
        %v587 = vld [vmem:[%s240 + $0x348] sm:$0xff]
        %v588 = vld [vmem:[%s240 + $0x350] sm:$0xff]
        %v589 = vld [vmem:[%s240 + $0x358] sm:$0xff]
        %v590 = vld [vmem:[%s240 + $0x360] sm:$0xff]
        %v591 = vld [vmem:[%s240 + $0x368] sm:$0xff]
        %v592 = vld [vmem:[%s240 + $0x370] sm:$0xff]
        %v593 = vld [vmem:[%s240 + $0x378] sm:$0xff]
        %v594 = vld [vmem:[%s240 + $0x380] sm:$0xff]
        %v595 = vld [vmem:[%s240 + $0x388] sm:$0xff]
        %v596 = vld [vmem:[%s240 + $0x390] sm:$0xff]
        %v597 = vld [vmem:[%s240 + $0x398] sm:$0xff]
        %v598 = vld [vmem:[%s240 + $0x3a0] sm:$0xff]
        %v599 = vld [vmem:[%s240 + $0x3a8] sm:$0xff]
        %v600 = vld [vmem:[%s240 + $0x3b0] sm:$0xff]
        %v601 = vld [vmem:[%s240 + $0x3b8] sm:$0xff]
        %v602 = vld [vmem:[%s240 + $0x3c0] sm:$0xff]
        %v603 = vld [vmem:[%s240 + $0x3c8] sm:$0xff]
        %v604 = vld [vmem:[%s240 + $0x3d0] sm:$0xff]
        %v605 = vld [vmem:[%s240 + $0x3d8] sm:$0xff]
        %v606 = vld [vmem:[%s240 + $0x3e0] sm:$0xff]
        %v607 = vld [vmem:[%s240 + $0x3e8] sm:$0xff]
        %v608 = vld [vmem:[%s240 + $0x3f0] sm:$0xff]
        %v609 = vld [vmem:[%s240 + $0x3f8] sm:$0xff]
        %v738 = vunpack.c.l.b16 %v482
        %v739 = vunpack.c.h.b16 %v482
        %v740 = vunpack.c.l.b16 %v483
        %v741 = vunpack.c.h.b16 %v483
        %v742 = vunpack.c.l.b16 %v484
        %v743 = vunpack.c.h.b16 %v484
        %v744 = vunpack.c.l.b16 %v485
        %v745 = vunpack.c.h.b16 %v485
        %v746 = vunpack.c.l.b16 %v486
        %v747 = vunpack.c.h.b16 %v486
        %v748 = vunpack.c.l.b16 %v487
        %v749 = vunpack.c.h.b16 %v487
        %v750 = vunpack.c.l.b16 %v488
        %v751 = vunpack.c.h.b16 %v488
        %v752 = vunpack.c.l.b16 %v489
        %v753 = vunpack.c.h.b16 %v489
        %v754 = vunpack.c.l.b16 %v490
        %v755 = vunpack.c.h.b16 %v490
        %v756 = vunpack.c.l.b16 %v491
        %v757 = vunpack.c.h.b16 %v491
        %v758 = vunpack.c.l.b16 %v492
        %v759 = vunpack.c.h.b16 %v492
        %v760 = vunpack.c.l.b16 %v493
        %v761 = vunpack.c.h.b16 %v493
        %v762 = vunpack.c.l.b16 %v494
        %v763 = vunpack.c.h.b16 %v494
        %v764 = vunpack.c.l.b16 %v495
        %v765 = vunpack.c.h.b16 %v495
        %v766 = vunpack.c.l.b16 %v496
        %v767 = vunpack.c.h.b16 %v496
        %v768 = vunpack.c.l.b16 %v497
        %v769 = vunpack.c.h.b16 %v497
        %v770 = vunpack.c.l.b16 %v498
        %v771 = vunpack.c.h.b16 %v498
        %v772 = vunpack.c.l.b16 %v499
        %v773 = vunpack.c.h.b16 %v499
        %v774 = vunpack.c.l.b16 %v500
        %v775 = vunpack.c.h.b16 %v500
        %v776 = vunpack.c.l.b16 %v501
        %v777 = vunpack.c.h.b16 %v501
        %v778 = vunpack.c.l.b16 %v502
        %v779 = vunpack.c.h.b16 %v502
        %v780 = vunpack.c.l.b16 %v503
        %v781 = vunpack.c.h.b16 %v503
        %v782 = vunpack.c.l.b16 %v504
        %v783 = vunpack.c.h.b16 %v504
        %v784 = vunpack.c.l.b16 %v505
        %v785 = vunpack.c.h.b16 %v505
        %v786 = vunpack.c.l.b16 %v506
        %v787 = vunpack.c.h.b16 %v506
        %v788 = vunpack.c.l.b16 %v507
        %v789 = vunpack.c.h.b16 %v507
        %v790 = vunpack.c.l.b16 %v508
        %v791 = vunpack.c.h.b16 %v508
        %v792 = vunpack.c.l.b16 %v509
        %v793 = vunpack.c.h.b16 %v509
        %v794 = vunpack.c.l.b16 %v510
        %v795 = vunpack.c.h.b16 %v510
        %v796 = vunpack.c.l.b16 %v511
        %v797 = vunpack.c.h.b16 %v511
        %v798 = vunpack.c.l.b16 %v512
        %v799 = vunpack.c.h.b16 %v512
        %v800 = vunpack.c.l.b16 %v513
        %v801 = vunpack.c.h.b16 %v513
        %v802 = vunpack.c.l.b16 %v514
        %v803 = vunpack.c.h.b16 %v514
        %v804 = vunpack.c.l.b16 %v515
        %v805 = vunpack.c.h.b16 %v515
        %v806 = vunpack.c.l.b16 %v516
        %v807 = vunpack.c.h.b16 %v516
        %v808 = vunpack.c.l.b16 %v517
        %v809 = vunpack.c.h.b16 %v517
        %v810 = vunpack.c.l.b16 %v518
        %v811 = vunpack.c.h.b16 %v518
        %v812 = vunpack.c.l.b16 %v519
        %v813 = vunpack.c.h.b16 %v519
        %v814 = vunpack.c.l.b16 %v520
        %v815 = vunpack.c.h.b16 %v520
        %v816 = vunpack.c.l.b16 %v521
        %v817 = vunpack.c.h.b16 %v521
        %v818 = vunpack.c.l.b16 %v522
        %v819 = vunpack.c.h.b16 %v522
        %v820 = vunpack.c.l.b16 %v523
        %v821 = vunpack.c.h.b16 %v523
        %v822 = vunpack.c.l.b16 %v524
        %v823 = vunpack.c.h.b16 %v524
        %v824 = vunpack.c.l.b16 %v525
        %v825 = vunpack.c.h.b16 %v525
        %v826 = vunpack.c.l.b16 %v526
        %v827 = vunpack.c.h.b16 %v526
        %v828 = vunpack.c.l.b16 %v527
        %v829 = vunpack.c.h.b16 %v527
        %v830 = vunpack.c.l.b16 %v528
        %v831 = vunpack.c.h.b16 %v528
        %v832 = vunpack.c.l.b16 %v529
        %v833 = vunpack.c.h.b16 %v529
        %v834 = vunpack.c.l.b16 %v530
        %v835 = vunpack.c.h.b16 %v530
        %v836 = vunpack.c.l.b16 %v531
        %v837 = vunpack.c.h.b16 %v531
        %v838 = vunpack.c.l.b16 %v532
        %v839 = vunpack.c.h.b16 %v532
        %v840 = vunpack.c.l.b16 %v533
        %v841 = vunpack.c.h.b16 %v533
        %v842 = vunpack.c.l.b16 %v534
        %v843 = vunpack.c.h.b16 %v534
        %v844 = vunpack.c.l.b16 %v535
        %v845 = vunpack.c.h.b16 %v535
        %v846 = vunpack.c.l.b16 %v536
        %v847 = vunpack.c.h.b16 %v536
        %v848 = vunpack.c.l.b16 %v537
        %v849 = vunpack.c.h.b16 %v537
        %v850 = vunpack.c.l.b16 %v538
        %v851 = vunpack.c.h.b16 %v538
        %v852 = vunpack.c.l.b16 %v539
        %v853 = vunpack.c.h.b16 %v539
        %v854 = vunpack.c.l.b16 %v540
        %v855 = vunpack.c.h.b16 %v540
        %v856 = vunpack.c.l.b16 %v541
        %v857 = vunpack.c.h.b16 %v541
        %v858 = vunpack.c.l.b16 %v542
        %v859 = vunpack.c.h.b16 %v542
        %v860 = vunpack.c.l.b16 %v543
        %v861 = vunpack.c.h.b16 %v543
        %v862 = vunpack.c.l.b16 %v544
        %v863 = vunpack.c.h.b16 %v544
        %v864 = vunpack.c.l.b16 %v545
        %v865 = vunpack.c.h.b16 %v545
        %v866 = vunpack.c.l.b16 %v546
        %v867 = vunpack.c.h.b16 %v546
        %v868 = vunpack.c.l.b16 %v547
        %v869 = vunpack.c.h.b16 %v547
        %v870 = vunpack.c.l.b16 %v548
        %v871 = vunpack.c.h.b16 %v548
        %v872 = vunpack.c.l.b16 %v549
        %v873 = vunpack.c.h.b16 %v549
        %v874 = vunpack.c.l.b16 %v550
        %v875 = vunpack.c.h.b16 %v550
        %v876 = vunpack.c.l.b16 %v551
        %v877 = vunpack.c.h.b16 %v551
        %v878 = vunpack.c.l.b16 %v552
        %v879 = vunpack.c.h.b16 %v552
        %v880 = vunpack.c.l.b16 %v553
        %v881 = vunpack.c.h.b16 %v553
        %v882 = vunpack.c.l.b16 %v554
        %v883 = vunpack.c.h.b16 %v554
        %v884 = vunpack.c.l.b16 %v555
        %v885 = vunpack.c.h.b16 %v555
        %v886 = vunpack.c.l.b16 %v556
        %v887 = vunpack.c.h.b16 %v556
        %v888 = vunpack.c.l.b16 %v557
        %v889 = vunpack.c.h.b16 %v557
        %v890 = vunpack.c.l.b16 %v558
        %v891 = vunpack.c.h.b16 %v558
        %v892 = vunpack.c.l.b16 %v559
        %v893 = vunpack.c.h.b16 %v559
        %v894 = vunpack.c.l.b16 %v560
        %v895 = vunpack.c.h.b16 %v560
        %v896 = vunpack.c.l.b16 %v561
        %v897 = vunpack.c.h.b16 %v561
        %v898 = vunpack.c.l.b16 %v562
        %v899 = vunpack.c.h.b16 %v562
        %v900 = vunpack.c.l.b16 %v563
        %v901 = vunpack.c.h.b16 %v563
        %v902 = vunpack.c.l.b16 %v564
        %v903 = vunpack.c.h.b16 %v564
        %v904 = vunpack.c.l.b16 %v565
        %v905 = vunpack.c.h.b16 %v565
        %v906 = vunpack.c.l.b16 %v566
        %v907 = vunpack.c.h.b16 %v566
        %v908 = vunpack.c.l.b16 %v567
        %v909 = vunpack.c.h.b16 %v567
        %v910 = vunpack.c.l.b16 %v568
        %v911 = vunpack.c.h.b16 %v568
        %v912 = vunpack.c.l.b16 %v569
        %v913 = vunpack.c.h.b16 %v569
        %v914 = vunpack.c.l.b16 %v570
        %v915 = vunpack.c.h.b16 %v570
        %v916 = vunpack.c.l.b16 %v571
        %v917 = vunpack.c.h.b16 %v571
        %v918 = vunpack.c.l.b16 %v572
        %v919 = vunpack.c.h.b16 %v572
        %v920 = vunpack.c.l.b16 %v573
        %v921 = vunpack.c.h.b16 %v573
        %v922 = vunpack.c.l.b16 %v574
        %v923 = vunpack.c.h.b16 %v574
        %v924 = vunpack.c.l.b16 %v575
        %v925 = vunpack.c.h.b16 %v575
        %v926 = vunpack.c.l.b16 %v576
        %v927 = vunpack.c.h.b16 %v576
        %v928 = vunpack.c.l.b16 %v577
        %v929 = vunpack.c.h.b16 %v577
        %v930 = vunpack.c.l.b16 %v578
        %v931 = vunpack.c.h.b16 %v578
        %v932 = vunpack.c.l.b16 %v579
        %v933 = vunpack.c.h.b16 %v579
        %v934 = vunpack.c.l.b16 %v580
        %v935 = vunpack.c.h.b16 %v580
        %v936 = vunpack.c.l.b16 %v581
        %v937 = vunpack.c.h.b16 %v581
        %v938 = vunpack.c.l.b16 %v582
        %v939 = vunpack.c.h.b16 %v582
        %v940 = vunpack.c.l.b16 %v583
        %v941 = vunpack.c.h.b16 %v583
        %v942 = vunpack.c.l.b16 %v584
        %v943 = vunpack.c.h.b16 %v584
        %v944 = vunpack.c.l.b16 %v585
        %v945 = vunpack.c.h.b16 %v585
        %v946 = vunpack.c.l.b16 %v586
        %v947 = vunpack.c.h.b16 %v586
        %v948 = vunpack.c.l.b16 %v587
        %v949 = vunpack.c.h.b16 %v587
        %v950 = vunpack.c.l.b16 %v588
        %v951 = vunpack.c.h.b16 %v588
        %v952 = vunpack.c.l.b16 %v589
        %v953 = vunpack.c.h.b16 %v589
        %v954 = vunpack.c.l.b16 %v590
        %v955 = vunpack.c.h.b16 %v590
        %v956 = vunpack.c.l.b16 %v591
        %v957 = vunpack.c.h.b16 %v591
        %v958 = vunpack.c.l.b16 %v592
        %v959 = vunpack.c.h.b16 %v592
        %v960 = vunpack.c.l.b16 %v593
        %v961 = vunpack.c.h.b16 %v593
        %v962 = vunpack.c.l.b16 %v594
        %v963 = vunpack.c.h.b16 %v594
        %v964 = vunpack.c.l.b16 %v595
        %v965 = vunpack.c.h.b16 %v595
        %v966 = vunpack.c.l.b16 %v596
        %v967 = vunpack.c.h.b16 %v596
        %v968 = vunpack.c.l.b16 %v597
        %v969 = vunpack.c.h.b16 %v597
        %v970 = vunpack.c.l.b16 %v598
        %v971 = vunpack.c.h.b16 %v598
        %v972 = vunpack.c.l.b16 %v599
        %v973 = vunpack.c.h.b16 %v599
        %v974 = vunpack.c.l.b16 %v600
        %v975 = vunpack.c.h.b16 %v600
        %v976 = vunpack.c.l.b16 %v601
        %v977 = vunpack.c.h.b16 %v601
        %v978 = vunpack.c.l.b16 %v602
        %v979 = vunpack.c.h.b16 %v602
        %v980 = vunpack.c.l.b16 %v603
        %v981 = vunpack.c.h.b16 %v603
        %v982 = vunpack.c.l.b16 %v604
        %v983 = vunpack.c.h.b16 %v604
        %v984 = vunpack.c.l.b16 %v605
        %v985 = vunpack.c.h.b16 %v605
        %v986 = vunpack.c.l.b16 %v606
        %v987 = vunpack.c.h.b16 %v606
        %v988 = vunpack.c.l.b16 %v607
        %v989 = vunpack.c.h.b16 %v607
        %v990 = vunpack.c.l.b16 %v608
        %v991 = vunpack.c.h.b16 %v608
        %v992 = vunpack.c.l.b16 %v609
        %v993 = vunpack.c.h.b16 %v609
        %v994 = vpack.c.b16 %v742, %v738
        %v995 = vpack.c.b16 %v743, %v739
        %v996 = vpack.c.b16 %v744, %v740
        %v997 = vpack.c.b16 %v745, %v741
        %v998 = vpack.c.b16 %v750, %v746
        %v999 = vpack.c.b16 %v751, %v747
        %v1000 = vpack.c.b16 %v752, %v748
        %v1001 = vpack.c.b16 %v753, %v749
        %v1002 = vpack.c.b16 %v758, %v754
        %v1003 = vpack.c.b16 %v759, %v755
        %v1004 = vpack.c.b16 %v760, %v756
        %v1005 = vpack.c.b16 %v761, %v757
        %v1006 = vpack.c.b16 %v766, %v762
        %v1007 = vpack.c.b16 %v767, %v763
        %v1008 = vpack.c.b16 %v768, %v764
        %v1009 = vpack.c.b16 %v769, %v765
        %v1010 = vpack.c.b16 %v774, %v770
        %v1011 = vpack.c.b16 %v775, %v771
        %v1012 = vpack.c.b16 %v776, %v772
        %v1013 = vpack.c.b16 %v777, %v773
        %v1014 = vpack.c.b16 %v782, %v778
        %v1015 = vpack.c.b16 %v783, %v779
        %v1016 = vpack.c.b16 %v784, %v780
        %v1017 = vpack.c.b16 %v785, %v781
        %v1018 = vpack.c.b16 %v790, %v786
        %v1019 = vpack.c.b16 %v791, %v787
        %v1020 = vpack.c.b16 %v792, %v788
        %v1021 = vpack.c.b16 %v793, %v789
        %v1022 = vpack.c.b16 %v798, %v794
        %v1023 = vpack.c.b16 %v799, %v795
        %v1024 = vpack.c.b16 %v800, %v796
        %v1025 = vpack.c.b16 %v801, %v797
        %v1026 = vpack.c.b16 %v806, %v802
        %v1027 = vpack.c.b16 %v807, %v803
        %v1028 = vpack.c.b16 %v808, %v804
        %v1029 = vpack.c.b16 %v809, %v805
        %v1030 = vpack.c.b16 %v814, %v810
        %v1031 = vpack.c.b16 %v815, %v811
        %v1032 = vpack.c.b16 %v816, %v812
        %v1033 = vpack.c.b16 %v817, %v813
        %v1034 = vpack.c.b16 %v822, %v818
        %v1035 = vpack.c.b16 %v823, %v819
        %v1036 = vpack.c.b16 %v824, %v820
        %v1037 = vpack.c.b16 %v825, %v821
        %v1038 = vpack.c.b16 %v830, %v826
        %v1039 = vpack.c.b16 %v831, %v827
        %v1040 = vpack.c.b16 %v832, %v828
        %v1041 = vpack.c.b16 %v833, %v829
        %v1042 = vpack.c.b16 %v838, %v834
        %v1043 = vpack.c.b16 %v839, %v835
        %v1044 = vpack.c.b16 %v840, %v836
        %v1045 = vpack.c.b16 %v841, %v837
        %v1046 = vpack.c.b16 %v846, %v842
        %v1047 = vpack.c.b16 %v847, %v843
        %v1048 = vpack.c.b16 %v848, %v844
        %v1049 = vpack.c.b16 %v849, %v845
        %v1050 = vpack.c.b16 %v854, %v850
        %v1051 = vpack.c.b16 %v855, %v851
        %v1052 = vpack.c.b16 %v856, %v852
        %v1053 = vpack.c.b16 %v857, %v853
        %v1054 = vpack.c.b16 %v862, %v858
        %v1055 = vpack.c.b16 %v863, %v859
        %v1056 = vpack.c.b16 %v864, %v860
        %v1057 = vpack.c.b16 %v865, %v861
        %v1058 = vpack.c.b16 %v870, %v866
        %v1059 = vpack.c.b16 %v871, %v867
        %v1060 = vpack.c.b16 %v872, %v868
        %v1061 = vpack.c.b16 %v873, %v869
        %v1062 = vpack.c.b16 %v878, %v874
        %v1063 = vpack.c.b16 %v879, %v875
        %v1064 = vpack.c.b16 %v880, %v876
        %v1065 = vpack.c.b16 %v881, %v877
        %v1066 = vpack.c.b16 %v886, %v882
        %v1067 = vpack.c.b16 %v887, %v883
        %v1068 = vpack.c.b16 %v888, %v884
        %v1069 = vpack.c.b16 %v889, %v885
        %v1070 = vpack.c.b16 %v894, %v890
        %v1071 = vpack.c.b16 %v895, %v891
        %v1072 = vpack.c.b16 %v896, %v892
        %v1073 = vpack.c.b16 %v897, %v893
        %v1074 = vpack.c.b16 %v902, %v898
        %v1075 = vpack.c.b16 %v903, %v899
        %v1076 = vpack.c.b16 %v904, %v900
        %v1077 = vpack.c.b16 %v905, %v901
        %v1078 = vpack.c.b16 %v910, %v906
        %v1079 = vpack.c.b16 %v911, %v907
        %v1080 = vpack.c.b16 %v912, %v908
        %v1081 = vpack.c.b16 %v913, %v909
        %v1082 = vpack.c.b16 %v918, %v914
        %v1083 = vpack.c.b16 %v919, %v915
        %v1084 = vpack.c.b16 %v920, %v916
        %v1085 = vpack.c.b16 %v921, %v917
        %v1086 = vpack.c.b16 %v926, %v922
        %v1087 = vpack.c.b16 %v927, %v923
        %v1088 = vpack.c.b16 %v928, %v924
        %v1089 = vpack.c.b16 %v929, %v925
        %v1090 = vpack.c.b16 %v934, %v930
        %v1091 = vpack.c.b16 %v935, %v931
        %v1092 = vpack.c.b16 %v936, %v932
        %v1093 = vpack.c.b16 %v937, %v933
        %v1094 = vpack.c.b16 %v942, %v938
        %v1095 = vpack.c.b16 %v943, %v939
        %v1096 = vpack.c.b16 %v944, %v940
        %v1097 = vpack.c.b16 %v945, %v941
        %v1098 = vpack.c.b16 %v950, %v946
        %v1099 = vpack.c.b16 %v951, %v947
        %v1100 = vpack.c.b16 %v952, %v948
        %v1101 = vpack.c.b16 %v953, %v949
        %v1102 = vpack.c.b16 %v958, %v954
        %v1103 = vpack.c.b16 %v959, %v955
        %v1104 = vpack.c.b16 %v960, %v956
        %v1105 = vpack.c.b16 %v961, %v957
        %v1106 = vpack.c.b16 %v966, %v962
        %v1107 = vpack.c.b16 %v967, %v963
        %v1108 = vpack.c.b16 %v968, %v964
        %v1109 = vpack.c.b16 %v969, %v965
        %v1110 = vpack.c.b16 %v974, %v970
        %v1111 = vpack.c.b16 %v975, %v971
        %v1112 = vpack.c.b16 %v976, %v972
        %v1113 = vpack.c.b16 %v977, %v973
        %v1114 = vpack.c.b16 %v982, %v978
        %v1115 = vpack.c.b16 %v983, %v979
        %v1116 = vpack.c.b16 %v984, %v980
        %v1117 = vpack.c.b16 %v985, %v981
        %v1118 = vpack.c.b16 %v990, %v986
        %v1119 = vpack.c.b16 %v991, %v987
        %v1120 = vpack.c.b16 %v992, %v988
        %v1121 = vpack.c.b16 %v993, %v989
        %v1314 = vunpack.c.l.b16 %v354
        %v1315 = vunpack.c.l.b16 %v355
        %v1316 = vunpack.c.l.b16 %v356
        %v1317 = vunpack.c.l.b16 %v357
        %v1318 = vunpack.c.l.b16 %v358
        %v1319 = vunpack.c.l.b16 %v359
        %v1320 = vunpack.c.l.b16 %v360
        %v1321 = vunpack.c.l.b16 %v361
        %v1322 = vunpack.c.l.b16 %v362
        %v1323 = vunpack.c.l.b16 %v363
        %v1324 = vunpack.c.l.b16 %v364
        %v1325 = vunpack.c.l.b16 %v365
        %v1326 = vunpack.c.l.b16 %v366
        %v1327 = vunpack.c.l.b16 %v367
        %v1328 = vunpack.c.l.b16 %v368
        %v1329 = vunpack.c.l.b16 %v369
        %v1330 = vunpack.c.l.b16 %v370
        %v1331 = vunpack.c.l.b16 %v371
        %v1332 = vunpack.c.l.b16 %v372
        %v1333 = vunpack.c.l.b16 %v373
        %v1334 = vunpack.c.l.b16 %v374
        %v1335 = vunpack.c.l.b16 %v375
        %v1336 = vunpack.c.l.b16 %v376
        %v1337 = vunpack.c.l.b16 %v377
        %v1338 = vunpack.c.l.b16 %v378
        %v1339 = vunpack.c.l.b16 %v379
        %v1340 = vunpack.c.l.b16 %v380
        %v1341 = vunpack.c.l.b16 %v381
        %v1342 = vunpack.c.l.b16 %v382
        %v1343 = vunpack.c.l.b16 %v383
        %v1344 = vunpack.c.l.b16 %v384
        %v1345 = vunpack.c.l.b16 %v385
        %v1346 = vunpack.c.l.b16 %v386
        %v1347 = vunpack.c.l.b16 %v387
        %v1348 = vunpack.c.l.b16 %v388
        %v1349 = vunpack.c.l.b16 %v389
        %v1350 = vunpack.c.l.b16 %v390
        %v1351 = vunpack.c.l.b16 %v391
        %v1352 = vunpack.c.l.b16 %v392
        %v1353 = vunpack.c.l.b16 %v393
        %v1354 = vunpack.c.l.b16 %v394
        %v1355 = vunpack.c.l.b16 %v395
        %v1356 = vunpack.c.l.b16 %v396
        %v1357 = vunpack.c.l.b16 %v397
        %v1358 = vunpack.c.l.b16 %v398
        %v1359 = vunpack.c.l.b16 %v399
        %v1360 = vunpack.c.l.b16 %v400
        %v1361 = vunpack.c.l.b16 %v401
        %v1362 = vunpack.c.l.b16 %v402
        %v1363 = vunpack.c.l.b16 %v403
        %v1364 = vunpack.c.l.b16 %v404
        %v1365 = vunpack.c.l.b16 %v405
        %v1366 = vunpack.c.l.b16 %v406
        %v1367 = vunpack.c.l.b16 %v407
        %v1368 = vunpack.c.l.b16 %v408
        %v1369 = vunpack.c.l.b16 %v409
        %v1370 = vunpack.c.l.b16 %v410
        %v1371 = vunpack.c.l.b16 %v411
        %v1372 = vunpack.c.l.b16 %v412
        %v1373 = vunpack.c.l.b16 %v413
        %v1374 = vunpack.c.l.b16 %v414
        %v1375 = vunpack.c.l.b16 %v415
        %v1376 = vunpack.c.l.b16 %v416
        %v1377 = vunpack.c.l.b16 %v417
        %v1378 = vpack.c.b16 %v1315, %v1314
        %v1379 = vpack.c.b16 %v1317, %v1316
        %v1380 = vpack.c.b16 %v1319, %v1318
        %v1381 = vpack.c.b16 %v1321, %v1320
        %v1382 = vpack.c.b16 %v1323, %v1322
        %v1383 = vpack.c.b16 %v1325, %v1324
        %v1384 = vpack.c.b16 %v1327, %v1326
        %v1385 = vpack.c.b16 %v1329, %v1328
        %v1386 = vpack.c.b16 %v1331, %v1330
        %v1387 = vpack.c.b16 %v1333, %v1332
        %v1388 = vpack.c.b16 %v1335, %v1334
        %v1389 = vpack.c.b16 %v1337, %v1336
        %v1390 = vpack.c.b16 %v1339, %v1338
        %v1391 = vpack.c.b16 %v1341, %v1340
        %v1392 = vpack.c.b16 %v1343, %v1342
        %v1393 = vpack.c.b16 %v1345, %v1344
        %v1394 = vpack.c.b16 %v1347, %v1346
        %v1395 = vpack.c.b16 %v1349, %v1348
        %v1396 = vpack.c.b16 %v1351, %v1350
        %v1397 = vpack.c.b16 %v1353, %v1352
        %v1398 = vpack.c.b16 %v1355, %v1354
        %v1399 = vpack.c.b16 %v1357, %v1356
        %v1400 = vpack.c.b16 %v1359, %v1358
        %v1401 = vpack.c.b16 %v1361, %v1360
        %v1402 = vpack.c.b16 %v1363, %v1362
        %v1403 = vpack.c.b16 %v1365, %v1364
        %v1404 = vpack.c.b16 %v1367, %v1366
        %v1405 = vpack.c.b16 %v1369, %v1368
        %v1406 = vpack.c.b16 %v1371, %v1370
        %v1407 = vpack.c.b16 %v1373, %v1372
        %v1408 = vpack.c.b16 %v1375, %v1374
        %v1409 = vpack.c.b16 %v1377, %v1376
        %1442 = vmatprep.subr.bf16.mxu0 0
        %1443 = vmatpush1.bf16.msra.mxu0 %v1378
        %1444 = vmatprep.subr.bf16.mxu0 0
        %1445 = vmatpush1.bf16.msra.mxu0 %v1379
        %1446 = vmatprep.subr.bf16.mxu0 0
        %1447 = vmatpush1.bf16.msra.mxu0 %v1380
        %1448 = vmatprep.subr.bf16.mxu0 0
        %1449 = vmatpush1.bf16.msra.mxu0 %v1381
        %1450 = vmatprep.subr.bf16.mxu0 0
        %1451 = vmatpush1.bf16.msra.mxu0 %v1382
        %1452 = vmatprep.subr.bf16.mxu0 0
        %1453 = vmatpush1.bf16.msra.mxu0 %v1383
        %1454 = vmatprep.subr.bf16.mxu0 0
        %1455 = vmatpush1.bf16.msra.mxu0 %v1384
        %1456 = vmatprep.subr.bf16.mxu0 0
        %1457 = vmatpush1.bf16.msra.mxu0 %v1385
        %1458 = vmatprep.subr.bf16.mxu0 0
        %1459 = vmatpush1.bf16.msra.mxu0 %v1386
        %1460 = vmatprep.subr.bf16.mxu0 0
        %1461 = vmatpush1.bf16.msra.mxu0 %v1387
        %1462 = vmatprep.subr.bf16.mxu0 0
        %1463 = vmatpush1.bf16.msra.mxu0 %v1388
        %1464 = vmatprep.subr.bf16.mxu0 0
        %1465 = vmatpush1.bf16.msra.mxu0 %v1389
        %1466 = vmatprep.subr.bf16.mxu0 0
        %1467 = vmatpush1.bf16.msra.mxu0 %v1390
        %1468 = vmatprep.subr.bf16.mxu0 0
        %1469 = vmatpush1.bf16.msra.mxu0 %v1391
        %1470 = vmatprep.subr.bf16.mxu0 0
        %1471 = vmatpush1.bf16.msra.mxu0 %v1392
        %1472 = vmatprep.subr.bf16.mxu0 0
        %1473 = vmatpush1.bf16.msra.mxu0 %v1393
        %1474 = vmatprep.mubr.bf16.mxu0 %v995
        %1475 = vmatmul.mubr.bf16.gmra.mrb[0].mxu0 %v994
        %v1476 = vpop.f32.mrb[0].mxu0
        %v1477 = vadd.f32 0.0, %v1476
        %v1478 = vpop.f32.mrb[0].mxu0
        %v1479 = vpop.f32.mrb[0].mxu0
        %v1480 = vadd.f32 0.0, %v1479
        %v1481 = vpop.f32.mrb[0].mxu0
        %1482 = vmatprep.mubr.bf16.mxu0 %v999
        %1483 = vmatmul.mubr.bf16.gmra.mrb[0].mxu0 %v998
        %v1484 = vpop.f32.mrb[0].mxu0
        %v1485 = vadd.f32 0.0, %v1484
        %v1486 = vpop.f32.mrb[0].mxu0
        %v1487 = vpop.f32.mrb[0].mxu0
        %v1488 = vadd.f32 0.0, %v1487
        %v1489 = vpop.f32.mrb[0].mxu0
        %1490 = vmatprep.mubr.bf16.mxu0 %v1003
        %1491 = vmatmul.mubr.bf16.gmra.mrb[0].mxu0 %v1002
        %v1492 = vpop.f32.mrb[0].mxu0
        %v1493 = vadd.f32 0.0, %v1492
        %v1494 = vpop.f32.mrb[0].mxu0
        %v1495 = vpop.f32.mrb[0].mxu0
        %v1496 = vadd.f32 0.0, %v1495
        %v1497 = vpop.f32.mrb[0].mxu0
        %1498 = vmatprep.mubr.bf16.mxu0 %v1007
        %1499 = vmatmul.mubr.bf16.gmra.mrb[0].mxu0 %v1006
        %v1500 = vpop.f32.mrb[0].mxu0
        %v1501 = vadd.f32 0.0, %v1500
        %v1502 = vpop.f32.mrb[0].mxu0
        %v1503 = vpop.f32.mrb[0].mxu0
        %v1504 = vadd.f32 0.0, %v1503
        %v1505 = vpop.f32.mrb[0].mxu0
        %1506 = vmatprep.mubr.bf16.mxu0 %v1011
        %1507 = vmatmul.mubr.bf16.gmra.mrb[0].mxu0 %v1010
        %v1508 = vpop.f32.mrb[0].mxu0
        %v1509 = vadd.f32 0.0, %v1508
        %v1510 = vpop.f32.mrb[0].mxu0
        %v1511 = vpop.f32.mrb[0].mxu0
        %v1512 = vadd.f32 0.0, %v1511
        %v1513 = vpop.f32.mrb[0].mxu0
        %1514 = vmatprep.mubr.bf16.mxu0 %v1015
        %1515 = vmatmul.mubr.bf16.gmra.mrb[0].mxu0 %v1014
        %v1516 = vpop.f32.mrb[0].mxu0
        %v1517 = vadd.f32 0.0, %v1516
        %v1518 = vpop.f32.mrb[0].mxu0
        %v1519 = vpop.f32.mrb[0].mxu0
        %v1520 = vadd.f32 0.0, %v1519
        %v1521 = vpop.f32.mrb[0].mxu0
        %1522 = vmatprep.mubr.bf16.mxu0 %v1019
        %1523 = vmatmul.mubr.bf16.gmra.mrb[0].mxu0 %v1018
        %v1524 = vpop.f32.mrb[0].mxu0
        %v1525 = vadd.f32 0.0, %v1524
        %v1526 = vpop.f32.mrb[0].mxu0
        %v1527 = vpop.f32.mrb[0].mxu0
        %v1528 = vadd.f32 0.0, %v1527
        %v1529 = vpop.f32.mrb[0].mxu0
        %1530 = vmatprep.mubr.bf16.mxu0 %v1023
        %1531 = vmatmul.mubr.bf16.gmra.mrb[0].mxu0 %v1022
        %v1532 = vpop.f32.mrb[0].mxu0
        %v1533 = vadd.f32 0.0, %v1532
        %v1534 = vpop.f32.mrb[0].mxu0
        %v1535 = vpop.f32.mrb[0].mxu0
        %v1536 = vadd.f32 0.0, %v1535
        %v1537 = vpop.f32.mrb[0].mxu0
        %1538 = vmatprep.mubr.bf16.mxu0 %v1027
        %1539 = vmatmul.mubr.bf16.gmra.mrb[0].mxu0 %v1026
        %v1540 = vpop.f32.mrb[0].mxu0
        %v1541 = vadd.f32 0.0, %v1540
        %v1542 = vpop.f32.mrb[0].mxu0
        %v1543 = vpop.f32.mrb[0].mxu0
        %v1544 = vadd.f32 0.0, %v1543
        %v1545 = vpop.f32.mrb[0].mxu0
        %1546 = vmatprep.mubr.bf16.mxu0 %v1031
        %1547 = vmatmul.mubr.bf16.gmra.mrb[0].mxu0 %v1030
        %v1548 = vpop.f32.mrb[0].mxu0
        %v1549 = vadd.f32 0.0, %v1548
        %v1550 = vpop.f32.mrb[0].mxu0
        %v1551 = vpop.f32.mrb[0].mxu0
        %v1552 = vadd.f32 0.0, %v1551
        %v1553 = vpop.f32.mrb[0].mxu0
        %1554 = vmatprep.mubr.bf16.mxu0 %v1035
        %1555 = vmatmul.mubr.bf16.gmra.mrb[0].mxu0 %v1034
        %v1556 = vpop.f32.mrb[0].mxu0
        %v1557 = vadd.f32 0.0, %v1556
        %v1558 = vpop.f32.mrb[0].mxu0
        %v1559 = vpop.f32.mrb[0].mxu0
        %v1560 = vadd.f32 0.0, %v1559
        %v1561 = vpop.f32.mrb[0].mxu0
        %1562 = vmatprep.mubr.bf16.mxu0 %v1039
        %1563 = vmatmul.mubr.bf16.gmra.mrb[0].mxu0 %v1038
        %v1564 = vpop.f32.mrb[0].mxu0
        %v1565 = vadd.f32 0.0, %v1564
        %v1566 = vpop.f32.mrb[0].mxu0
        %v1567 = vpop.f32.mrb[0].mxu0
        %v1568 = vadd.f32 0.0, %v1567
        %v1569 = vpop.f32.mrb[0].mxu0
        %1570 = vmatprep.mubr.bf16.mxu0 %v1043
        %1571 = vmatmul.mubr.bf16.gmra.mrb[0].mxu0 %v1042
        %v1572 = vpop.f32.mrb[0].mxu0
        %v1573 = vadd.f32 0.0, %v1572
        %v1574 = vpop.f32.mrb[0].mxu0
        %v1575 = vpop.f32.mrb[0].mxu0
        %v1576 = vadd.f32 0.0, %v1575
        %v1577 = vpop.f32.mrb[0].mxu0
        %1578 = vmatprep.mubr.bf16.mxu0 %v1047
        %1579 = vmatmul.mubr.bf16.gmra.mrb[0].mxu0 %v1046
        %v1580 = vpop.f32.mrb[0].mxu0
        %v1581 = vadd.f32 0.0, %v1580
        %v1582 = vpop.f32.mrb[0].mxu0
        %v1583 = vpop.f32.mrb[0].mxu0
        %v1584 = vadd.f32 0.0, %v1583
        %v1585 = vpop.f32.mrb[0].mxu0
        %1586 = vmatprep.mubr.bf16.mxu0 %v1051
        %1587 = vmatmul.mubr.bf16.gmra.mrb[0].mxu0 %v1050
        %v1588 = vpop.f32.mrb[0].mxu0
        %v1589 = vadd.f32 0.0, %v1588
        %v1590 = vpop.f32.mrb[0].mxu0
        %v1591 = vpop.f32.mrb[0].mxu0
        %v1592 = vadd.f32 0.0, %v1591
        %v1593 = vpop.f32.mrb[0].mxu0
        %1594 = vmatprep.mubr.bf16.mxu0 %v1055
        %1595 = vmatmul.mubr.bf16.gmra.mrb[0].mxu0 %v1054
        %v1596 = vpop.f32.mrb[0].mxu0
        %v1597 = vadd.f32 0.0, %v1596
        %v1598 = vpop.f32.mrb[0].mxu0
        %v1599 = vpop.f32.mrb[0].mxu0
        %v1600 = vadd.f32 0.0, %v1599
        %v1601 = vpop.f32.mrb[0].mxu0
        %1602 = vmatprep.mubr.bf16.mxu0 %v1059
        %1603 = vmatmul.mubr.bf16.gmra.mrb[0].mxu0 %v1058
        %v1604 = vpop.f32.mrb[0].mxu0
        %v1605 = vadd.f32 0.0, %v1604
        %v1606 = vpop.f32.mrb[0].mxu0
        %v1607 = vpop.f32.mrb[0].mxu0
        %v1608 = vadd.f32 0.0, %v1607
        %v1609 = vpop.f32.mrb[0].mxu0
        %1610 = vmatprep.mubr.bf16.mxu0 %v1063
        %1611 = vmatmul.mubr.bf16.gmra.mrb[0].mxu0 %v1062
        %v1612 = vpop.f32.mrb[0].mxu0
        %v1613 = vadd.f32 0.0, %v1612
        %v1614 = vpop.f32.mrb[0].mxu0
        %v1615 = vpop.f32.mrb[0].mxu0
        %v1616 = vadd.f32 0.0, %v1615
        %v1617 = vpop.f32.mrb[0].mxu0
        %1618 = vmatprep.mubr.bf16.mxu0 %v1067
        %1619 = vmatmul.mubr.bf16.gmra.mrb[0].mxu0 %v1066
        %v1620 = vpop.f32.mrb[0].mxu0
        %v1621 = vadd.f32 0.0, %v1620
        %v1622 = vpop.f32.mrb[0].mxu0
        %v1623 = vpop.f32.mrb[0].mxu0
        %v1624 = vadd.f32 0.0, %v1623
        %v1625 = vpop.f32.mrb[0].mxu0
        %1626 = vmatprep.mubr.bf16.mxu0 %v1071
        %1627 = vmatmul.mubr.bf16.gmra.mrb[0].mxu0 %v1070
        %v1628 = vpop.f32.mrb[0].mxu0
        %v1629 = vadd.f32 0.0, %v1628
        %v1630 = vpop.f32.mrb[0].mxu0
        %v1631 = vpop.f32.mrb[0].mxu0
        %v1632 = vadd.f32 0.0, %v1631
        %v1633 = vpop.f32.mrb[0].mxu0
        %1634 = vmatprep.mubr.bf16.mxu0 %v1075
        %1635 = vmatmul.mubr.bf16.gmra.mrb[0].mxu0 %v1074
        %v1636 = vpop.f32.mrb[0].mxu0
        %v1637 = vadd.f32 0.0, %v1636
        %v1638 = vpop.f32.mrb[0].mxu0
        %v1639 = vpop.f32.mrb[0].mxu0
        %v1640 = vadd.f32 0.0, %v1639
        %v1641 = vpop.f32.mrb[0].mxu0
        %1642 = vmatprep.mubr.bf16.mxu0 %v1079
        %1643 = vmatmul.mubr.bf16.gmra.mrb[0].mxu0 %v1078
        %v1644 = vpop.f32.mrb[0].mxu0
        %v1645 = vadd.f32 0.0, %v1644
        %v1646 = vpop.f32.mrb[0].mxu0
        %v1647 = vpop.f32.mrb[0].mxu0
        %v1648 = vadd.f32 0.0, %v1647
        %v1649 = vpop.f32.mrb[0].mxu0
        %1650 = vmatprep.mubr.bf16.mxu0 %v1083
        %1651 = vmatmul.mubr.bf16.gmra.mrb[0].mxu0 %v1082
        %v1652 = vpop.f32.mrb[0].mxu0
        %v1653 = vadd.f32 0.0, %v1652
        %v1654 = vpop.f32.mrb[0].mxu0
        %v1655 = vpop.f32.mrb[0].mxu0
        %v1656 = vadd.f32 0.0, %v1655
        %v1657 = vpop.f32.mrb[0].mxu0
        %1658 = vmatprep.mubr.bf16.mxu0 %v1087
        %1659 = vmatmul.mubr.bf16.gmra.mrb[0].mxu0 %v1086
        %v1660 = vpop.f32.mrb[0].mxu0
        %v1661 = vadd.f32 0.0, %v1660
        %v1662 = vpop.f32.mrb[0].mxu0
        %v1663 = vpop.f32.mrb[0].mxu0
        %v1664 = vadd.f32 0.0, %v1663
        %v1665 = vpop.f32.mrb[0].mxu0
        %1666 = vmatprep.mubr.bf16.mxu0 %v1091
        %1667 = vmatmul.mubr.bf16.gmra.mrb[0].mxu0 %v1090
        %v1668 = vpop.f32.mrb[0].mxu0
        %v1669 = vadd.f32 0.0, %v1668
        %v1670 = vpop.f32.mrb[0].mxu0
        %v1671 = vpop.f32.mrb[0].mxu0
        %v1672 = vadd.f32 0.0, %v1671
        %v1673 = vpop.f32.mrb[0].mxu0
        %1674 = vmatprep.mubr.bf16.mxu0 %v1095
        %1675 = vmatmul.mubr.bf16.gmra.mrb[0].mxu0 %v1094
        %v1676 = vpop.f32.mrb[0].mxu0
        %v1677 = vadd.f32 0.0, %v1676
        %v1678 = vpop.f32.mrb[0].mxu0
        %v1679 = vpop.f32.mrb[0].mxu0
        %v1680 = vadd.f32 0.0, %v1679
        %v1681 = vpop.f32.mrb[0].mxu0
        %1682 = vmatprep.mubr.bf16.mxu0 %v1099
        %1683 = vmatmul.mubr.bf16.gmra.mrb[0].mxu0 %v1098
        %v1684 = vpop.f32.mrb[0].mxu0
        %v1685 = vadd.f32 0.0, %v1684
        %v1686 = vpop.f32.mrb[0].mxu0
        %v1687 = vpop.f32.mrb[0].mxu0
        %v1688 = vadd.f32 0.0, %v1687
        %v1689 = vpop.f32.mrb[0].mxu0
        %1690 = vmatprep.mubr.bf16.mxu0 %v1103
        %1691 = vmatmul.mubr.bf16.gmra.mrb[0].mxu0 %v1102
        %v1692 = vpop.f32.mrb[0].mxu0
        %v1693 = vadd.f32 0.0, %v1692
        %v1694 = vpop.f32.mrb[0].mxu0
        %v1695 = vpop.f32.mrb[0].mxu0
        %v1696 = vadd.f32 0.0, %v1695
        %v1697 = vpop.f32.mrb[0].mxu0
        %1698 = vmatprep.mubr.bf16.mxu0 %v1107
        %1699 = vmatmul.mubr.bf16.gmra.mrb[0].mxu0 %v1106
        %v1700 = vpop.f32.mrb[0].mxu0
        %v1701 = vadd.f32 0.0, %v1700
        %v1702 = vpop.f32.mrb[0].mxu0
        %v1703 = vpop.f32.mrb[0].mxu0
        %v1704 = vadd.f32 0.0, %v1703
        %v1705 = vpop.f32.mrb[0].mxu0
        %1706 = vmatprep.mubr.bf16.mxu0 %v1111
        %1707 = vmatmul.mubr.bf16.gmra.mrb[0].mxu0 %v1110
        %v1708 = vpop.f32.mrb[0].mxu0
        %v1709 = vadd.f32 0.0, %v1708
        %v1710 = vpop.f32.mrb[0].mxu0
        %v1711 = vpop.f32.mrb[0].mxu0
        %v1712 = vadd.f32 0.0, %v1711
        %v1713 = vpop.f32.mrb[0].mxu0
        %1714 = vmatprep.mubr.bf16.mxu0 %v1115
        %1715 = vmatmul.mubr.bf16.gmra.mrb[0].mxu0 %v1114
        %v1716 = vpop.f32.mrb[0].mxu0
        %v1717 = vadd.f32 0.0, %v1716
        %v1718 = vpop.f32.mrb[0].mxu0
        %v1719 = vpop.f32.mrb[0].mxu0
        %v1720 = vadd.f32 0.0, %v1719
        %v1721 = vpop.f32.mrb[0].mxu0
        %1722 = vmatprep.mubr.bf16.mxu0 %v1119
        %1723 = vmatmul.mubr.bf16.gmra.mrb[0].mxu0 %v1118
        %v1724 = vpop.f32.mrb[0].mxu0
        %v1725 = vadd.f32 0.0, %v1724
        %v1726 = vpop.f32.mrb[0].mxu0
        %v1727 = vpop.f32.mrb[0].mxu0
        %v1728 = vadd.f32 0.0, %v1727
        %v1729 = vpop.f32.mrb[0].mxu0
        %1730 = vdwg.mxu0
        %1731 = vmatprep.subr.bf16.mxu0 0
        %1732 = vmatpush1.bf16.msra.mxu0 %v1394
        %1733 = vmatprep.subr.bf16.mxu0 0
        %1734 = vmatpush1.bf16.msra.mxu0 %v1395
        %1735 = vmatprep.subr.bf16.mxu0 0
        %1736 = vmatpush1.bf16.msra.mxu0 %v1396
        %1737 = vmatprep.subr.bf16.mxu0 0
        %1738 = vmatpush1.bf16.msra.mxu0 %v1397
        %1739 = vmatprep.subr.bf16.mxu0 0
        %1740 = vmatpush1.bf16.msra.mxu0 %v1398
        %1741 = vmatprep.subr.bf16.mxu0 0
        %1742 = vmatpush1.bf16.msra.mxu0 %v1399
        %1743 = vmatprep.subr.bf16.mxu0 0
        %1744 = vmatpush1.bf16.msra.mxu0 %v1400
        %1745 = vmatprep.subr.bf16.mxu0 0
        %1746 = vmatpush1.bf16.msra.mxu0 %v1401
        %1747 = vmatprep.subr.bf16.mxu0 0
        %1748 = vmatpush1.bf16.msra.mxu0 %v1402
        %1749 = vmatprep.subr.bf16.mxu0 0
        %1750 = vmatpush1.bf16.msra.mxu0 %v1403
        %1751 = vmatprep.subr.bf16.mxu0 0
        %1752 = vmatpush1.bf16.msra.mxu0 %v1404
        %1753 = vmatprep.subr.bf16.mxu0 0
        %1754 = vmatpush1.bf16.msra.mxu0 %v1405
        %1755 = vmatprep.subr.bf16.mxu0 0
        %1756 = vmatpush1.bf16.msra.mxu0 %v1406
        %1757 = vmatprep.subr.bf16.mxu0 0
        %1758 = vmatpush1.bf16.msra.mxu0 %v1407
        %1759 = vmatprep.subr.bf16.mxu0 0
        %1760 = vmatpush1.bf16.msra.mxu0 %v1408
        %1761 = vmatprep.subr.bf16.mxu0 0
        %1762 = vmatpush1.bf16.msra.mxu0 %v1409
        %1763 = vmatprep.mubr.bf16.mxu0 %v997
        %1764 = vmatmul.mubr.bf16.gmra.mrb[0].mxu0 %v996
        %v1765 = vpop.f32.mrb[0].mxu0
        %v1766 = vadd.f32 %v1477, %v1765
        %v1767 = vpop.f32.mrb[0].mxu0
        %v1768 = vpop.f32.mrb[0].mxu0
        %v1769 = vadd.f32 %v1480, %v1768
        %v1770 = vpop.f32.mrb[0].mxu0
        %1771 = vmatprep.mubr.bf16.mxu0 %v1001
        %1772 = vmatmul.mubr.bf16.gmra.mrb[0].mxu0 %v1000
        %v1773 = vpop.f32.mrb[0].mxu0
        %v1774 = vadd.f32 %v1485, %v1773
        %v1775 = vpop.f32.mrb[0].mxu0
        %v1776 = vpop.f32.mrb[0].mxu0
        %v1777 = vadd.f32 %v1488, %v1776
        %v1778 = vpop.f32.mrb[0].mxu0
        %1779 = vmatprep.mubr.bf16.mxu0 %v1005
        %1780 = vmatmul.mubr.bf16.gmra.mrb[0].mxu0 %v1004
        %v1781 = vpop.f32.mrb[0].mxu0
        %v1782 = vadd.f32 %v1493, %v1781
        %v1783 = vpop.f32.mrb[0].mxu0
        %v1784 = vpop.f32.mrb[0].mxu0
        %v1785 = vadd.f32 %v1496, %v1784
        %v1786 = vpop.f32.mrb[0].mxu0
        %1787 = vmatprep.mubr.bf16.mxu0 %v1009
        %1788 = vmatmul.mubr.bf16.gmra.mrb[0].mxu0 %v1008
        %v1789 = vpop.f32.mrb[0].mxu0
        %v1790 = vadd.f32 %v1501, %v1789
        %v1791 = vpop.f32.mrb[0].mxu0
        %v1792 = vpop.f32.mrb[0].mxu0
        %v1793 = vadd.f32 %v1504, %v1792
        %v1794 = vpop.f32.mrb[0].mxu0
        %1795 = vmatprep.mubr.bf16.mxu0 %v1013
        %1796 = vmatmul.mubr.bf16.gmra.mrb[0].mxu0 %v1012
        %v1797 = vpop.f32.mrb[0].mxu0
        %v1798 = vadd.f32 %v1509, %v1797
        %v1799 = vpop.f32.mrb[0].mxu0
        %v1800 = vpop.f32.mrb[0].mxu0
        %v1801 = vadd.f32 %v1512, %v1800
        %v1802 = vpop.f32.mrb[0].mxu0
        %1803 = vmatprep.mubr.bf16.mxu0 %v1017
        %1804 = vmatmul.mubr.bf16.gmra.mrb[0].mxu0 %v1016
        %v1805 = vpop.f32.mrb[0].mxu0
        %v1806 = vadd.f32 %v1517, %v1805
        %v1807 = vpop.f32.mrb[0].mxu0
        %v1808 = vpop.f32.mrb[0].mxu0
        %v1809 = vadd.f32 %v1520, %v1808
        %v1810 = vpop.f32.mrb[0].mxu0
        %1811 = vmatprep.mubr.bf16.mxu0 %v1021
        %1812 = vmatmul.mubr.bf16.gmra.mrb[0].mxu0 %v1020
        %v1813 = vpop.f32.mrb[0].mxu0
        %v1814 = vadd.f32 %v1525, %v1813
        %v1815 = vpop.f32.mrb[0].mxu0
        %v1816 = vpop.f32.mrb[0].mxu0
        %v1817 = vadd.f32 %v1528, %v1816
        %v1818 = vpop.f32.mrb[0].mxu0
        %1819 = vmatprep.mubr.bf16.mxu0 %v1025
        %1820 = vmatmul.mubr.bf16.gmra.mrb[0].mxu0 %v1024
        %v1821 = vpop.f32.mrb[0].mxu0
        %v1822 = vadd.f32 %v1533, %v1821
        %v1823 = vpop.f32.mrb[0].mxu0
        %v1824 = vpop.f32.mrb[0].mxu0
        %v1825 = vadd.f32 %v1536, %v1824
        %v1826 = vpop.f32.mrb[0].mxu0
        %1827 = vmatprep.mubr.bf16.mxu0 %v1029
        %1828 = vmatmul.mubr.bf16.gmra.mrb[0].mxu0 %v1028
        %v1829 = vpop.f32.mrb[0].mxu0
        %v1830 = vadd.f32 %v1541, %v1829
        %v1831 = vpop.f32.mrb[0].mxu0
        %v1832 = vpop.f32.mrb[0].mxu0
        %v1833 = vadd.f32 %v1544, %v1832
        %v1834 = vpop.f32.mrb[0].mxu0
        %1835 = vmatprep.mubr.bf16.mxu0 %v1033
        %1836 = vmatmul.mubr.bf16.gmra.mrb[0].mxu0 %v1032
        %v1837 = vpop.f32.mrb[0].mxu0
        %v1838 = vadd.f32 %v1549, %v1837
        %v1839 = vpop.f32.mrb[0].mxu0
        %v1840 = vpop.f32.mrb[0].mxu0
        %v1841 = vadd.f32 %v1552, %v1840
        %v1842 = vpop.f32.mrb[0].mxu0
        %1843 = vmatprep.mubr.bf16.mxu0 %v1037
        %1844 = vmatmul.mubr.bf16.gmra.mrb[0].mxu0 %v1036
        %v1845 = vpop.f32.mrb[0].mxu0
        %v1846 = vadd.f32 %v1557, %v1845
        %v1847 = vpop.f32.mrb[0].mxu0
        %v1848 = vpop.f32.mrb[0].mxu0
        %v1849 = vadd.f32 %v1560, %v1848
        %v1850 = vpop.f32.mrb[0].mxu0
        %1851 = vmatprep.mubr.bf16.mxu0 %v1041
        %1852 = vmatmul.mubr.bf16.gmra.mrb[0].mxu0 %v1040
        %v1853 = vpop.f32.mrb[0].mxu0
        %v1854 = vadd.f32 %v1565, %v1853
        %v1855 = vpop.f32.mrb[0].mxu0
        %v1856 = vpop.f32.mrb[0].mxu0
        %v1857 = vadd.f32 %v1568, %v1856
        %v1858 = vpop.f32.mrb[0].mxu0
        %1859 = vmatprep.mubr.bf16.mxu0 %v1045
        %1860 = vmatmul.mubr.bf16.gmra.mrb[0].mxu0 %v1044
        %v1861 = vpop.f32.mrb[0].mxu0
        %v1862 = vadd.f32 %v1573, %v1861
        %v1863 = vpop.f32.mrb[0].mxu0
        %v1864 = vpop.f32.mrb[0].mxu0
        %v1865 = vadd.f32 %v1576, %v1864
        %v1866 = vpop.f32.mrb[0].mxu0
        %1867 = vmatprep.mubr.bf16.mxu0 %v1049
        %1868 = vmatmul.mubr.bf16.gmra.mrb[0].mxu0 %v1048
        %v1869 = vpop.f32.mrb[0].mxu0
        %v1870 = vadd.f32 %v1581, %v1869
        %v1871 = vpop.f32.mrb[0].mxu0
        %v1872 = vpop.f32.mrb[0].mxu0
        %v1873 = vadd.f32 %v1584, %v1872
        %v1874 = vpop.f32.mrb[0].mxu0
        %1875 = vmatprep.mubr.bf16.mxu0 %v1053
        %1876 = vmatmul.mubr.bf16.gmra.mrb[0].mxu0 %v1052
        %v1877 = vpop.f32.mrb[0].mxu0
        %v1878 = vadd.f32 %v1589, %v1877
        %v1879 = vpop.f32.mrb[0].mxu0
        %v1880 = vpop.f32.mrb[0].mxu0
        %v1881 = vadd.f32 %v1592, %v1880
        %v1882 = vpop.f32.mrb[0].mxu0
        %1883 = vmatprep.mubr.bf16.mxu0 %v1057
        %1884 = vmatmul.mubr.bf16.gmra.mrb[0].mxu0 %v1056
        %v1885 = vpop.f32.mrb[0].mxu0
        %v1886 = vadd.f32 %v1597, %v1885
        %v1887 = vpop.f32.mrb[0].mxu0
        %v1888 = vpop.f32.mrb[0].mxu0
        %v1889 = vadd.f32 %v1600, %v1888
        %v1890 = vpop.f32.mrb[0].mxu0
        %1891 = vmatprep.mubr.bf16.mxu0 %v1061
        %1892 = vmatmul.mubr.bf16.gmra.mrb[0].mxu0 %v1060
        %v1893 = vpop.f32.mrb[0].mxu0
        %v1894 = vadd.f32 %v1605, %v1893
        %v1895 = vpop.f32.mrb[0].mxu0
        %v1896 = vpop.f32.mrb[0].mxu0
        %v1897 = vadd.f32 %v1608, %v1896
        %v1898 = vpop.f32.mrb[0].mxu0
        %1899 = vmatprep.mubr.bf16.mxu0 %v1065
        %1900 = vmatmul.mubr.bf16.gmra.mrb[0].mxu0 %v1064
        %v1901 = vpop.f32.mrb[0].mxu0
        %v1902 = vadd.f32 %v1613, %v1901
        %v1903 = vpop.f32.mrb[0].mxu0
        %v1904 = vpop.f32.mrb[0].mxu0
        %v1905 = vadd.f32 %v1616, %v1904
        %v1906 = vpop.f32.mrb[0].mxu0
        %1907 = vmatprep.mubr.bf16.mxu0 %v1069
        %1908 = vmatmul.mubr.bf16.gmra.mrb[0].mxu0 %v1068
        %v1909 = vpop.f32.mrb[0].mxu0
        %v1910 = vadd.f32 %v1621, %v1909
        %v1911 = vpop.f32.mrb[0].mxu0
        %v1912 = vpop.f32.mrb[0].mxu0
        %v1913 = vadd.f32 %v1624, %v1912
        %v1914 = vpop.f32.mrb[0].mxu0
        %1915 = vmatprep.mubr.bf16.mxu0 %v1073
        %1916 = vmatmul.mubr.bf16.gmra.mrb[0].mxu0 %v1072
        %v1917 = vpop.f32.mrb[0].mxu0
        %v1918 = vadd.f32 %v1629, %v1917
        %v1919 = vpop.f32.mrb[0].mxu0
        %v1920 = vpop.f32.mrb[0].mxu0
        %v1921 = vadd.f32 %v1632, %v1920
        %v1922 = vpop.f32.mrb[0].mxu0
        %1923 = vmatprep.mubr.bf16.mxu0 %v1077
        %1924 = vmatmul.mubr.bf16.gmra.mrb[0].mxu0 %v1076
        %v1925 = vpop.f32.mrb[0].mxu0
        %v1926 = vadd.f32 %v1637, %v1925
        %v1927 = vpop.f32.mrb[0].mxu0
        %v1928 = vpop.f32.mrb[0].mxu0
        %v1929 = vadd.f32 %v1640, %v1928
        %v1930 = vpop.f32.mrb[0].mxu0
        %1931 = vmatprep.mubr.bf16.mxu0 %v1081
        %1932 = vmatmul.mubr.bf16.gmra.mrb[0].mxu0 %v1080
        %v1933 = vpop.f32.mrb[0].mxu0
        %v1934 = vadd.f32 %v1645, %v1933
        %v1935 = vpop.f32.mrb[0].mxu0
        %v1936 = vpop.f32.mrb[0].mxu0
        %v1937 = vadd.f32 %v1648, %v1936
        %v1938 = vpop.f32.mrb[0].mxu0
        %1939 = vmatprep.mubr.bf16.mxu0 %v1085
        %1940 = vmatmul.mubr.bf16.gmra.mrb[0].mxu0 %v1084
        %v1941 = vpop.f32.mrb[0].mxu0
        %v1942 = vadd.f32 %v1653, %v1941
        %v1943 = vpop.f32.mrb[0].mxu0
        %v1944 = vpop.f32.mrb[0].mxu0
        %v1945 = vadd.f32 %v1656, %v1944
        %v1946 = vpop.f32.mrb[0].mxu0
        %1947 = vmatprep.mubr.bf16.mxu0 %v1089
        %1948 = vmatmul.mubr.bf16.gmra.mrb[0].mxu0 %v1088
        %v1949 = vpop.f32.mrb[0].mxu0
        %v1950 = vadd.f32 %v1661, %v1949
        %v1951 = vpop.f32.mrb[0].mxu0
        %v1952 = vpop.f32.mrb[0].mxu0
        %v1953 = vadd.f32 %v1664, %v1952
        %v1954 = vpop.f32.mrb[0].mxu0
        %1955 = vmatprep.mubr.bf16.mxu0 %v1093
        %1956 = vmatmul.mubr.bf16.gmra.mrb[0].mxu0 %v1092
        %v1957 = vpop.f32.mrb[0].mxu0
        %v1958 = vadd.f32 %v1669, %v1957
        %v1959 = vpop.f32.mrb[0].mxu0
        %v1960 = vpop.f32.mrb[0].mxu0
        %v1961 = vadd.f32 %v1672, %v1960
        %v1962 = vpop.f32.mrb[0].mxu0
        %1963 = vmatprep.mubr.bf16.mxu0 %v1097
        %1964 = vmatmul.mubr.bf16.gmra.mrb[0].mxu0 %v1096
        %v1965 = vpop.f32.mrb[0].mxu0
        %v1966 = vadd.f32 %v1677, %v1965
        %v1967 = vpop.f32.mrb[0].mxu0
        %v1968 = vpop.f32.mrb[0].mxu0
        %v1969 = vadd.f32 %v1680, %v1968
        %v1970 = vpop.f32.mrb[0].mxu0
        %1971 = vmatprep.mubr.bf16.mxu0 %v1101
        %1972 = vmatmul.mubr.bf16.gmra.mrb[0].mxu0 %v1100
        %v1973 = vpop.f32.mrb[0].mxu0
        %v1974 = vadd.f32 %v1685, %v1973
        %v1975 = vpop.f32.mrb[0].mxu0
        %v1976 = vpop.f32.mrb[0].mxu0
        %v1977 = vadd.f32 %v1688, %v1976
        %v1978 = vpop.f32.mrb[0].mxu0
        %1979 = vmatprep.mubr.bf16.mxu0 %v1105
        %1980 = vmatmul.mubr.bf16.gmra.mrb[0].mxu0 %v1104
        %v1981 = vpop.f32.mrb[0].mxu0
        %v1982 = vadd.f32 %v1693, %v1981
        %v1983 = vpop.f32.mrb[0].mxu0
        %v1984 = vpop.f32.mrb[0].mxu0
        %v1985 = vadd.f32 %v1696, %v1984
        %v1986 = vpop.f32.mrb[0].mxu0
        %1987 = vmatprep.mubr.bf16.mxu0 %v1109
        %1988 = vmatmul.mubr.bf16.gmra.mrb[0].mxu0 %v1108
        %v1989 = vpop.f32.mrb[0].mxu0
        %v1990 = vadd.f32 %v1701, %v1989
        %v1991 = vpop.f32.mrb[0].mxu0
        %v1992 = vpop.f32.mrb[0].mxu0
        %v1993 = vadd.f32 %v1704, %v1992
        %v1994 = vpop.f32.mrb[0].mxu0
        %1995 = vmatprep.mubr.bf16.mxu0 %v1113
        %1996 = vmatmul.mubr.bf16.gmra.mrb[0].mxu0 %v1112
        %v1997 = vpop.f32.mrb[0].mxu0
        %v1998 = vadd.f32 %v1709, %v1997
        %v1999 = vpop.f32.mrb[0].mxu0
        %v2000 = vpop.f32.mrb[0].mxu0
        %v2001 = vadd.f32 %v1712, %v2000
        %v2002 = vpop.f32.mrb[0].mxu0
        %2003 = vmatprep.mubr.bf16.mxu0 %v1117
        %2004 = vmatmul.mubr.bf16.gmra.mrb[0].mxu0 %v1116
        %v2005 = vpop.f32.mrb[0].mxu0
        %v2006 = vadd.f32 %v1717, %v2005
        %v2007 = vpop.f32.mrb[0].mxu0
        %v2008 = vpop.f32.mrb[0].mxu0
        %v2009 = vadd.f32 %v1720, %v2008
        %v2010 = vpop.f32.mrb[0].mxu0
        %2011 = vmatprep.mubr.bf16.mxu0 %v1121
        %2012 = vmatmul.mubr.bf16.gmra.mrb[0].mxu0 %v1120
        %v2013 = vpop.f32.mrb[0].mxu0
        %v2014 = vadd.f32 %v1725, %v2013
        %v2015 = vpop.f32.mrb[0].mxu0
        %v2016 = vpop.f32.mrb[0].mxu0
        %v2017 = vadd.f32 %v1728, %v2016
        %v2018 = vpop.f32.mrb[0].mxu0
        %2019 = vdwg.mxu0
        %v2020 = vadd.f32 %v418, %v1766
        %v2021 = vadd.f32 %v419, %v1769
        %v2022 = vadd.f32 %v420, %v1774
        %v2023 = vadd.f32 %v421, %v1777
        %v2024 = vadd.f32 %v422, %v1782
        %v2025 = vadd.f32 %v423, %v1785
        %v2026 = vadd.f32 %v424, %v1790
        %v2027 = vadd.f32 %v425, %v1793
        %v2028 = vadd.f32 %v426, %v1798
        %v2029 = vadd.f32 %v427, %v1801
        %v2030 = vadd.f32 %v428, %v1806
        %v2031 = vadd.f32 %v429, %v1809
        %v2032 = vadd.f32 %v430, %v1814
        %v2033 = vadd.f32 %v431, %v1817
        %v2034 = vadd.f32 %v432, %v1822
        %v2035 = vadd.f32 %v433, %v1825
        %v2036 = vadd.f32 %v434, %v1830
        %v2037 = vadd.f32 %v435, %v1833
        %v2038 = vadd.f32 %v436, %v1838
        %v2039 = vadd.f32 %v437, %v1841
        %v2040 = vadd.f32 %v438, %v1846
        %v2041 = vadd.f32 %v439, %v1849
        %v2042 = vadd.f32 %v440, %v1854
        %v2043 = vadd.f32 %v441, %v1857
        %v2044 = vadd.f32 %v442, %v1862
        %v2045 = vadd.f32 %v443, %v1865
        %v2046 = vadd.f32 %v444, %v1870
        %v2047 = vadd.f32 %v445, %v1873
        %v2048 = vadd.f32 %v446, %v1878
        %v2049 = vadd.f32 %v447, %v1881
        %v2050 = vadd.f32 %v448, %v1886
        %v2051 = vadd.f32 %v449, %v1889
        %v2052 = vadd.f32 %v450, %v1894
        %v2053 = vadd.f32 %v451, %v1897
        %v2054 = vadd.f32 %v452, %v1902
        %v2055 = vadd.f32 %v453, %v1905
        %v2056 = vadd.f32 %v454, %v1910
        %v2057 = vadd.f32 %v455, %v1913
        %v2058 = vadd.f32 %v456, %v1918
        %v2059 = vadd.f32 %v457, %v1921
        %v2060 = vadd.f32 %v458, %v1926
        %v2061 = vadd.f32 %v459, %v1929
        %v2062 = vadd.f32 %v460, %v1934
        %v2063 = vadd.f32 %v461, %v1937
        %v2064 = vadd.f32 %v462, %v1942
        %v2065 = vadd.f32 %v463, %v1945
        %v2066 = vadd.f32 %v464, %v1950
        %v2067 = vadd.f32 %v465, %v1953
        %v2068 = vadd.f32 %v466, %v1958
        %v2069 = vadd.f32 %v467, %v1961
        %v2070 = vadd.f32 %v468, %v1966
        %v2071 = vadd.f32 %v469, %v1969
        %v2072 = vadd.f32 %v470, %v1974
        %v2073 = vadd.f32 %v471, %v1977
        %v2074 = vadd.f32 %v472, %v1982
        %v2075 = vadd.f32 %v473, %v1985
        %v2076 = vadd.f32 %v474, %v1990
        %v2077 = vadd.f32 %v475, %v1993
        %v2078 = vadd.f32 %v476, %v1998
        %v2079 = vadd.f32 %v477, %v2001
        %v2080 = vadd.f32 %v478, %v2006
        %v2081 = vadd.f32 %v479, %v2009
        %v2082 = vadd.f32 %v480, %v2014
        %v2083 = vadd.f32 %v481, %v2017
        %2084 = vst [vmem:[#allocation2] sm:$0xff] %v2020
        %2085 = vst [vmem:[#allocation2 + $0x8] sm:$0xff] %v2021
        %2086 = vst [vmem:[#allocation2 + $0x10] sm:$0xff] %v2022
        %2087 = vst [vmem:[#allocation2 + $0x18] sm:$0xff] %v2023
        %2088 = vst [vmem:[#allocation2 + $0x20] sm:$0xff] %v2024
        %2089 = vst [vmem:[#allocation2 + $0x28] sm:$0xff] %v2025
        %2090 = vst [vmem:[#allocation2 + $0x30] sm:$0xff] %v2026
        %2091 = vst [vmem:[#allocation2 + $0x38] sm:$0xff] %v2027
        %2092 = vst [vmem:[#allocation2 + $0x40] sm:$0xff] %v2028
        %2093 = vst [vmem:[#allocation2 + $0x48] sm:$0xff] %v2029
        %2094 = vst [vmem:[#allocation2 + $0x50] sm:$0xff] %v2030
        %2095 = vst [vmem:[#allocation2 + $0x58] sm:$0xff] %v2031
        %2096 = vst [vmem:[#allocation2 + $0x60] sm:$0xff] %v2032
        %2097 = vst [vmem:[#allocation2 + $0x68] sm:$0xff] %v2033
        %2098 = vst [vmem:[#allocation2 + $0x70] sm:$0xff] %v2034
        %2099 = vst [vmem:[#allocation2 + $0x78] sm:$0xff] %v2035
        %2100 = vst [vmem:[#allocation2 + $0x80] sm:$0xff] %v2036
        %2101 = vst [vmem:[#allocation2 + $0x88] sm:$0xff] %v2037
        %2102 = vst [vmem:[#allocation2 + $0x90] sm:$0xff] %v2038
        %2103 = vst [vmem:[#allocation2 + $0x98] sm:$0xff] %v2039
        %2104 = vst [vmem:[#allocation2 + $0xa0] sm:$0xff] %v2040
        %2105 = vst [vmem:[#allocation2 + $0xa8] sm:$0xff] %v2041
        %2106 = vst [vmem:[#allocation2 + $0xb0] sm:$0xff] %v2042
        %2107 = vst [vmem:[#allocation2 + $0xb8] sm:$0xff] %v2043
        %2108 = vst [vmem:[#allocation2 + $0xc0] sm:$0xff] %v2044
        %2109 = vst [vmem:[#allocation2 + $0xc8] sm:$0xff] %v2045
        %2110 = vst [vmem:[#allocation2 + $0xd0] sm:$0xff] %v2046
        %2111 = vst [vmem:[#allocation2 + $0xd8] sm:$0xff] %v2047
        %2112 = vst [vmem:[#allocation2 + $0xe0] sm:$0xff] %v2048
        %2113 = vst [vmem:[#allocation2 + $0xe8] sm:$0xff] %v2049
        %2114 = vst [vmem:[#allocation2 + $0xf0] sm:$0xff] %v2050
        %2115 = vst [vmem:[#allocation2 + $0xf8] sm:$0xff] %v2051
        %2116 = vst [vmem:[#allocation2 + $0x100] sm:$0xff] %v2052
        %2117 = vst [vmem:[#allocation2 + $0x108] sm:$0xff] %v2053
        %2118 = vst [vmem:[#allocation2 + $0x110] sm:$0xff] %v2054
        %2119 = vst [vmem:[#allocation2 + $0x118] sm:$0xff] %v2055
        %2120 = vst [vmem:[#allocation2 + $0x120] sm:$0xff] %v2056
        %2121 = vst [vmem:[#allocation2 + $0x128] sm:$0xff] %v2057
        %2122 = vst [vmem:[#allocation2 + $0x130] sm:$0xff] %v2058
        %2123 = vst [vmem:[#allocation2 + $0x138] sm:$0xff] %v2059
        %2124 = vst [vmem:[#allocation2 + $0x140] sm:$0xff] %v2060
        %2125 = vst [vmem:[#allocation2 + $0x148] sm:$0xff] %v2061
        %2126 = vst [vmem:[#allocation2 + $0x150] sm:$0xff] %v2062
        %2127 = vst [vmem:[#allocation2 + $0x158] sm:$0xff] %v2063
        %2128 = vst [vmem:[#allocation2 + $0x160] sm:$0xff] %v2064
        %2129 = vst [vmem:[#allocation2 + $0x168] sm:$0xff] %v2065
        %2130 = vst [vmem:[#allocation2 + $0x170] sm:$0xff] %v2066
        %2131 = vst [vmem:[#allocation2 + $0x178] sm:$0xff] %v2067
        %2132 = vst [vmem:[#allocation2 + $0x180] sm:$0xff] %v2068
        %2133 = vst [vmem:[#allocation2 + $0x188] sm:$0xff] %v2069
        %2134 = vst [vmem:[#allocation2 + $0x190] sm:$0xff] %v2070
        %2135 = vst [vmem:[#allocation2 + $0x198] sm:$0xff] %v2071
        %2136 = vst [vmem:[#allocation2 + $0x1a0] sm:$0xff] %v2072
        %2137 = vst [vmem:[#allocation2 + $0x1a8] sm:$0xff] %v2073
        %2138 = vst [vmem:[#allocation2 + $0x1b0] sm:$0xff] %v2074
        %2139 = vst [vmem:[#allocation2 + $0x1b8] sm:$0xff] %v2075
        %2140 = vst [vmem:[#allocation2 + $0x1c0] sm:$0xff] %v2076
        %2141 = vst [vmem:[#allocation2 + $0x1c8] sm:$0xff] %v2077
        %2142 = vst [vmem:[#allocation2 + $0x1d0] sm:$0xff] %v2078
        %2143 = vst [vmem:[#allocation2 + $0x1d8] sm:$0xff] %v2079
        %2144 = vst [vmem:[#allocation2 + $0x1e0] sm:$0xff] %v2080
        %2145 = vst [vmem:[#allocation2 + $0x1e8] sm:$0xff] %v2081
        %2146 = vst [vmem:[#allocation2 + $0x1f0] sm:$0xff] %v2082
        %2147 = vst [vmem:[#allocation2 + $0x1f8] sm:$0xff] %v2083
        %p2148 = scmp.eq.s32.totalorder %s28, 1
        // Predicated region
        $region57: #{tpu_custom_call.1} parent=35 // pred_check
          %p2149 = pneg %p2148
        $region58: #{tpu_custom_call.1} parent=35 // pred_check_branch
          %2151 = sbr.rel (%p2149) target = $region60
        $region59: #{tpu_custom_call.1} parent=35 // pred_region
          %v2152 = vld [vmem:[#allocation2] sm:$0xff]
          %v2153 = vld [vmem:[#allocation2 + $0x8] sm:$0xff]
          %v2154 = vld [vmem:[#allocation2 + $0x10] sm:$0xff]
          %v2155 = vld [vmem:[#allocation2 + $0x18] sm:$0xff]
          %v2156 = vld [vmem:[#allocation2 + $0x20] sm:$0xff]
          %v2157 = vld [vmem:[#allocation2 + $0x28] sm:$0xff]
          %v2158 = vld [vmem:[#allocation2 + $0x30] sm:$0xff]
          %v2159 = vld [vmem:[#allocation2 + $0x38] sm:$0xff]
          %v2160 = vld [vmem:[#allocation2 + $0x40] sm:$0xff]
          %v2161 = vld [vmem:[#allocation2 + $0x48] sm:$0xff]
          %v2162 = vld [vmem:[#allocation2 + $0x50] sm:$0xff]
          %v2163 = vld [vmem:[#allocation2 + $0x58] sm:$0xff]
          %v2164 = vld [vmem:[#allocation2 + $0x60] sm:$0xff]
          %v2165 = vld [vmem:[#allocation2 + $0x68] sm:$0xff]
          %v2166 = vld [vmem:[#allocation2 + $0x70] sm:$0xff]
          %v2167 = vld [vmem:[#allocation2 + $0x78] sm:$0xff]
          %v2168 = vld [vmem:[#allocation2 + $0x80] sm:$0xff]
          %v2169 = vld [vmem:[#allocation2 + $0x88] sm:$0xff]
          %v2170 = vld [vmem:[#allocation2 + $0x90] sm:$0xff]
          %v2171 = vld [vmem:[#allocation2 + $0x98] sm:$0xff]
          %v2172 = vld [vmem:[#allocation2 + $0xa0] sm:$0xff]
          %v2173 = vld [vmem:[#allocation2 + $0xa8] sm:$0xff]
          %v2174 = vld [vmem:[#allocation2 + $0xb0] sm:$0xff]
          %v2175 = vld [vmem:[#allocation2 + $0xb8] sm:$0xff]
          %v2176 = vld [vmem:[#allocation2 + $0xc0] sm:$0xff]
          %v2177 = vld [vmem:[#allocation2 + $0xc8] sm:$0xff]
          %v2178 = vld [vmem:[#allocation2 + $0xd0] sm:$0xff]
          %v2179 = vld [vmem:[#allocation2 + $0xd8] sm:$0xff]
          %v2180 = vld [vmem:[#allocation2 + $0xe0] sm:$0xff]
          %v2181 = vld [vmem:[#allocation2 + $0xe8] sm:$0xff]
          %v2182 = vld [vmem:[#allocation2 + $0xf0] sm:$0xff]
          %v2183 = vld [vmem:[#allocation2 + $0xf8] sm:$0xff]
          %v2184 = vld [vmem:[#allocation2 + $0x100] sm:$0xff]
          %v2185 = vld [vmem:[#allocation2 + $0x108] sm:$0xff]
          %v2186 = vld [vmem:[#allocation2 + $0x110] sm:$0xff]
          %v2187 = vld [vmem:[#allocation2 + $0x118] sm:$0xff]
          %v2188 = vld [vmem:[#allocation2 + $0x120] sm:$0xff]
          %v2189 = vld [vmem:[#allocation2 + $0x128] sm:$0xff]
          %v2190 = vld [vmem:[#allocation2 + $0x130] sm:$0xff]
          %v2191 = vld [vmem:[#allocation2 + $0x138] sm:$0xff]
          %v2192 = vld [vmem:[#allocation2 + $0x140] sm:$0xff]
          %v2193 = vld [vmem:[#allocation2 + $0x148] sm:$0xff]
          %v2194 = vld [vmem:[#allocation2 + $0x150] sm:$0xff]
          %v2195 = vld [vmem:[#allocation2 + $0x158] sm:$0xff]
          %v2196 = vld [vmem:[#allocation2 + $0x160] sm:$0xff]
          %v2197 = vld [vmem:[#allocation2 + $0x168] sm:$0xff]
          %v2198 = vld [vmem:[#allocation2 + $0x170] sm:$0xff]
          %v2199 = vld [vmem:[#allocation2 + $0x178] sm:$0xff]
          %v2200 = vld [vmem:[#allocation2 + $0x180] sm:$0xff]
          %v2201 = vld [vmem:[#allocation2 + $0x188] sm:$0xff]
          %v2202 = vld [vmem:[#allocation2 + $0x190] sm:$0xff]
          %v2203 = vld [vmem:[#allocation2 + $0x198] sm:$0xff]
          %v2204 = vld [vmem:[#allocation2 + $0x1a0] sm:$0xff]
          %v2205 = vld [vmem:[#allocation2 + $0x1a8] sm:$0xff]
          %v2206 = vld [vmem:[#allocation2 + $0x1b0] sm:$0xff]
          %v2207 = vld [vmem:[#allocation2 + $0x1b8] sm:$0xff]
          %v2208 = vld [vmem:[#allocation2 + $0x1c0] sm:$0xff]
          %v2209 = vld [vmem:[#allocation2 + $0x1c8] sm:$0xff]
          %v2210 = vld [vmem:[#allocation2 + $0x1d0] sm:$0xff]
          %v2211 = vld [vmem:[#allocation2 + $0x1d8] sm:$0xff]
          %v2212 = vld [vmem:[#allocation2 + $0x1e0] sm:$0xff]
          %v2213 = vld [vmem:[#allocation2 + $0x1e8] sm:$0xff]
          %v2214 = vld [vmem:[#allocation2 + $0x1f0] sm:$0xff]
          %v2215 = vld [vmem:[#allocation2 + $0x1f8] sm:$0xff]
          %v2216 = vld [vmem:[#allocation8] sm:$0xff]
          %v2217 = vld [vmem:[#allocation8 + $0x8] sm:$0xff]
          %v2218 = vld [vmem:[#allocation8 + $0x10] sm:$0xff]
          %v2219 = vld [vmem:[#allocation8 + $0x18] sm:$0xff]
          %v2220 = vld [vmem:[#allocation8 + $0x20] sm:$0xff]
          %v2221 = vld [vmem:[#allocation8 + $0x28] sm:$0xff]
          %v2222 = vld [vmem:[#allocation8 + $0x30] sm:$0xff]
          %v2223 = vld [vmem:[#allocation8 + $0x38] sm:$0xff]
          %v2224 = vld [vmem:[#allocation8 + $0x40] sm:$0xff]
          %v2225 = vld [vmem:[#allocation8 + $0x48] sm:$0xff]
          %v2226 = vld [vmem:[#allocation8 + $0x50] sm:$0xff]
          %v2227 = vld [vmem:[#allocation8 + $0x58] sm:$0xff]
          %v2228 = vld [vmem:[#allocation8 + $0x60] sm:$0xff]
          %v2229 = vld [vmem:[#allocation8 + $0x68] sm:$0xff]
          %v2230 = vld [vmem:[#allocation8 + $0x70] sm:$0xff]
          %v2231 = vld [vmem:[#allocation8 + $0x78] sm:$0xff]
          %2232 = vmatprep.subr.mxu0 0.0
          %2233 = vmatpush1.msra.mxu0 %v2216
          %2234 = vmatprep.subr.mxu0 0.0
          %2235 = vmatpush1.msra.mxu0 %v2217
          %2236 = vmatprep.subr.mxu0 0.0
          %2237 = vmatpush1.msra.mxu0 %v2218
          %2238 = vmatprep.subr.mxu0 0.0
          %2239 = vmatpush1.msra.mxu0 %v2219
          %2240 = vmatprep.subr.mxu0 0.0
          %2241 = vmatpush1.msra.mxu0 %v2220
          %2242 = vmatprep.subr.mxu0 0.0
          %2243 = vmatpush1.msra.mxu0 %v2221
          %2244 = vmatprep.subr.mxu0 0.0
          %2245 = vmatpush1.msra.mxu0 %v2222
          %2246 = vmatprep.subr.mxu0 0.0
          %2247 = vmatpush1.msra.mxu0 %v2223
          %2248 = vmatprep.subr.mxu0 0.0
          %2249 = vmatpush1.msra.mxu0 %v2224
          %2250 = vmatprep.subr.mxu0 0.0
          %2251 = vmatpush1.msra.mxu0 %v2225
          %2252 = vmatprep.subr.mxu0 0.0
          %2253 = vmatpush1.msra.mxu0 %v2226
          %2254 = vmatprep.subr.mxu0 0.0
          %2255 = vmatpush1.msra.mxu0 %v2227
          %2256 = vmatprep.subr.mxu0 0.0
          %2257 = vmatpush1.msra.mxu0 %v2228
          %2258 = vmatprep.subr.mxu0 0.0
          %2259 = vmatpush1.msra.mxu0 %v2229
          %2260 = vmatprep.subr.mxu0 0.0
          %2261 = vmatpush1.msra.mxu0 %v2230
          %2262 = vmatprep.subr.mxu0 0.0
          %2263 = vmatpush1.msra.mxu0 %v2231
          %2264 = vmatprep.subr.mxu0 0.0
          %2265 = vmatpush1.msra.mxu0 0.0
          %2266 = vmatprep.subr.mxu0 0.0
          %2267 = vmatpush1.msra.mxu0 0.0
          %2268 = vmatprep.subr.mxu0 0.0
          %2269 = vmatpush1.msra.mxu0 0.0
          %2270 = vmatprep.subr.mxu0 0.0
          %2271 = vmatpush1.msra.mxu0 0.0
          %2272 = vmatprep.subr.mxu0 0.0
          %2273 = vmatpush1.msra.mxu0 0.0
          %2274 = vmatprep.subr.mxu0 0.0
          %2275 = vmatpush1.msra.mxu0 0.0
          %2276 = vmatprep.subr.mxu0 0.0
          %2277 = vmatpush1.msra.mxu0 0.0
          %2278 = vmatprep.subr.mxu0 0.0
          %2279 = vmatpush1.msra.mxu0 0.0
          %2280 = vmatprep.subr.mxu0 0.0
          %2281 = vmatpush1.msra.mxu0 0.0
          %2282 = vmatprep.subr.mxu0 0.0
          %2283 = vmatpush1.msra.mxu0 0.0
          %2284 = vmatprep.subr.mxu0 0.0
          %2285 = vmatpush1.msra.mxu0 0.0
          %2286 = vmatprep.subr.mxu0 0.0
          %2287 = vmatpush1.msra.mxu0 0.0
          %2288 = vmatprep.subr.mxu0 0.0
          %2289 = vmatpush1.msra.mxu0 0.0
          %2290 = vmatprep.subr.mxu0 0.0
          %2291 = vmatpush1.msra.mxu0 0.0
          %2292 = vmatprep.subr.mxu0 0.0
          %2293 = vmatpush1.msra.mxu0 0.0
          %2294 = vmatprep.subr.mxu0 0.0
          %2295 = vmatpush1.msra.mxu0 0.0
          %2296 = vmatprep.mubr.f32.mxu0 0.0
          %2297 = vmatmul.mubr.f32.gmra.mrb[0].mxu0 %v2152
          %v2298 = vpop.f32.mrb[0].mxu0
          %v2299 = vadd.f32 0.0, %v2298
          %v2300 = vpop.f32.mrb[0].mxu0
          %2301 = vmatprep.mubr.f32.mxu0 0.0
          %2302 = vmatmul.mubr.f32.gmra.mrb[0].mxu0 %v2153
          %v2303 = vpop.f32.mrb[0].mxu0
          %v2304 = vadd.f32 0.0, %v2303
          %v2305 = vpop.f32.mrb[0].mxu0
          %2306 = vmatprep.mubr.f32.mxu0 0.0
          %2307 = vmatmul.mubr.f32.gmra.mrb[0].mxu0 %v2154
          %v2308 = vpop.f32.mrb[0].mxu0
          %v2309 = vadd.f32 0.0, %v2308
          %v2310 = vpop.f32.mrb[0].mxu0
          %2311 = vmatprep.mubr.f32.mxu0 0.0
          %2312 = vmatmul.mubr.f32.gmra.mrb[0].mxu0 %v2155
          %v2313 = vpop.f32.mrb[0].mxu0
          %v2314 = vadd.f32 0.0, %v2313
          %v2315 = vpop.f32.mrb[0].mxu0
          %2316 = vmatprep.mubr.f32.mxu0 0.0
          %2317 = vmatmul.mubr.f32.gmra.mrb[0].mxu0 %v2156
          %v2318 = vpop.f32.mrb[0].mxu0
          %v2319 = vadd.f32 0.0, %v2318
          %v2320 = vpop.f32.mrb[0].mxu0
          %2321 = vmatprep.mubr.f32.mxu0 0.0
          %2322 = vmatmul.mubr.f32.gmra.mrb[0].mxu0 %v2157
          %v2323 = vpop.f32.mrb[0].mxu0
          %v2324 = vadd.f32 0.0, %v2323
          %v2325 = vpop.f32.mrb[0].mxu0
          %2326 = vmatprep.mubr.f32.mxu0 0.0
          %2327 = vmatmul.mubr.f32.gmra.mrb[0].mxu0 %v2158
          %v2328 = vpop.f32.mrb[0].mxu0
          %v2329 = vadd.f32 0.0, %v2328
          %v2330 = vpop.f32.mrb[0].mxu0
          %2331 = vmatprep.mubr.f32.mxu0 0.0
          %2332 = vmatmul.mubr.f32.gmra.mrb[0].mxu0 %v2159
          %v2333 = vpop.f32.mrb[0].mxu0
          %v2334 = vadd.f32 0.0, %v2333
          %v2335 = vpop.f32.mrb[0].mxu0
          %2336 = vmatprep.mubr.f32.mxu0 0.0
          %2337 = vmatmul.mubr.f32.gmra.mrb[0].mxu0 %v2160
          %v2338 = vpop.f32.mrb[0].mxu0
          %v2339 = vadd.f32 0.0, %v2338
          %v2340 = vpop.f32.mrb[0].mxu0
          %2341 = vmatprep.mubr.f32.mxu0 0.0
          %2342 = vmatmul.mubr.f32.gmra.mrb[0].mxu0 %v2161
          %v2343 = vpop.f32.mrb[0].mxu0
          %v2344 = vadd.f32 0.0, %v2343
          %v2345 = vpop.f32.mrb[0].mxu0
          %2346 = vmatprep.mubr.f32.mxu0 0.0
          %2347 = vmatmul.mubr.f32.gmra.mrb[0].mxu0 %v2162
          %v2348 = vpop.f32.mrb[0].mxu0
          %v2349 = vadd.f32 0.0, %v2348
          %v2350 = vpop.f32.mrb[0].mxu0
          %2351 = vmatprep.mubr.f32.mxu0 0.0
          %2352 = vmatmul.mubr.f32.gmra.mrb[0].mxu0 %v2163
          %v2353 = vpop.f32.mrb[0].mxu0
          %v2354 = vadd.f32 0.0, %v2353
          %v2355 = vpop.f32.mrb[0].mxu0
          %2356 = vmatprep.mubr.f32.mxu0 0.0
          %2357 = vmatmul.mubr.f32.gmra.mrb[0].mxu0 %v2164
          %v2358 = vpop.f32.mrb[0].mxu0
          %v2359 = vadd.f32 0.0, %v2358
          %v2360 = vpop.f32.mrb[0].mxu0
          %2361 = vmatprep.mubr.f32.mxu0 0.0
          %2362 = vmatmul.mubr.f32.gmra.mrb[0].mxu0 %v2165
          %v2363 = vpop.f32.mrb[0].mxu0
          %v2364 = vadd.f32 0.0, %v2363
          %v2365 = vpop.f32.mrb[0].mxu0
          %2366 = vmatprep.mubr.f32.mxu0 0.0
          %2367 = vmatmul.mubr.f32.gmra.mrb[0].mxu0 %v2166
          %v2368 = vpop.f32.mrb[0].mxu0
          %v2369 = vadd.f32 0.0, %v2368
          %v2370 = vpop.f32.mrb[0].mxu0
          %2371 = vmatprep.mubr.f32.mxu0 0.0
          %2372 = vmatmul.mubr.f32.gmra.mrb[0].mxu0 %v2167
          %v2373 = vpop.f32.mrb[0].mxu0
          %v2374 = vadd.f32 0.0, %v2373
          %v2375 = vpop.f32.mrb[0].mxu0
          %2376 = vmatprep.mubr.f32.mxu0 0.0
          %2377 = vmatmul.mubr.f32.gmra.mrb[0].mxu0 %v2168
          %v2378 = vpop.f32.mrb[0].mxu0
          %v2379 = vadd.f32 0.0, %v2378
          %v2380 = vpop.f32.mrb[0].mxu0
          %2381 = vmatprep.mubr.f32.mxu0 0.0
          %2382 = vmatmul.mubr.f32.gmra.mrb[0].mxu0 %v2169
          %v2383 = vpop.f32.mrb[0].mxu0
          %v2384 = vadd.f32 0.0, %v2383
          %v2385 = vpop.f32.mrb[0].mxu0
          %2386 = vmatprep.mubr.f32.mxu0 0.0
          %2387 = vmatmul.mubr.f32.gmra.mrb[0].mxu0 %v2170
          %v2388 = vpop.f32.mrb[0].mxu0
          %v2389 = vadd.f32 0.0, %v2388
          %v2390 = vpop.f32.mrb[0].mxu0
          %2391 = vmatprep.mubr.f32.mxu0 0.0
          %2392 = vmatmul.mubr.f32.gmra.mrb[0].mxu0 %v2171
          %v2393 = vpop.f32.mrb[0].mxu0
          %v2394 = vadd.f32 0.0, %v2393
          %v2395 = vpop.f32.mrb[0].mxu0
          %2396 = vmatprep.mubr.f32.mxu0 0.0
          %2397 = vmatmul.mubr.f32.gmra.mrb[0].mxu0 %v2172
          %v2398 = vpop.f32.mrb[0].mxu0
          %v2399 = vadd.f32 0.0, %v2398
          %v2400 = vpop.f32.mrb[0].mxu0
          %2401 = vmatprep.mubr.f32.mxu0 0.0
          %2402 = vmatmul.mubr.f32.gmra.mrb[0].mxu0 %v2173
          %v2403 = vpop.f32.mrb[0].mxu0
          %v2404 = vadd.f32 0.0, %v2403
          %v2405 = vpop.f32.mrb[0].mxu0
          %2406 = vmatprep.mubr.f32.mxu0 0.0
          %2407 = vmatmul.mubr.f32.gmra.mrb[0].mxu0 %v2174
          %v2408 = vpop.f32.mrb[0].mxu0
          %v2409 = vadd.f32 0.0, %v2408
          %v2410 = vpop.f32.mrb[0].mxu0
          %2411 = vmatprep.mubr.f32.mxu0 0.0
          %2412 = vmatmul.mubr.f32.gmra.mrb[0].mxu0 %v2175
          %v2413 = vpop.f32.mrb[0].mxu0
          %v2414 = vadd.f32 0.0, %v2413
          %v2415 = vpop.f32.mrb[0].mxu0
          %2416 = vmatprep.mubr.f32.mxu0 0.0
          %2417 = vmatmul.mubr.f32.gmra.mrb[0].mxu0 %v2176
          %v2418 = vpop.f32.mrb[0].mxu0
          %v2419 = vadd.f32 0.0, %v2418
          %v2420 = vpop.f32.mrb[0].mxu0
          %2421 = vmatprep.mubr.f32.mxu0 0.0
          %2422 = vmatmul.mubr.f32.gmra.mrb[0].mxu0 %v2177
          %v2423 = vpop.f32.mrb[0].mxu0
          %v2424 = vadd.f32 0.0, %v2423
          %v2425 = vpop.f32.mrb[0].mxu0
          %2426 = vmatprep.mubr.f32.mxu0 0.0
          %2427 = vmatmul.mubr.f32.gmra.mrb[0].mxu0 %v2178
          %v2428 = vpop.f32.mrb[0].mxu0
          %v2429 = vadd.f32 0.0, %v2428
          %v2430 = vpop.f32.mrb[0].mxu0
          %2431 = vmatprep.mubr.f32.mxu0 0.0
          %2432 = vmatmul.mubr.f32.gmra.mrb[0].mxu0 %v2179
          %v2433 = vpop.f32.mrb[0].mxu0
          %v2434 = vadd.f32 0.0, %v2433
          %v2435 = vpop.f32.mrb[0].mxu0
          %2436 = vmatprep.mubr.f32.mxu0 0.0
          %2437 = vmatmul.mubr.f32.gmra.mrb[0].mxu0 %v2180
          %v2438 = vpop.f32.mrb[0].mxu0
          %v2439 = vadd.f32 0.0, %v2438
          %v2440 = vpop.f32.mrb[0].mxu0
          %2441 = vmatprep.mubr.f32.mxu0 0.0
          %2442 = vmatmul.mubr.f32.gmra.mrb[0].mxu0 %v2181
          %v2443 = vpop.f32.mrb[0].mxu0
          %v2444 = vadd.f32 0.0, %v2443
          %v2445 = vpop.f32.mrb[0].mxu0
          %2446 = vmatprep.mubr.f32.mxu0 0.0
          %2447 = vmatmul.mubr.f32.gmra.mrb[0].mxu0 %v2182
          %v2448 = vpop.f32.mrb[0].mxu0
          %v2449 = vadd.f32 0.0, %v2448
          %v2450 = vpop.f32.mrb[0].mxu0
          %2451 = vmatprep.mubr.f32.mxu0 0.0
          %2452 = vmatmul.mubr.f32.gmra.mrb[0].mxu0 %v2183
          %v2453 = vpop.f32.mrb[0].mxu0
          %v2454 = vadd.f32 0.0, %v2453
          %v2455 = vpop.f32.mrb[0].mxu0
          %2456 = vmatprep.mubr.f32.mxu0 0.0
          %2457 = vmatmul.mubr.f32.gmra.mrb[0].mxu0 %v2184
          %v2458 = vpop.f32.mrb[0].mxu0
          %v2459 = vadd.f32 0.0, %v2458
          %v2460 = vpop.f32.mrb[0].mxu0
          %2461 = vmatprep.mubr.f32.mxu0 0.0
          %2462 = vmatmul.mubr.f32.gmra.mrb[0].mxu0 %v2185
          %v2463 = vpop.f32.mrb[0].mxu0
          %v2464 = vadd.f32 0.0, %v2463
          %v2465 = vpop.f32.mrb[0].mxu0
          %2466 = vmatprep.mubr.f32.mxu0 0.0
          %2467 = vmatmul.mubr.f32.gmra.mrb[0].mxu0 %v2186
          %v2468 = vpop.f32.mrb[0].mxu0
          %v2469 = vadd.f32 0.0, %v2468
          %v2470 = vpop.f32.mrb[0].mxu0
          %2471 = vmatprep.mubr.f32.mxu0 0.0
          %2472 = vmatmul.mubr.f32.gmra.mrb[0].mxu0 %v2187
          %v2473 = vpop.f32.mrb[0].mxu0
          %v2474 = vadd.f32 0.0, %v2473
          %v2475 = vpop.f32.mrb[0].mxu0
          %2476 = vmatprep.mubr.f32.mxu0 0.0
          %2477 = vmatmul.mubr.f32.gmra.mrb[0].mxu0 %v2188
          %v2478 = vpop.f32.mrb[0].mxu0
          %v2479 = vadd.f32 0.0, %v2478
          %v2480 = vpop.f32.mrb[0].mxu0
          %2481 = vmatprep.mubr.f32.mxu0 0.0
          %2482 = vmatmul.mubr.f32.gmra.mrb[0].mxu0 %v2189
          %v2483 = vpop.f32.mrb[0].mxu0
          %v2484 = vadd.f32 0.0, %v2483
          %v2485 = vpop.f32.mrb[0].mxu0
          %2486 = vmatprep.mubr.f32.mxu0 0.0
          %2487 = vmatmul.mubr.f32.gmra.mrb[0].mxu0 %v2190
          %v2488 = vpop.f32.mrb[0].mxu0
          %v2489 = vadd.f32 0.0, %v2488
          %v2490 = vpop.f32.mrb[0].mxu0
          %2491 = vmatprep.mubr.f32.mxu0 0.0
          %2492 = vmatmul.mubr.f32.gmra.mrb[0].mxu0 %v2191
          %v2493 = vpop.f32.mrb[0].mxu0
          %v2494 = vadd.f32 0.0, %v2493
          %v2495 = vpop.f32.mrb[0].mxu0
          %2496 = vmatprep.mubr.f32.mxu0 0.0
          %2497 = vmatmul.mubr.f32.gmra.mrb[0].mxu0 %v2192
          %v2498 = vpop.f32.mrb[0].mxu0
          %v2499 = vadd.f32 0.0, %v2498
          %v2500 = vpop.f32.mrb[0].mxu0
          %2501 = vmatprep.mubr.f32.mxu0 0.0
          %2502 = vmatmul.mubr.f32.gmra.mrb[0].mxu0 %v2193
          %v2503 = vpop.f32.mrb[0].mxu0
          %v2504 = vadd.f32 0.0, %v2503
          %v2505 = vpop.f32.mrb[0].mxu0
          %2506 = vmatprep.mubr.f32.mxu0 0.0
          %2507 = vmatmul.mubr.f32.gmra.mrb[0].mxu0 %v2194
          %v2508 = vpop.f32.mrb[0].mxu0
          %v2509 = vadd.f32 0.0, %v2508
          %v2510 = vpop.f32.mrb[0].mxu0
          %2511 = vmatprep.mubr.f32.mxu0 0.0
          %2512 = vmatmul.mubr.f32.gmra.mrb[0].mxu0 %v2195
          %v2513 = vpop.f32.mrb[0].mxu0
          %v2514 = vadd.f32 0.0, %v2513
          %v2515 = vpop.f32.mrb[0].mxu0
          %2516 = vmatprep.mubr.f32.mxu0 0.0
          %2517 = vmatmul.mubr.f32.gmra.mrb[0].mxu0 %v2196
          %v2518 = vpop.f32.mrb[0].mxu0
          %v2519 = vadd.f32 0.0, %v2518
          %v2520 = vpop.f32.mrb[0].mxu0
          %2521 = vmatprep.mubr.f32.mxu0 0.0
          %2522 = vmatmul.mubr.f32.gmra.mrb[0].mxu0 %v2197
          %v2523 = vpop.f32.mrb[0].mxu0
          %v2524 = vadd.f32 0.0, %v2523
          %v2525 = vpop.f32.mrb[0].mxu0
          %2526 = vmatprep.mubr.f32.mxu0 0.0
          %2527 = vmatmul.mubr.f32.gmra.mrb[0].mxu0 %v2198
          %v2528 = vpop.f32.mrb[0].mxu0
          %v2529 = vadd.f32 0.0, %v2528
          %v2530 = vpop.f32.mrb[0].mxu0
          %2531 = vmatprep.mubr.f32.mxu0 0.0
          %2532 = vmatmul.mubr.f32.gmra.mrb[0].mxu0 %v2199
          %v2533 = vpop.f32.mrb[0].mxu0
          %v2534 = vadd.f32 0.0, %v2533
          %v2535 = vpop.f32.mrb[0].mxu0
          %2536 = vmatprep.mubr.f32.mxu0 0.0
          %2537 = vmatmul.mubr.f32.gmra.mrb[0].mxu0 %v2200
          %v2538 = vpop.f32.mrb[0].mxu0
          %v2539 = vadd.f32 0.0, %v2538
          %v2540 = vpop.f32.mrb[0].mxu0
          %2541 = vmatprep.mubr.f32.mxu0 0.0
          %2542 = vmatmul.mubr.f32.gmra.mrb[0].mxu0 %v2201
          %v2543 = vpop.f32.mrb[0].mxu0
          %v2544 = vadd.f32 0.0, %v2543
          %v2545 = vpop.f32.mrb[0].mxu0
          %2546 = vmatprep.mubr.f32.mxu0 0.0
          %2547 = vmatmul.mubr.f32.gmra.mrb[0].mxu0 %v2202
          %v2548 = vpop.f32.mrb[0].mxu0
          %v2549 = vadd.f32 0.0, %v2548
          %v2550 = vpop.f32.mrb[0].mxu0
          %2551 = vmatprep.mubr.f32.mxu0 0.0
          %2552 = vmatmul.mubr.f32.gmra.mrb[0].mxu0 %v2203
          %v2553 = vpop.f32.mrb[0].mxu0
          %v2554 = vadd.f32 0.0, %v2553
          %v2555 = vpop.f32.mrb[0].mxu0
          %2556 = vmatprep.mubr.f32.mxu0 0.0
          %2557 = vmatmul.mubr.f32.gmra.mrb[0].mxu0 %v2204
          %v2558 = vpop.f32.mrb[0].mxu0
          %v2559 = vadd.f32 0.0, %v2558
          %v2560 = vpop.f32.mrb[0].mxu0
          %2561 = vmatprep.mubr.f32.mxu0 0.0
          %2562 = vmatmul.mubr.f32.gmra.mrb[0].mxu0 %v2205
          %v2563 = vpop.f32.mrb[0].mxu0
          %v2564 = vadd.f32 0.0, %v2563
          %v2565 = vpop.f32.mrb[0].mxu0
          %2566 = vmatprep.mubr.f32.mxu0 0.0
          %2567 = vmatmul.mubr.f32.gmra.mrb[0].mxu0 %v2206
          %v2568 = vpop.f32.mrb[0].mxu0
          %v2569 = vadd.f32 0.0, %v2568
          %v2570 = vpop.f32.mrb[0].mxu0
          %2571 = vmatprep.mubr.f32.mxu0 0.0
          %2572 = vmatmul.mubr.f32.gmra.mrb[0].mxu0 %v2207
          %v2573 = vpop.f32.mrb[0].mxu0
          %v2574 = vadd.f32 0.0, %v2573
          %v2575 = vpop.f32.mrb[0].mxu0
          %2576 = vmatprep.mubr.f32.mxu0 0.0
          %2577 = vmatmul.mubr.f32.gmra.mrb[0].mxu0 %v2208
          %v2578 = vpop.f32.mrb[0].mxu0
          %v2579 = vadd.f32 0.0, %v2578
          %v2580 = vpop.f32.mrb[0].mxu0
          %2581 = vmatprep.mubr.f32.mxu0 0.0
          %2582 = vmatmul.mubr.f32.gmra.mrb[0].mxu0 %v2209
          %v2583 = vpop.f32.mrb[0].mxu0
          %v2584 = vadd.f32 0.0, %v2583
          %v2585 = vpop.f32.mrb[0].mxu0
          %2586 = vmatprep.mubr.f32.mxu0 0.0
          %2587 = vmatmul.mubr.f32.gmra.mrb[0].mxu0 %v2210
          %v2588 = vpop.f32.mrb[0].mxu0
          %v2589 = vadd.f32 0.0, %v2588
          %v2590 = vpop.f32.mrb[0].mxu0
          %2591 = vmatprep.mubr.f32.mxu0 0.0
          %2592 = vmatmul.mubr.f32.gmra.mrb[0].mxu0 %v2211
          %v2593 = vpop.f32.mrb[0].mxu0
          %v2594 = vadd.f32 0.0, %v2593
          %v2595 = vpop.f32.mrb[0].mxu0
          %2596 = vmatprep.mubr.f32.mxu0 0.0
          %2597 = vmatmul.mubr.f32.gmra.mrb[0].mxu0 %v2212
          %v2598 = vpop.f32.mrb[0].mxu0
          %v2599 = vadd.f32 0.0, %v2598
          %v2600 = vpop.f32.mrb[0].mxu0
          %2601 = vmatprep.mubr.f32.mxu0 0.0
          %2602 = vmatmul.mubr.f32.gmra.mrb[0].mxu0 %v2213
          %v2603 = vpop.f32.mrb[0].mxu0
          %v2604 = vadd.f32 0.0, %v2603
          %v2605 = vpop.f32.mrb[0].mxu0
          %2606 = vmatprep.mubr.f32.mxu0 0.0
          %2607 = vmatmul.mubr.f32.gmra.mrb[0].mxu0 %v2214
          %v2608 = vpop.f32.mrb[0].mxu0
          %v2609 = vadd.f32 0.0, %v2608
          %v2610 = vpop.f32.mrb[0].mxu0
          %2611 = vmatprep.mubr.f32.mxu0 0.0
          %2612 = vmatmul.mubr.f32.gmra.mrb[0].mxu0 %v2215
          %v2613 = vpop.f32.mrb[0].mxu0
          %v2614 = vadd.f32 0.0, %v2613
          %v2615 = vpop.f32.mrb[0].mxu0
          %2616 = vdwg.mxu0
          %v2617 = vmax.f32 %v2299, 0.0
          %v2618 = vmax.f32 %v2304, 0.0
          %v2619 = vmax.f32 %v2309, 0.0
          %v2620 = vmax.f32 %v2314, 0.0
          %v2621 = vmax.f32 %v2319, 0.0
          %v2622 = vmax.f32 %v2324, 0.0
          %v2623 = vmax.f32 %v2329, 0.0
          %v2624 = vmax.f32 %v2334, 0.0
          %v2625 = vmax.f32 %v2339, 0.0
          %v2626 = vmax.f32 %v2344, 0.0
          %v2627 = vmax.f32 %v2349, 0.0
          %v2628 = vmax.f32 %v2354, 0.0
          %v2629 = vmax.f32 %v2359, 0.0
          %v2630 = vmax.f32 %v2364, 0.0
          %v2631 = vmax.f32 %v2369, 0.0
          %v2632 = vmax.f32 %v2374, 0.0
          %v2633 = vmax.f32 %v2379, 0.0
          %v2634 = vmax.f32 %v2384, 0.0
          %v2635 = vmax.f32 %v2389, 0.0
          %v2636 = vmax.f32 %v2394, 0.0
          %v2637 = vmax.f32 %v2399, 0.0
          %v2638 = vmax.f32 %v2404, 0.0
          %v2639 = vmax.f32 %v2409, 0.0
          %v2640 = vmax.f32 %v2414, 0.0
          %v2641 = vmax.f32 %v2419, 0.0
          %v2642 = vmax.f32 %v2424, 0.0
          %v2643 = vmax.f32 %v2429, 0.0
          %v2644 = vmax.f32 %v2434, 0.0
          %v2645 = vmax.f32 %v2439, 0.0
          %v2646 = vmax.f32 %v2444, 0.0
          %v2647 = vmax.f32 %v2449, 0.0
          %v2648 = vmax.f32 %v2454, 0.0
          %v2649 = vmax.f32 %v2459, 0.0
          %v2650 = vmax.f32 %v2464, 0.0
          %v2651 = vmax.f32 %v2469, 0.0
          %v2652 = vmax.f32 %v2474, 0.0
          %v2653 = vmax.f32 %v2479, 0.0
          %v2654 = vmax.f32 %v2484, 0.0
          %v2655 = vmax.f32 %v2489, 0.0
          %v2656 = vmax.f32 %v2494, 0.0
          %v2657 = vmax.f32 %v2499, 0.0
          %v2658 = vmax.f32 %v2504, 0.0
          %v2659 = vmax.f32 %v2509, 0.0
          %v2660 = vmax.f32 %v2514, 0.0
          %v2661 = vmax.f32 %v2519, 0.0
          %v2662 = vmax.f32 %v2524, 0.0
          %v2663 = vmax.f32 %v2529, 0.0
          %v2664 = vmax.f32 %v2534, 0.0
          %v2665 = vmax.f32 %v2539, 0.0
          %v2666 = vmax.f32 %v2544, 0.0
          %v2667 = vmax.f32 %v2549, 0.0
          %v2668 = vmax.f32 %v2554, 0.0
          %v2669 = vmax.f32 %v2559, 0.0
          %v2670 = vmax.f32 %v2564, 0.0
          %v2671 = vmax.f32 %v2569, 0.0
          %v2672 = vmax.f32 %v2574, 0.0
          %v2673 = vmax.f32 %v2579, 0.0
          %v2674 = vmax.f32 %v2584, 0.0
          %v2675 = vmax.f32 %v2589, 0.0
          %v2676 = vmax.f32 %v2594, 0.0
          %v2677 = vmax.f32 %v2599, 0.0
          %v2678 = vmax.f32 %v2604, 0.0
          %v2679 = vmax.f32 %v2609, 0.0
          %v2680 = vmax.f32 %v2614, 0.0
          %v2681 = vld [vmem:[#allocation9] sm:$0xff]
          %v2682 = vld [vmem:[#allocation9 + $0x8] sm:$0xff]
          %v2683 = vld [vmem:[#allocation9 + $0x10] sm:$0xff]
          %v2684 = vld [vmem:[#allocation9 + $0x18] sm:$0xff]
          %v2685 = vld [vmem:[#allocation9 + $0x20] sm:$0xff]
          %v2686 = vld [vmem:[#allocation9 + $0x28] sm:$0xff]
          %v2687 = vld [vmem:[#allocation9 + $0x30] sm:$0xff]
          %v2688 = vld [vmem:[#allocation9 + $0x38] sm:$0xff]
          %v2689 = vld [vmem:[#allocation9 + $0x40] sm:$0xff]
          %v2690 = vld [vmem:[#allocation9 + $0x48] sm:$0xff]
          %v2691 = vld [vmem:[#allocation9 + $0x50] sm:$0xff]
          %v2692 = vld [vmem:[#allocation9 + $0x58] sm:$0xff]
          %v2693 = vld [vmem:[#allocation9 + $0x60] sm:$0xff]
          %v2694 = vld [vmem:[#allocation9 + $0x68] sm:$0xff]
          %v2695 = vld [vmem:[#allocation9 + $0x70] sm:$0xff]
          %v2696 = vld [vmem:[#allocation9 + $0x78] sm:$0xff]
          %2697 = vmatprep.subr.mxu0 0.0
          %2698 = vmatpush1.msra.mxu0 %v2681
          %2699 = vmatprep.subr.mxu0 0.0
          %2700 = vmatpush1.msra.mxu0 %v2682
          %2701 = vmatprep.subr.mxu0 0.0
          %2702 = vmatpush1.msra.mxu0 %v2683
          %2703 = vmatprep.subr.mxu0 0.0
          %2704 = vmatpush1.msra.mxu0 %v2684
          %2705 = vmatprep.subr.mxu0 0.0
          %2706 = vmatpush1.msra.mxu0 %v2685
          %2707 = vmatprep.subr.mxu0 0.0
          %2708 = vmatpush1.msra.mxu0 %v2686
          %2709 = vmatprep.subr.mxu0 0.0
          %2710 = vmatpush1.msra.mxu0 %v2687
          %2711 = vmatprep.subr.mxu0 0.0
          %2712 = vmatpush1.msra.mxu0 %v2688
          %2713 = vmatprep.subr.mxu0 0.0
          %2714 = vmatpush1.msra.mxu0 %v2689
          %2715 = vmatprep.subr.mxu0 0.0
          %2716 = vmatpush1.msra.mxu0 %v2690
          %2717 = vmatprep.subr.mxu0 0.0
          %2718 = vmatpush1.msra.mxu0 %v2691
          %2719 = vmatprep.subr.mxu0 0.0
          %2720 = vmatpush1.msra.mxu0 %v2692
          %2721 = vmatprep.subr.mxu0 0.0
          %2722 = vmatpush1.msra.mxu0 %v2693
          %2723 = vmatprep.subr.mxu0 0.0
          %2724 = vmatpush1.msra.mxu0 %v2694
          %2725 = vmatprep.subr.mxu0 0.0
          %2726 = vmatpush1.msra.mxu0 %v2695
          %2727 = vmatprep.subr.mxu0 0.0
          %2728 = vmatpush1.msra.mxu0 %v2696
          %2729 = vmatprep.subr.mxu0 0.0
          %2730 = vmatpush1.msra.mxu0 0.0
          %2731 = vmatprep.subr.mxu0 0.0
          %2732 = vmatpush1.msra.mxu0 0.0
          %2733 = vmatprep.subr.mxu0 0.0
          %2734 = vmatpush1.msra.mxu0 0.0
          %2735 = vmatprep.subr.mxu0 0.0
          %2736 = vmatpush1.msra.mxu0 0.0
          %2737 = vmatprep.subr.mxu0 0.0
          %2738 = vmatpush1.msra.mxu0 0.0
          %2739 = vmatprep.subr.mxu0 0.0
          %2740 = vmatpush1.msra.mxu0 0.0
          %2741 = vmatprep.subr.mxu0 0.0
          %2742 = vmatpush1.msra.mxu0 0.0
          %2743 = vmatprep.subr.mxu0 0.0
          %2744 = vmatpush1.msra.mxu0 0.0
          %2745 = vmatprep.subr.mxu0 0.0
          %2746 = vmatpush1.msra.mxu0 0.0
          %2747 = vmatprep.subr.mxu0 0.0
          %2748 = vmatpush1.msra.mxu0 0.0
          %2749 = vmatprep.subr.mxu0 0.0
          %2750 = vmatpush1.msra.mxu0 0.0
          %2751 = vmatprep.subr.mxu0 0.0
          %2752 = vmatpush1.msra.mxu0 0.0
          %2753 = vmatprep.subr.mxu0 0.0
          %2754 = vmatpush1.msra.mxu0 0.0
          %2755 = vmatprep.subr.mxu0 0.0
          %2756 = vmatpush1.msra.mxu0 0.0
          %2757 = vmatprep.subr.mxu0 0.0
          %2758 = vmatpush1.msra.mxu0 0.0
          %2759 = vmatprep.subr.mxu0 0.0
          %2760 = vmatpush1.msra.mxu0 0.0
          %2761 = vmatprep.mubr.f32.mxu0 0.0
          %2762 = vmatmul.mubr.f32.gmra.mrb[0].mxu0 %v2617
          %v2763 = vpop.f32.mrb[0].mxu0
          %v2764 = vadd.f32 0.0, %v2763
          %v2765 = vpop.f32.mrb[0].mxu0
          %2766 = vmatprep.mubr.f32.mxu0 0.0
          %2767 = vmatmul.mubr.f32.gmra.mrb[0].mxu0 %v2618
          %v2768 = vpop.f32.mrb[0].mxu0
          %v2769 = vadd.f32 0.0, %v2768
          %v2770 = vpop.f32.mrb[0].mxu0
          %2771 = vmatprep.mubr.f32.mxu0 0.0
          %2772 = vmatmul.mubr.f32.gmra.mrb[0].mxu0 %v2619
          %v2773 = vpop.f32.mrb[0].mxu0
          %v2774 = vadd.f32 0.0, %v2773
          %v2775 = vpop.f32.mrb[0].mxu0
          %2776 = vmatprep.mubr.f32.mxu0 0.0
          %2777 = vmatmul.mubr.f32.gmra.mrb[0].mxu0 %v2620
          %v2778 = vpop.f32.mrb[0].mxu0
          %v2779 = vadd.f32 0.0, %v2778
          %v2780 = vpop.f32.mrb[0].mxu0
          %2781 = vmatprep.mubr.f32.mxu0 0.0
          %2782 = vmatmul.mubr.f32.gmra.mrb[0].mxu0 %v2621
          %v2783 = vpop.f32.mrb[0].mxu0
          %v2784 = vadd.f32 0.0, %v2783
          %v2785 = vpop.f32.mrb[0].mxu0
          %2786 = vmatprep.mubr.f32.mxu0 0.0
          %2787 = vmatmul.mubr.f32.gmra.mrb[0].mxu0 %v2622
          %v2788 = vpop.f32.mrb[0].mxu0
          %v2789 = vadd.f32 0.0, %v2788
          %v2790 = vpop.f32.mrb[0].mxu0
          %2791 = vmatprep.mubr.f32.mxu0 0.0
          %2792 = vmatmul.mubr.f32.gmra.mrb[0].mxu0 %v2623
          %v2793 = vpop.f32.mrb[0].mxu0
          %v2794 = vadd.f32 0.0, %v2793
          %v2795 = vpop.f32.mrb[0].mxu0
          %2796 = vmatprep.mubr.f32.mxu0 0.0
          %2797 = vmatmul.mubr.f32.gmra.mrb[0].mxu0 %v2624
          %v2798 = vpop.f32.mrb[0].mxu0
          %v2799 = vadd.f32 0.0, %v2798
          %v2800 = vpop.f32.mrb[0].mxu0
          %2801 = vmatprep.mubr.f32.mxu0 0.0
          %2802 = vmatmul.mubr.f32.gmra.mrb[0].mxu0 %v2625
          %v2803 = vpop.f32.mrb[0].mxu0
          %v2804 = vadd.f32 0.0, %v2803
          %v2805 = vpop.f32.mrb[0].mxu0
          %2806 = vmatprep.mubr.f32.mxu0 0.0
          %2807 = vmatmul.mubr.f32.gmra.mrb[0].mxu0 %v2626
          %v2808 = vpop.f32.mrb[0].mxu0
          %v2809 = vadd.f32 0.0, %v2808
          %v2810 = vpop.f32.mrb[0].mxu0
          %2811 = vmatprep.mubr.f32.mxu0 0.0
          %2812 = vmatmul.mubr.f32.gmra.mrb[0].mxu0 %v2627
          %v2813 = vpop.f32.mrb[0].mxu0
          %v2814 = vadd.f32 0.0, %v2813
          %v2815 = vpop.f32.mrb[0].mxu0
          %2816 = vmatprep.mubr.f32.mxu0 0.0
          %2817 = vmatmul.mubr.f32.gmra.mrb[0].mxu0 %v2628
          %v2818 = vpop.f32.mrb[0].mxu0
          %v2819 = vadd.f32 0.0, %v2818
          %v2820 = vpop.f32.mrb[0].mxu0
          %2821 = vmatprep.mubr.f32.mxu0 0.0
          %2822 = vmatmul.mubr.f32.gmra.mrb[0].mxu0 %v2629
          %v2823 = vpop.f32.mrb[0].mxu0
          %v2824 = vadd.f32 0.0, %v2823
          %v2825 = vpop.f32.mrb[0].mxu0
          %2826 = vmatprep.mubr.f32.mxu0 0.0
          %2827 = vmatmul.mubr.f32.gmra.mrb[0].mxu0 %v2630
          %v2828 = vpop.f32.mrb[0].mxu0
          %v2829 = vadd.f32 0.0, %v2828
          %v2830 = vpop.f32.mrb[0].mxu0
          %2831 = vmatprep.mubr.f32.mxu0 0.0
          %2832 = vmatmul.mubr.f32.gmra.mrb[0].mxu0 %v2631
          %v2833 = vpop.f32.mrb[0].mxu0
          %v2834 = vadd.f32 0.0, %v2833
          %v2835 = vpop.f32.mrb[0].mxu0
          %2836 = vmatprep.mubr.f32.mxu0 0.0
          %2837 = vmatmul.mubr.f32.gmra.mrb[0].mxu0 %v2632
          %v2838 = vpop.f32.mrb[0].mxu0
          %v2839 = vadd.f32 0.0, %v2838
          %v2840 = vpop.f32.mrb[0].mxu0
          %2841 = vmatprep.mubr.f32.mxu0 0.0
          %2842 = vmatmul.mubr.f32.gmra.mrb[0].mxu0 %v2633
          %v2843 = vpop.f32.mrb[0].mxu0
          %v2844 = vadd.f32 0.0, %v2843
          %v2845 = vpop.f32.mrb[0].mxu0
          %2846 = vmatprep.mubr.f32.mxu0 0.0
          %2847 = vmatmul.mubr.f32.gmra.mrb[0].mxu0 %v2634
          %v2848 = vpop.f32.mrb[0].mxu0
          %v2849 = vadd.f32 0.0, %v2848
          %v2850 = vpop.f32.mrb[0].mxu0
          %2851 = vmatprep.mubr.f32.mxu0 0.0
          %2852 = vmatmul.mubr.f32.gmra.mrb[0].mxu0 %v2635
          %v2853 = vpop.f32.mrb[0].mxu0
          %v2854 = vadd.f32 0.0, %v2853
          %v2855 = vpop.f32.mrb[0].mxu0
          %2856 = vmatprep.mubr.f32.mxu0 0.0
          %2857 = vmatmul.mubr.f32.gmra.mrb[0].mxu0 %v2636
          %v2858 = vpop.f32.mrb[0].mxu0
          %v2859 = vadd.f32 0.0, %v2858
          %v2860 = vpop.f32.mrb[0].mxu0
          %2861 = vmatprep.mubr.f32.mxu0 0.0
          %2862 = vmatmul.mubr.f32.gmra.mrb[0].mxu0 %v2637
          %v2863 = vpop.f32.mrb[0].mxu0
          %v2864 = vadd.f32 0.0, %v2863
          %v2865 = vpop.f32.mrb[0].mxu0
          %2866 = vmatprep.mubr.f32.mxu0 0.0
          %2867 = vmatmul.mubr.f32.gmra.mrb[0].mxu0 %v2638
          %v2868 = vpop.f32.mrb[0].mxu0
          %v2869 = vadd.f32 0.0, %v2868
          %v2870 = vpop.f32.mrb[0].mxu0
          %2871 = vmatprep.mubr.f32.mxu0 0.0
          %2872 = vmatmul.mubr.f32.gmra.mrb[0].mxu0 %v2639
          %v2873 = vpop.f32.mrb[0].mxu0
          %v2874 = vadd.f32 0.0, %v2873
          %v2875 = vpop.f32.mrb[0].mxu0
          %2876 = vmatprep.mubr.f32.mxu0 0.0
          %2877 = vmatmul.mubr.f32.gmra.mrb[0].mxu0 %v2640
          %v2878 = vpop.f32.mrb[0].mxu0
          %v2879 = vadd.f32 0.0, %v2878
          %v2880 = vpop.f32.mrb[0].mxu0
          %2881 = vmatprep.mubr.f32.mxu0 0.0
          %2882 = vmatmul.mubr.f32.gmra.mrb[0].mxu0 %v2641
          %v2883 = vpop.f32.mrb[0].mxu0
          %v2884 = vadd.f32 0.0, %v2883
          %v2885 = vpop.f32.mrb[0].mxu0
          %2886 = vmatprep.mubr.f32.mxu0 0.0
          %2887 = vmatmul.mubr.f32.gmra.mrb[0].mxu0 %v2642
          %v2888 = vpop.f32.mrb[0].mxu0
          %v2889 = vadd.f32 0.0, %v2888
          %v2890 = vpop.f32.mrb[0].mxu0
          %2891 = vmatprep.mubr.f32.mxu0 0.0
          %2892 = vmatmul.mubr.f32.gmra.mrb[0].mxu0 %v2643
          %v2893 = vpop.f32.mrb[0].mxu0
          %v2894 = vadd.f32 0.0, %v2893
          %v2895 = vpop.f32.mrb[0].mxu0
          %2896 = vmatprep.mubr.f32.mxu0 0.0
          %2897 = vmatmul.mubr.f32.gmra.mrb[0].mxu0 %v2644
          %v2898 = vpop.f32.mrb[0].mxu0
          %v2899 = vadd.f32 0.0, %v2898
          %v2900 = vpop.f32.mrb[0].mxu0
          %2901 = vmatprep.mubr.f32.mxu0 0.0
          %2902 = vmatmul.mubr.f32.gmra.mrb[0].mxu0 %v2645
          %v2903 = vpop.f32.mrb[0].mxu0
          %v2904 = vadd.f32 0.0, %v2903
          %v2905 = vpop.f32.mrb[0].mxu0
          %2906 = vmatprep.mubr.f32.mxu0 0.0
          %2907 = vmatmul.mubr.f32.gmra.mrb[0].mxu0 %v2646
          %v2908 = vpop.f32.mrb[0].mxu0
          %v2909 = vadd.f32 0.0, %v2908
          %v2910 = vpop.f32.mrb[0].mxu0
          %2911 = vmatprep.mubr.f32.mxu0 0.0
          %2912 = vmatmul.mubr.f32.gmra.mrb[0].mxu0 %v2647
          %v2913 = vpop.f32.mrb[0].mxu0
          %v2914 = vadd.f32 0.0, %v2913
          %v2915 = vpop.f32.mrb[0].mxu0
          %2916 = vmatprep.mubr.f32.mxu0 0.0
          %2917 = vmatmul.mubr.f32.gmra.mrb[0].mxu0 %v2648
          %v2918 = vpop.f32.mrb[0].mxu0
          %v2919 = vadd.f32 0.0, %v2918
          %v2920 = vpop.f32.mrb[0].mxu0
          %2921 = vmatprep.mubr.f32.mxu0 0.0
          %2922 = vmatmul.mubr.f32.gmra.mrb[0].mxu0 %v2649
          %v2923 = vpop.f32.mrb[0].mxu0
          %v2924 = vadd.f32 0.0, %v2923
          %v2925 = vpop.f32.mrb[0].mxu0
          %2926 = vmatprep.mubr.f32.mxu0 0.0
          %2927 = vmatmul.mubr.f32.gmra.mrb[0].mxu0 %v2650
          %v2928 = vpop.f32.mrb[0].mxu0
          %v2929 = vadd.f32 0.0, %v2928
          %v2930 = vpop.f32.mrb[0].mxu0
          %2931 = vmatprep.mubr.f32.mxu0 0.0
          %2932 = vmatmul.mubr.f32.gmra.mrb[0].mxu0 %v2651
          %v2933 = vpop.f32.mrb[0].mxu0
          %v2934 = vadd.f32 0.0, %v2933
          %v2935 = vpop.f32.mrb[0].mxu0
          %2936 = vmatprep.mubr.f32.mxu0 0.0
          %2937 = vmatmul.mubr.f32.gmra.mrb[0].mxu0 %v2652
          %v2938 = vpop.f32.mrb[0].mxu0
          %v2939 = vadd.f32 0.0, %v2938
          %v2940 = vpop.f32.mrb[0].mxu0
          %2941 = vmatprep.mubr.f32.mxu0 0.0
          %2942 = vmatmul.mubr.f32.gmra.mrb[0].mxu0 %v2653
          %v2943 = vpop.f32.mrb[0].mxu0
          %v2944 = vadd.f32 0.0, %v2943
          %v2945 = vpop.f32.mrb[0].mxu0
          %2946 = vmatprep.mubr.f32.mxu0 0.0
          %2947 = vmatmul.mubr.f32.gmra.mrb[0].mxu0 %v2654
          %v2948 = vpop.f32.mrb[0].mxu0
          %v2949 = vadd.f32 0.0, %v2948
          %v2950 = vpop.f32.mrb[0].mxu0
          %2951 = vmatprep.mubr.f32.mxu0 0.0
          %2952 = vmatmul.mubr.f32.gmra.mrb[0].mxu0 %v2655
          %v2953 = vpop.f32.mrb[0].mxu0
          %v2954 = vadd.f32 0.0, %v2953
          %v2955 = vpop.f32.mrb[0].mxu0
          %2956 = vmatprep.mubr.f32.mxu0 0.0
          %2957 = vmatmul.mubr.f32.gmra.mrb[0].mxu0 %v2656
          %v2958 = vpop.f32.mrb[0].mxu0
          %v2959 = vadd.f32 0.0, %v2958
          %v2960 = vpop.f32.mrb[0].mxu0
          %2961 = vmatprep.mubr.f32.mxu0 0.0
          %2962 = vmatmul.mubr.f32.gmra.mrb[0].mxu0 %v2657
          %v2963 = vpop.f32.mrb[0].mxu0
          %v2964 = vadd.f32 0.0, %v2963
          %v2965 = vpop.f32.mrb[0].mxu0
          %2966 = vmatprep.mubr.f32.mxu0 0.0
          %2967 = vmatmul.mubr.f32.gmra.mrb[0].mxu0 %v2658
          %v2968 = vpop.f32.mrb[0].mxu0
          %v2969 = vadd.f32 0.0, %v2968
          %v2970 = vpop.f32.mrb[0].mxu0
          %2971 = vmatprep.mubr.f32.mxu0 0.0
          %2972 = vmatmul.mubr.f32.gmra.mrb[0].mxu0 %v2659
          %v2973 = vpop.f32.mrb[0].mxu0
          %v2974 = vadd.f32 0.0, %v2973
          %v2975 = vpop.f32.mrb[0].mxu0
          %2976 = vmatprep.mubr.f32.mxu0 0.0
          %2977 = vmatmul.mubr.f32.gmra.mrb[0].mxu0 %v2660
          %v2978 = vpop.f32.mrb[0].mxu0
          %v2979 = vadd.f32 0.0, %v2978
          %v2980 = vpop.f32.mrb[0].mxu0
          %2981 = vmatprep.mubr.f32.mxu0 0.0
          %2982 = vmatmul.mubr.f32.gmra.mrb[0].mxu0 %v2661
          %v2983 = vpop.f32.mrb[0].mxu0
          %v2984 = vadd.f32 0.0, %v2983
          %v2985 = vpop.f32.mrb[0].mxu0
          %2986 = vmatprep.mubr.f32.mxu0 0.0
          %2987 = vmatmul.mubr.f32.gmra.mrb[0].mxu0 %v2662
          %v2988 = vpop.f32.mrb[0].mxu0
          %v2989 = vadd.f32 0.0, %v2988
          %v2990 = vpop.f32.mrb[0].mxu0
          %2991 = vmatprep.mubr.f32.mxu0 0.0
          %2992 = vmatmul.mubr.f32.gmra.mrb[0].mxu0 %v2663
          %v2993 = vpop.f32.mrb[0].mxu0
          %v2994 = vadd.f32 0.0, %v2993
          %v2995 = vpop.f32.mrb[0].mxu0
          %2996 = vmatprep.mubr.f32.mxu0 0.0
          %2997 = vmatmul.mubr.f32.gmra.mrb[0].mxu0 %v2664
          %v2998 = vpop.f32.mrb[0].mxu0
          %v2999 = vadd.f32 0.0, %v2998
          %v3000 = vpop.f32.mrb[0].mxu0
          %3001 = vmatprep.mubr.f32.mxu0 0.0
          %3002 = vmatmul.mubr.f32.gmra.mrb[0].mxu0 %v2665
          %v3003 = vpop.f32.mrb[0].mxu0
          %v3004 = vadd.f32 0.0, %v3003
          %v3005 = vpop.f32.mrb[0].mxu0
          %3006 = vmatprep.mubr.f32.mxu0 0.0
          %3007 = vmatmul.mubr.f32.gmra.mrb[0].mxu0 %v2666
          %v3008 = vpop.f32.mrb[0].mxu0
          %v3009 = vadd.f32 0.0, %v3008
          %v3010 = vpop.f32.mrb[0].mxu0
          %3011 = vmatprep.mubr.f32.mxu0 0.0
          %3012 = vmatmul.mubr.f32.gmra.mrb[0].mxu0 %v2667
          %v3013 = vpop.f32.mrb[0].mxu0
          %v3014 = vadd.f32 0.0, %v3013
          %v3015 = vpop.f32.mrb[0].mxu0
          %3016 = vmatprep.mubr.f32.mxu0 0.0
          %3017 = vmatmul.mubr.f32.gmra.mrb[0].mxu0 %v2668
          %v3018 = vpop.f32.mrb[0].mxu0
          %v3019 = vadd.f32 0.0, %v3018
          %v3020 = vpop.f32.mrb[0].mxu0
          %3021 = vmatprep.mubr.f32.mxu0 0.0
          %3022 = vmatmul.mubr.f32.gmra.mrb[0].mxu0 %v2669
          %v3023 = vpop.f32.mrb[0].mxu0
          %v3024 = vadd.f32 0.0, %v3023
          %v3025 = vpop.f32.mrb[0].mxu0
          %3026 = vmatprep.mubr.f32.mxu0 0.0
          %3027 = vmatmul.mubr.f32.gmra.mrb[0].mxu0 %v2670
          %v3028 = vpop.f32.mrb[0].mxu0
          %v3029 = vadd.f32 0.0, %v3028
          %v3030 = vpop.f32.mrb[0].mxu0
          %3031 = vmatprep.mubr.f32.mxu0 0.0
          %3032 = vmatmul.mubr.f32.gmra.mrb[0].mxu0 %v2671
          %v3033 = vpop.f32.mrb[0].mxu0
          %v3034 = vadd.f32 0.0, %v3033
          %v3035 = vpop.f32.mrb[0].mxu0
          %3036 = vmatprep.mubr.f32.mxu0 0.0
          %3037 = vmatmul.mubr.f32.gmra.mrb[0].mxu0 %v2672
          %v3038 = vpop.f32.mrb[0].mxu0
          %v3039 = vadd.f32 0.0, %v3038
          %v3040 = vpop.f32.mrb[0].mxu0
          %3041 = vmatprep.mubr.f32.mxu0 0.0
          %3042 = vmatmul.mubr.f32.gmra.mrb[0].mxu0 %v2673
          %v3043 = vpop.f32.mrb[0].mxu0
          %v3044 = vadd.f32 0.0, %v3043
          %v3045 = vpop.f32.mrb[0].mxu0
          %3046 = vmatprep.mubr.f32.mxu0 0.0
          %3047 = vmatmul.mubr.f32.gmra.mrb[0].mxu0 %v2674
          %v3048 = vpop.f32.mrb[0].mxu0
          %v3049 = vadd.f32 0.0, %v3048
          %v3050 = vpop.f32.mrb[0].mxu0
          %3051 = vmatprep.mubr.f32.mxu0 0.0
          %3052 = vmatmul.mubr.f32.gmra.mrb[0].mxu0 %v2675
          %v3053 = vpop.f32.mrb[0].mxu0
          %v3054 = vadd.f32 0.0, %v3053
          %v3055 = vpop.f32.mrb[0].mxu0
          %3056 = vmatprep.mubr.f32.mxu0 0.0
          %3057 = vmatmul.mubr.f32.gmra.mrb[0].mxu0 %v2676
          %v3058 = vpop.f32.mrb[0].mxu0
          %v3059 = vadd.f32 0.0, %v3058
          %v3060 = vpop.f32.mrb[0].mxu0
          %3061 = vmatprep.mubr.f32.mxu0 0.0
          %3062 = vmatmul.mubr.f32.gmra.mrb[0].mxu0 %v2677
          %v3063 = vpop.f32.mrb[0].mxu0
          %v3064 = vadd.f32 0.0, %v3063
          %v3065 = vpop.f32.mrb[0].mxu0
          %3066 = vmatprep.mubr.f32.mxu0 0.0
          %3067 = vmatmul.mubr.f32.gmra.mrb[0].mxu0 %v2678
          %v3068 = vpop.f32.mrb[0].mxu0
          %v3069 = vadd.f32 0.0, %v3068
          %v3070 = vpop.f32.mrb[0].mxu0
          %3071 = vmatprep.mubr.f32.mxu0 0.0
          %3072 = vmatmul.mubr.f32.gmra.mrb[0].mxu0 %v2679
          %v3073 = vpop.f32.mrb[0].mxu0
          %v3074 = vadd.f32 0.0, %v3073
          %v3075 = vpop.f32.mrb[0].mxu0
          %3076 = vmatprep.mubr.f32.mxu0 0.0
          %3077 = vmatmul.mubr.f32.gmra.mrb[0].mxu0 %v2680
          %v3078 = vpop.f32.mrb[0].mxu0
          %v3079 = vadd.f32 0.0, %v3078
          %v3080 = vpop.f32.mrb[0].mxu0
          %3081 = vdwg.mxu0
          %v3082 = vpack.c.bf16 %v2769, %v2764
          %v3083 = vpack.c.bf16 %v2779, %v2774
          %v3084 = vpack.c.bf16 %v2789, %v2784
          %v3085 = vpack.c.bf16 %v2799, %v2794
          %v3086 = vpack.c.bf16 %v2809, %v2804
          %v3087 = vpack.c.bf16 %v2819, %v2814
          %v3088 = vpack.c.bf16 %v2829, %v2824
          %v3089 = vpack.c.bf16 %v2839, %v2834
          %v3090 = vpack.c.bf16 %v2849, %v2844
          %v3091 = vpack.c.bf16 %v2859, %v2854
          %v3092 = vpack.c.bf16 %v2869, %v2864
          %v3093 = vpack.c.bf16 %v2879, %v2874
          %v3094 = vpack.c.bf16 %v2889, %v2884
          %v3095 = vpack.c.bf16 %v2899, %v2894
          %v3096 = vpack.c.bf16 %v2909, %v2904
          %v3097 = vpack.c.bf16 %v2919, %v2914
          %v3098 = vpack.c.bf16 %v2929, %v2924
          %v3099 = vpack.c.bf16 %v2939, %v2934
          %v3100 = vpack.c.bf16 %v2949, %v2944
          %v3101 = vpack.c.bf16 %v2959, %v2954
          %v3102 = vpack.c.bf16 %v2969, %v2964
          %v3103 = vpack.c.bf16 %v2979, %v2974
          %v3104 = vpack.c.bf16 %v2989, %v2984
          %v3105 = vpack.c.bf16 %v2999, %v2994
          %v3106 = vpack.c.bf16 %v3009, %v3004
          %v3107 = vpack.c.bf16 %v3019, %v3014
          %v3108 = vpack.c.bf16 %v3029, %v3024
          %v3109 = vpack.c.bf16 %v3039, %v3034
          %v3110 = vpack.c.bf16 %v3049, %v3044
          %v3111 = vpack.c.bf16 %v3059, %v3054
          %v3112 = vpack.c.bf16 %v3069, %v3064
          %v3113 = vpack.c.bf16 %v3079, %v3074
          %v3146 = vunpack.c.l.b16 %v3082
          %v3147 = vunpack.c.h.b16 %v3082
          %v3148 = vunpack.c.l.b16 %v3083
          %v3149 = vunpack.c.h.b16 %v3083
          %v3150 = vunpack.c.l.b16 %v3084
          %v3151 = vunpack.c.h.b16 %v3084
          %v3152 = vunpack.c.l.b16 %v3085
          %v3153 = vunpack.c.h.b16 %v3085
          %v3154 = vunpack.c.l.b16 %v3086
          %v3155 = vunpack.c.h.b16 %v3086
          %v3156 = vunpack.c.l.b16 %v3087
          %v3157 = vunpack.c.h.b16 %v3087
          %v3158 = vunpack.c.l.b16 %v3088
          %v3159 = vunpack.c.h.b16 %v3088
          %v3160 = vunpack.c.l.b16 %v3089
          %v3161 = vunpack.c.h.b16 %v3089
          %v3162 = vunpack.c.l.b16 %v3090
          %v3163 = vunpack.c.h.b16 %v3090
          %v3164 = vunpack.c.l.b16 %v3091
          %v3165 = vunpack.c.h.b16 %v3091
          %v3166 = vunpack.c.l.b16 %v3092
          %v3167 = vunpack.c.h.b16 %v3092
          %v3168 = vunpack.c.l.b16 %v3093
          %v3169 = vunpack.c.h.b16 %v3093
          %v3170 = vunpack.c.l.b16 %v3094
          %v3171 = vunpack.c.h.b16 %v3094
          %v3172 = vunpack.c.l.b16 %v3095
          %v3173 = vunpack.c.h.b16 %v3095
          %v3174 = vunpack.c.l.b16 %v3096
          %v3175 = vunpack.c.h.b16 %v3096
          %v3176 = vunpack.c.l.b16 %v3097
          %v3177 = vunpack.c.h.b16 %v3097
          %v3178 = vunpack.c.l.b16 %v3098
          %v3179 = vunpack.c.h.b16 %v3098
          %v3180 = vunpack.c.l.b16 %v3099
          %v3181 = vunpack.c.h.b16 %v3099
          %v3182 = vunpack.c.l.b16 %v3100
          %v3183 = vunpack.c.h.b16 %v3100
          %v3184 = vunpack.c.l.b16 %v3101
          %v3185 = vunpack.c.h.b16 %v3101
          %v3186 = vunpack.c.l.b16 %v3102
          %v3187 = vunpack.c.h.b16 %v3102
          %v3188 = vunpack.c.l.b16 %v3103
          %v3189 = vunpack.c.h.b16 %v3103
          %v3190 = vunpack.c.l.b16 %v3104
          %v3191 = vunpack.c.h.b16 %v3104
          %v3192 = vunpack.c.l.b16 %v3105
          %v3193 = vunpack.c.h.b16 %v3105
          %v3194 = vunpack.c.l.b16 %v3106
          %v3195 = vunpack.c.h.b16 %v3106
          %v3196 = vunpack.c.l.b16 %v3107
          %v3197 = vunpack.c.h.b16 %v3107
          %v3198 = vunpack.c.l.b16 %v3108
          %v3199 = vunpack.c.h.b16 %v3108
          %v3200 = vunpack.c.l.b16 %v3109
          %v3201 = vunpack.c.h.b16 %v3109
          %v3202 = vunpack.c.l.b16 %v3110
          %v3203 = vunpack.c.h.b16 %v3110
          %v3204 = vunpack.c.l.b16 %v3111
          %v3205 = vunpack.c.h.b16 %v3111
          %v3206 = vunpack.c.l.b16 %v3112
          %v3207 = vunpack.c.h.b16 %v3112
          %v3208 = vunpack.c.l.b16 %v3113
          %v3209 = vunpack.c.h.b16 %v3113
          %v3210 = vpack.c.b16 %v3146, %v3146
          %v3211 = vpack.c.b16 %v3147, %v3147
          %v3212 = vpack.c.b16 %v3148, %v3148
          %v3213 = vpack.c.b16 %v3149, %v3149
          %v3214 = vpack.c.b16 %v3150, %v3150
          %v3215 = vpack.c.b16 %v3151, %v3151
          %v3216 = vpack.c.b16 %v3152, %v3152
          %v3217 = vpack.c.b16 %v3153, %v3153
          %v3218 = vpack.c.b16 %v3154, %v3154
          %v3219 = vpack.c.b16 %v3155, %v3155
          %v3220 = vpack.c.b16 %v3156, %v3156
          %v3221 = vpack.c.b16 %v3157, %v3157
          %v3222 = vpack.c.b16 %v3158, %v3158
          %v3223 = vpack.c.b16 %v3159, %v3159
          %v3224 = vpack.c.b16 %v3160, %v3160
          %v3225 = vpack.c.b16 %v3161, %v3161
          %v3226 = vpack.c.b16 %v3162, %v3162
          %v3227 = vpack.c.b16 %v3163, %v3163
          %v3228 = vpack.c.b16 %v3164, %v3164
          %v3229 = vpack.c.b16 %v3165, %v3165
          %v3230 = vpack.c.b16 %v3166, %v3166
          %v3231 = vpack.c.b16 %v3167, %v3167
          %v3232 = vpack.c.b16 %v3168, %v3168
          %v3233 = vpack.c.b16 %v3169, %v3169
          %v3234 = vpack.c.b16 %v3170, %v3170
          %v3235 = vpack.c.b16 %v3171, %v3171
          %v3236 = vpack.c.b16 %v3172, %v3172
          %v3237 = vpack.c.b16 %v3173, %v3173
          %v3238 = vpack.c.b16 %v3174, %v3174
          %v3239 = vpack.c.b16 %v3175, %v3175
          %v3240 = vpack.c.b16 %v3176, %v3176
          %v3241 = vpack.c.b16 %v3177, %v3177
          %v3242 = vpack.c.b16 %v3178, %v3178
          %v3243 = vpack.c.b16 %v3179, %v3179
          %v3244 = vpack.c.b16 %v3180, %v3180
          %v3245 = vpack.c.b16 %v3181, %v3181
          %v3246 = vpack.c.b16 %v3182, %v3182
          %v3247 = vpack.c.b16 %v3183, %v3183
          %v3248 = vpack.c.b16 %v3184, %v3184
          %v3249 = vpack.c.b16 %v3185, %v3185
          %v3250 = vpack.c.b16 %v3186, %v3186
          %v3251 = vpack.c.b16 %v3187, %v3187
          %v3252 = vpack.c.b16 %v3188, %v3188
          %v3253 = vpack.c.b16 %v3189, %v3189
          %v3254 = vpack.c.b16 %v3190, %v3190
          %v3255 = vpack.c.b16 %v3191, %v3191
          %v3256 = vpack.c.b16 %v3192, %v3192
          %v3257 = vpack.c.b16 %v3193, %v3193
          %v3258 = vpack.c.b16 %v3194, %v3194
          %v3259 = vpack.c.b16 %v3195, %v3195
          %v3260 = vpack.c.b16 %v3196, %v3196
          %v3261 = vpack.c.b16 %v3197, %v3197
          %v3262 = vpack.c.b16 %v3198, %v3198
          %v3263 = vpack.c.b16 %v3199, %v3199
          %v3264 = vpack.c.b16 %v3200, %v3200
          %v3265 = vpack.c.b16 %v3201, %v3201
          %v3266 = vpack.c.b16 %v3202, %v3202
          %v3267 = vpack.c.b16 %v3203, %v3203
          %v3268 = vpack.c.b16 %v3204, %v3204
          %v3269 = vpack.c.b16 %v3205, %v3205
          %v3270 = vpack.c.b16 %v3206, %v3206
          %v3271 = vpack.c.b16 %v3207, %v3207
          %v3272 = vpack.c.b16 %v3208, %v3208
          %v3273 = vpack.c.b16 %v3209, %v3209
          %3338 = vst [vmem:[%s276] sm:$0xf] %v3210
          %3339 = vst [vmem:[%s276 + $0x4] sm:$0xf] %v3211
          %3340 = vst [vmem:[%s276 + $0x8] sm:$0xf] %v3212
          %3341 = vst [vmem:[%s276 + $0xc] sm:$0xf] %v3213
          %3342 = vst [vmem:[%s276 + $0x10] sm:$0xf] %v3214
          %3343 = vst [vmem:[%s276 + $0x14] sm:$0xf] %v3215
          %3344 = vst [vmem:[%s276 + $0x18] sm:$0xf] %v3216
          %3345 = vst [vmem:[%s276 + $0x1c] sm:$0xf] %v3217
          %3346 = vst [vmem:[%s276 + $0x20] sm:$0xf] %v3218
          %3347 = vst [vmem:[%s276 + $0x24] sm:$0xf] %v3219
          %3348 = vst [vmem:[%s276 + $0x28] sm:$0xf] %v3220
          %3349 = vst [vmem:[%s276 + $0x2c] sm:$0xf] %v3221
          %3350 = vst [vmem:[%s276 + $0x30] sm:$0xf] %v3222
          %3351 = vst [vmem:[%s276 + $0x34] sm:$0xf] %v3223
          %3352 = vst [vmem:[%s276 + $0x38] sm:$0xf] %v3224
          %3353 = vst [vmem:[%s276 + $0x3c] sm:$0xf] %v3225
          %3354 = vst [vmem:[%s276 + $0x40] sm:$0xf] %v3226
          %3355 = vst [vmem:[%s276 + $0x44] sm:$0xf] %v3227
          %3356 = vst [vmem:[%s276 + $0x48] sm:$0xf] %v3228
          %3357 = vst [vmem:[%s276 + $0x4c] sm:$0xf] %v3229
          %3358 = vst [vmem:[%s276 + $0x50] sm:$0xf] %v3230
          %3359 = vst [vmem:[%s276 + $0x54] sm:$0xf] %v3231
          %3360 = vst [vmem:[%s276 + $0x58] sm:$0xf] %v3232
          %3361 = vst [vmem:[%s276 + $0x5c] sm:$0xf] %v3233
          %3362 = vst [vmem:[%s276 + $0x60] sm:$0xf] %v3234
          %3363 = vst [vmem:[%s276 + $0x64] sm:$0xf] %v3235
          %3364 = vst [vmem:[%s276 + $0x68] sm:$0xf] %v3236
          %3365 = vst [vmem:[%s276 + $0x6c] sm:$0xf] %v3237
          %3366 = vst [vmem:[%s276 + $0x70] sm:$0xf] %v3238
          %3367 = vst [vmem:[%s276 + $0x74] sm:$0xf] %v3239
          %3368 = vst [vmem:[%s276 + $0x78] sm:$0xf] %v3240
          %3369 = vst [vmem:[%s276 + $0x7c] sm:$0xf] %v3241
          %3370 = vst [vmem:[%s276 + $0x80] sm:$0xf] %v3242
          %3371 = vst [vmem:[%s276 + $0x84] sm:$0xf] %v3243
          %3372 = vst [vmem:[%s276 + $0x88] sm:$0xf] %v3244
          %3373 = vst [vmem:[%s276 + $0x8c] sm:$0xf] %v3245
          %3374 = vst [vmem:[%s276 + $0x90] sm:$0xf] %v3246
          %3375 = vst [vmem:[%s276 + $0x94] sm:$0xf] %v3247
          %3376 = vst [vmem:[%s276 + $0x98] sm:$0xf] %v3248
          %3377 = vst [vmem:[%s276 + $0x9c] sm:$0xf] %v3249
          %3378 = vst [vmem:[%s276 + $0xa0] sm:$0xf] %v3250
          %3379 = vst [vmem:[%s276 + $0xa4] sm:$0xf] %v3251
          %3380 = vst [vmem:[%s276 + $0xa8] sm:$0xf] %v3252
          %3381 = vst [vmem:[%s276 + $0xac] sm:$0xf] %v3253
          %3382 = vst [vmem:[%s276 + $0xb0] sm:$0xf] %v3254
          %3383 = vst [vmem:[%s276 + $0xb4] sm:$0xf] %v3255
          %3384 = vst [vmem:[%s276 + $0xb8] sm:$0xf] %v3256
          %3385 = vst [vmem:[%s276 + $0xbc] sm:$0xf] %v3257
          %3386 = vst [vmem:[%s276 + $0xc0] sm:$0xf] %v3258
          %3387 = vst [vmem:[%s276 + $0xc4] sm:$0xf] %v3259
          %3388 = vst [vmem:[%s276 + $0xc8] sm:$0xf] %v3260
          %3389 = vst [vmem:[%s276 + $0xcc] sm:$0xf] %v3261
          %3390 = vst [vmem:[%s276 + $0xd0] sm:$0xf] %v3262
          %3391 = vst [vmem:[%s276 + $0xd4] sm:$0xf] %v3263
          %3392 = vst [vmem:[%s276 + $0xd8] sm:$0xf] %v3264
          %3393 = vst [vmem:[%s276 + $0xdc] sm:$0xf] %v3265
          %3394 = vst [vmem:[%s276 + $0xe0] sm:$0xf] %v3266
          %3395 = vst [vmem:[%s276 + $0xe4] sm:$0xf] %v3267
          %3396 = vst [vmem:[%s276 + $0xe8] sm:$0xf] %v3268
          %3397 = vst [vmem:[%s276 + $0xec] sm:$0xf] %v3269
          %3398 = vst [vmem:[%s276 + $0xf0] sm:$0xf] %v3270
          %3399 = vst [vmem:[%s276 + $0xf4] sm:$0xf] %v3271
          %3400 = vst [vmem:[%s276 + $0xf8] sm:$0xf] %v3272
          %3401 = vst [vmem:[%s276 + $0xfc] sm:$0xf] %v3273
        $region60: #{tpu_custom_call.1} parent=35 // pred_fallthru
          _
        %s3402 = sand.u32 %s134, 1
        %s3403 = scalar_lea.sflag [#allocation5], %s3402
        %s3404 = sand.u32 %s134, 1
        %s3405 = smul.addr %s3404, 256
        %s3406 = scalar_lea.vmem [#allocation11], %s3405
        // Predicated region
        $region61: #{tpu_custom_call.1} parent=35 // pred_check
          %p3407 = pneg %p144
        $region62: #{tpu_custom_call.1} parent=35 // pred_check_branch
          %3409 = sbr.rel (%p3407) target = $region64
        $region63: #{tpu_custom_call.1} parent=35 // pred_region
          %s3410 = smul.u32 64, %s27
          %s3412 = ssub.s32 4096, 4096
          %3413 = vsyncadd %s3403, %s3412
          %s3414 = smul.addr %s3410, 64
          %s3415 = scalar_lea.hbm %s4, %s3414
          %s3416 = sshll.u32 %s3406, 4
          %s3417 = int_to_ptr.vmem [resolvable:$true] %s3416
          %3422 = dma.vmem_to_hbm [thread:$0]  %s3417, 4096, %s3415, %s3403, 64, 64, 4
        $region64: #{tpu_custom_call.1} parent=35 // pred_fallthru
          _
      $region36: #{tpu_custom_call.1} parent=5 // pred_fallthru
        _
      %p3423 = scmp.le.s32.totalorder 2, %s18
      // Predicated region
      $region65: #{tpu_custom_call.1} parent=5 // pred_check
        %p3424 = pneg %p3423
      $region66: #{tpu_custom_call.1} parent=5 // pred_check_branch
        %3426 = sbr.rel (%p3424) target = $region68
      $region67: #{tpu_custom_call.1} parent=5 // pred_region
        %s3427 = ssub.s32 %s18, 2
        // Predicated region
        $region69: #{tpu_custom_call.1} parent=67 // pred_check
          %p3428 = pneg %p150
        $region70: #{tpu_custom_call.1} parent=67 // pred_check_branch
          %3430 = sbr.rel (%p3428) target = $region72
        $region71: #{tpu_custom_call.1} parent=67 // pred_region
          %s3431 = sand.u32 %s135, 1
          %s3432 = scalar_lea.sflag [#allocation5], %s3431
          %s3433 = sand.u32 %s135, 1
          %s3434 = smul.addr %s3433, 256
          %s3435 = scalar_lea.vmem [#allocation11], %s3434
          %3436 = dma.done %s3432, 4096
        $region72: #{tpu_custom_call.1} parent=67 // pred_fallthru
          _
      $region68: #{tpu_custom_call.1} parent=5 // pred_fallthru
        _
    $region6: #{tpu_custom_call.1} parent=1 // loop_footer
      %s22 = sadd.s32 1, %s18
    $region7: #{tpu_custom_call.1} parent=1 // loop_footer_branch
      %17 = sbr.rel target = $region3
    $region8: #{tpu_custom_call.1} parent=1 // loop_exit
      _
    %3437 = vsyncpa [#allocation4], 1
    %s3438 = scalar_lea.sflag [#allocation4], 1
    %3439 = vsyncpa %s3438, 1
    %3440 = vsyncpa [#allocation7], 1
    %3441 = vsyncpa [#allocation10], 1
    %3442 = vsyncpa [#allocation5], 1
    %s3443 = scalar_lea.sflag [#allocation5], 1
    %3444 = vsyncpa %s3443, 1

</llo_original>
